<compile_context>
chip_gen: v6e
topology: v6e:2x2x1
jax: 0.10.0
libtpu: 0.0.40
codegen_flags: <defaults>
</compile_context>

<pallas_src>
import functools

import jax
import jax.numpy as jnp
from jax.experimental import pallas as pl
from jax.experimental.pallas import tpu as pltpu

D_MODEL = 128
D_FF = 2048          # nn.TransformerEncoderLayer default dim_feedforward
LN_EPS = 1e-5
_TARGET_TOKENS = 1024


def _layer_norm(v, g, b):
    mu = jnp.mean(v, axis=-1, keepdims=True)
    var = jnp.mean((v - mu) ** 2, axis=-1, keepdims=True)
    return (v - mu) * jax.lax.rsqrt(var + LN_EPS) * g + b


# ---------------------------------------------------------------------------
# Kernel: grid = (batch_tiles, num_layers); one step == one encoder layer for
# one tile of B_TILE batch elements.  Layer weights are either fully resident
# (indexed by program_id(1)) or streamed one layer per step; the running
# activation lives in a VMEM scratch.
# ---------------------------------------------------------------------------
def transformer_agent_kernel(
    x_ref,                                   # (B_TILE, S, in_pad) f32
    emb_w_ref, emb_b_ref,                    # (in_pad,128) bf16, (1,128) f32
    in_w_ref, in_b_ref,                      # [L,]128x384 bf16, [L,]1x384 f32
    out_w_ref, out_b_ref,                    # [L,]128x128 bf16, [L,]1x128 f32
    ln1_w_ref, ln1_b_ref,                    # [L,]1x128 f32 x2
    lin1_w_ref, lin1_b_ref,                  # [L,]128x2048 bf16, [L,]1x2048 f32
    lin2_w_ref, lin2_b_ref,                  # [L,]2048x128 bf16, [L,]1x128 f32
    ln2_w_ref, ln2_b_ref,                    # [L,]1x128 f32 x2
    fc_w_ref, fc_b_ref,                      # (128,OUT_PAD) bf16, (1,OUT_PAD) f32
    o_ref,                                   # (1, B_TILE, OUT_PAD) f32
    x_scratch,                               # (B_TILE*S, 128) f32 (persists over layers)
    *, num_heads, b_tile, seq_len, resident):

    layer = pl.program_id(1)
    num_layers = pl.num_programs(1)
    M = b_tile * seq_len
    hd = D_MODEL // num_heads
    bf16 = jnp.bfloat16

    def lw(ref):
        # resident: whole layer stack lives in VMEM, pick this layer's slice;
        # streamed: the BlockSpec already delivered this layer's slice.
        return ref[layer] if resident else ref[...]

    # ---- embedding (only on the first layer step of this batch tile) ----
    @pl.when(layer == 0)
    def _embed():
        x0 = x_ref[...].reshape(M, x_ref.shape[2]).astype(bf16)
        x_scratch[...] = (
            jnp.dot(x0, emb_w_ref[...], preferred_element_type=jnp.float32)
            + emb_b_ref[...])

    x = x_scratch[...]                                             # (M, 128) f32

    # ---- multi-head self-attention (post-norm, PyTorch default) ----
    qkv = (jnp.dot(x.astype(bf16), lw(in_w_ref),
                   preferred_element_type=jnp.float32)
           + lw(in_b_ref))                                         # (M, 384) f32
    qkv3 = qkv.reshape(b_tile, seq_len, 3 * D_MODEL).astype(bf16)  # single cast/relayout
    q_all = qkv3[:, :, 0 * D_MODEL:1 * D_MODEL]
    k_all = qkv3[:, :, 1 * D_MODEL:2 * D_MODEL]
    v_all = qkv3[:, :, 2 * D_MODEL:3 * D_MODEL]

    ctx_heads = []
    for h in range(num_heads):                                     # small static loop
        q = q_all[:, :, h * hd:(h + 1) * hd]
        k = k_all[:, :, h * hd:(h + 1) * hd]
        v = v_all[:, :, h * hd:(h + 1) * hd]
        # 1/sqrt(hd) is already folded into the Q slice of in_w / in_b host-side.
        sc = jnp.einsum("bqd,bkd->bqk", q, k,
                        preferred_element_type=jnp.float32)        # (b, S, S) f32
        sc = sc - jnp.max(sc, axis=-1, keepdims=True)
        p = jnp.exp(sc)
        p = p * pl.reciprocal(jnp.sum(p, axis=-1, keepdims=True), approx=True)
        ah = jnp.einsum("bqk,bkd->bqd", p.astype(bf16), v,
                        preferred_element_type=jnp.float32)        # (b, S, hd)
        ctx_heads.append(ah)
    # all heads -> one (M,128) context slab -> ONE K=128 output projection
    ctx = jnp.concatenate(ctx_heads, axis=-1).reshape(M, D_MODEL)
    attn = (jnp.dot(ctx.astype(bf16), lw(out_w_ref),
                    preferred_element_type=jnp.float32)
            + lw(out_b_ref))
    x = _layer_norm(x + attn, lw(ln1_w_ref), lw(ln1_b_ref))

    # ---- feed-forward: Linear(128,2048) -> ReLU -> Linear(2048,128) ----
    h1 = (jnp.dot(x.astype(bf16), lw(lin1_w_ref),
                  preferred_element_type=jnp.float32) + lw(lin1_b_ref))
    h1 = jnp.maximum(h1, 0.0).astype(bf16)       # carry the 2048-wide slab in bf16
    h2 = (jnp.dot(h1, lw(lin2_w_ref),
                  preferred_element_type=jnp.float32) + lw(lin2_b_ref))
    x = _layer_norm(x + h2, lw(ln2_w_ref), lw(ln2_b_ref))
    x_scratch[...] = x

    # ---- last token -> fc (only on the final layer step) ----
    @pl.when(layer == num_layers - 1)
    def _head():
        # strided sublane load: row (seq_len-1) of every batch element
        last = x_scratch[pl.ds(seq_len - 1, b_tile, stride=seq_len), :]
        out = (jnp.dot(last.astype(bf16), fc_w_ref[...],
                       preferred_element_type=jnp.float32) + fc_b_ref[...])
        o_ref[0] = out.astype(o_ref.dtype)


# ---------------------------------------------------------------------------
# Wrapper
# ---------------------------------------------------------------------------
def transformer_agent_forward(x_nchw, params, *, num_heads, num_layers):
    # PyTorch: x = x.view(x.size(0), x.size(2), -1) -> (B, S, input_size)
    B = x_nchw.shape[0]
    S = x_nchw.shape[2]
    x = x_nchw.reshape(B, S, -1).astype(jnp.float32)
    input_size = x.shape[-1]
    output_size = params["fc_w"].shape[-1]
    out_pad = pl.cdiv(output_size, 128) * 128
    in_pad = pl.cdiv(input_size, 128) * 128
    hd = D_MODEL // num_heads

    # lane-pad the input feature dim (dense DMA, full-depth embedding K)
    if in_pad != input_size:
        x = jnp.pad(x, ((0, 0), (0, 0), (0, in_pad - input_size)))

    # ---- generation-aware VMEM budget ----
    try:
        vmem_cap = int(pltpu.get_tpu_info().vmem_capacity_bytes)
    except Exception:
        vmem_cap = 64 << 20                      # conservative (v7x) fallback
    budget = int(0.70 * vmem_cap)

    per_layer_names = ["in_w", "in_b", "out_w", "out_b", "ln1_w", "ln1_b",
                       "lin1_w", "lin1_b", "lin2_w", "lin2_b", "ln2_w", "ln2_b"]
    bf16_names = {"emb_w", "in_w", "out_w", "lin1_w", "lin2_w", "fc_w"}

    def w_bytes(name, shape):
        n = 1
        for d in shape:
            n *= d
        return n * (2 if name in bf16_names else 4)

    stacked_bytes = sum(w_bytes(n, params[n].shape) for n in per_layer_names)
    slice_bytes = stacked_bytes // num_layers
    global_bytes = (w_bytes("emb_w", (in_pad, D_MODEL)) + 4 * D_MODEL
                    + w_bytes("fc_w", (D_MODEL, out_pad)) + 4 * out_pad)

    def act_bytes(bt):
        m = bt * S
        return (2 * bt * S * in_pad * 4          # x input block (double-buffered)
                + m * D_MODEL * 4                # activation scratch
                + m * 3 * D_MODEL * 6            # qkv f32 + bf16
                + m * D_FF * 6                   # FFN hidden f32 + bf16
                + m * D_MODEL * 4 * 4            # ctx / residual temps
                + num_heads * bt * S * S * 8     # per-head scores / probs
                + 2 * bt * out_pad * 4)

    # ---- token-slab sizing: target ~1024 tokens/step, shrink if VMEM-tight ----
    b_tile = max(1, min(B, max(1, _TARGET_TOKENS // S)))
    while b_tile > 1 and (act_bytes(b_tile) + 2 * slice_bytes + global_bytes
                          + (8 << 20)) > budget:
        b_tile = max(1, b_tile // 2)
    n_btiles = pl.cdiv(B, b_tile)
    # megacore (v7x): keep >= 2 batch tiles when each half still clears roofline
    if n_btiles == 1 and B > 1 and B * S >= 1024:
        b_tile = pl.cdiv(B, 2)
        n_btiles = pl.cdiv(B, b_tile)
    b_pad = n_btiles * b_tile
    if b_pad != B:
        x = jnp.concatenate(
            [x, jnp.zeros((b_pad - B, S, in_pad), x.dtype)], axis=0)

    # ---- resident vs streamed layer weights ----
    resident = (stacked_bytes + global_bytes + act_bytes(b_tile) + (6 << 20)) <= budget
    used_weight_bytes = (stacked_bytes if resident else 2 * slice_bytes) + global_bytes
    vmem_limit = int(min(budget,
                         max(16 << 20,
                             used_weight_bytes + act_bytes(b_tile) + (8 << 20))))

    # ---- host-side weight prep: fold 1/sqrt(hd) into Q, bf16 matmul weights,
    #      lane-pad embedding K and fc output ----
    scale = 1.0 / (hd ** 0.5)
    q_scale = jnp.concatenate([jnp.full((D_MODEL,), scale, jnp.float32),
                               jnp.ones((2 * D_MODEL,), jnp.float32)])
    in_w = (params["in_w"] * q_scale[None, None, :]).astype(jnp.bfloat16)
    in_b = params["in_b"] * q_scale[None, None, :]
    emb_w = jnp.zeros((in_pad, D_MODEL), jnp.float32).at[:input_size].set(params["emb_w"])
    fc_w = jnp.zeros((D_MODEL, out_pad), jnp.float32).at[:, :output_size].set(params["fc_w"])
    fc_b = jnp.zeros((1, out_pad), jnp.float32).at[:, :output_size].set(params["fc_b"])

    weights = dict(
        emb_w=emb_w.astype(jnp.bfloat16), emb_b=params["emb_b"],
        in_w=in_w, in_b=in_b,
        out_w=params["out_w"].astype(jnp.bfloat16), out_b=params["out_b"],
        ln1_w=params["ln1_w"], ln1_b=params["ln1_b"],
        lin1_w=params["lin1_w"].astype(jnp.bfloat16), lin1_b=params["lin1_b"],
        lin2_w=params["lin2_w"].astype(jnp.bfloat16), lin2_b=params["lin2_b"],
        ln2_w=params["ln2_w"], ln2_b=params["ln2_b"],
        fc_w=fc_w.astype(jnp.bfloat16), fc_b=fc_b,
    )
    order = ["emb_w", "emb_b", "in_w", "in_b", "out_w", "out_b",
             "ln1_w", "ln1_b", "lin1_w", "lin1_b", "lin2_w", "lin2_b",
             "ln2_w", "ln2_b", "fc_w", "fc_b"]
    per_layer = set(per_layer_names)

    def streamed_spec(arr):        # one layer's slice per grid step
        nd = arr.ndim
        return pl.BlockSpec((None,) + tuple(arr.shape[1:]),
                            lambda b, l, _n=nd: (l,) + (0,) * (_n - 1))

    def resident_spec(arr):        # DMA'd once, stays in VMEM for the whole call
        nd = arr.ndim
        return pl.BlockSpec(tuple(arr.shape), lambda b, l, _n=nd: (0,) * _n)

    weight_args, weight_specs = [], []
    for name in order:
        arr = weights[name]
        weight_args.append(arr)
        if name in per_layer and not resident:
            weight_specs.append(streamed_spec(arr))
        else:
            weight_specs.append(resident_spec(arr))

    in_specs = ([pl.BlockSpec((b_tile, S, in_pad), lambda b, l: (b, 0, 0))]
                + weight_specs)
    out_spec = pl.BlockSpec((1, b_tile, out_pad), lambda b, l: (b, 0, 0))

    out = pl.pallas_call(
        functools.partial(transformer_agent_kernel,
                          num_heads=num_heads, b_tile=b_tile, seq_len=S,
                          resident=resident),
        out_shape=jax.ShapeDtypeStruct((n_btiles, b_tile, out_pad), jnp.float32),
        grid=(n_btiles, num_layers),
        in_specs=in_specs,
        out_specs=out_spec,
        scratch_shapes=[pltpu.VMEM((b_tile * S, D_MODEL), jnp.float32)],
        compiler_params=pltpu.CompilerParams(
            dimension_semantics=("parallel", "arbitrary"),
            vmem_limit_bytes=vmem_limit),
    )(x, *weight_args)

    return out.reshape(b_pad, out_pad)[:B, :output_size]


# ---------------------------------------------------------------------------
# Deterministic parameter init (shapes from the nn.Module __init__)
# ---------------------------------------------------------------------------
def init_params(key, input_size, num_layers, output_size):
    ks = jax.random.split(key, 8 + 6 * num_layers)
    n = lambda i, shape, s=0.02: s * jax.random.normal(ks[i], shape, jnp.float32)
    L = num_layers
    params = {
        # weights pre-transposed so the kernel computes x @ W
        "emb_w": n(0, (input_size, D_MODEL)),
        "emb_b": n(1, (1, D_MODEL)),
        "in_w": jnp.stack([n(8 + 6 * l + 0, (D_MODEL, 3 * D_MODEL)) for l in range(L)]),
        "in_b": jnp.zeros((L, 1, 3 * D_MODEL), jnp.float32),
        "out_w": jnp.stack([n(8 + 6 * l + 1, (D_MODEL, D_MODEL)) for l in range(L)]),
        "out_b": jnp.zeros((L, 1, D_MODEL), jnp.float32),
        "ln1_w": jnp.ones((L, 1, D_MODEL), jnp.float32),
        "ln1_b": jnp.zeros((L, 1, D_MODEL), jnp.float32),
        "lin1_w": jnp.stack([n(8 + 6 * l + 2, (D_MODEL, D_FF)) for l in range(L)]),
        "lin1_b": jnp.stack([n(8 + 6 * l + 3, (1, D_FF), 0.01) for l in range(L)]),
        "lin2_w": jnp.stack([n(8 + 6 * l + 4, (D_FF, D_MODEL)) for l in range(L)]),
        "lin2_b": jnp.stack([n(8 + 6 * l + 5, (1, D_MODEL), 0.01) for l in range(L)]),
        "ln2_w": jnp.ones((L, 1, D_MODEL), jnp.float32),
        "ln2_b": jnp.zeros((L, 1, D_MODEL), jnp.float32),
        "fc_w": n(2, (D_MODEL, output_size)),
        "fc_b": n(3, (1, output_size)),
    }
    return params


# ---------------------------------------------------------------------------
# Plain-JAX f32 reference (mirrors PyTorch eval-mode semantics) for validation
# ---------------------------------------------------------------------------
def reference_forward(x_nchw, params, *, num_heads, num_layers):
    B = x_nchw.shape[0]
    S = x_nchw.shape[2]
    x = x_nchw.reshape(B, S, -1)
    head_dim = D_MODEL // num_heads
    scale = 1.0 / (head_dim ** 0.5)

    def ln(v, g, b):
        mu = jnp.mean(v, axis=-1, keepdims=True)
        var = jnp.mean((v - mu) ** 2, axis=-1, keepdims=True)
        return (v - mu) / jnp.sqrt(var + LN_EPS) * g + b

    x = x @ params["emb_w"] + params["emb_b"]
    for l in range(num_layers):
        qkv = x @ params["in_w"][l] + params["in_b"][l]
        q, k, v = jnp.split(qkv, 3, axis=-1)
        q = q.reshape(B, S, num_heads, head_dim) * scale
        k = k.reshape(B, S, num_heads, head_dim)
        v = v.reshape(B, S, num_heads, head_dim)
        sc = jnp.einsum("bqhd,bkhd->bhqk", q, k)
        p = jax.nn.softmax(sc, axis=-1)
        a = jnp.einsum("bhqk,bkhd->bqhd", p, v).reshape(B, S, D_MODEL)
        a = a @ params["out_w"][l] + params["out_b"][l]
        x = ln(x + a, params["ln1_w"][l], params["ln1_b"][l])
        h = jnp.maximum(x @ params["lin1_w"][l] + params["lin1_b"][l], 0.0)
        h = h @ params["lin2_w"][l] + params["lin2_b"][l]
        x = ln(x + h, params["ln2_w"][l], params["ln2_b"][l])
    return x[:, -1, :] @ params["fc_w"] + params["fc_b"]


if __name__ == "__main__":
    B, S = 2, 8
    input_size, num_heads, num_layers, output_size = 32, 4, 2, 16

    key = jax.random.PRNGKey(0)
    kx, kp = jax.random.split(key)
    # input consistent with x.view(B, x.size(2), -1): (B, 1, S, input_size)
    x = jax.random.normal(kx, (B, 1, S, input_size), dtype=jnp.float32)
    params = init_params(kp, input_size, num_layers, output_size)

    out = transformer_agent_forward(x, params,
                                    num_heads=num_heads, num_layers=num_layers)
    out = jax.block_until_ready(out)

    assert out.shape == (B, output_size), out.shape
    ref = reference_forward(x, params, num_heads=num_heads, num_layers=num_layers)
    assert jnp.allclose(out, ref, atol=2e-2, rtol=2e-2), \
        f"max abs err {jnp.max(jnp.abs(out - ref))}"

    print("KERNEL_OK")
</pallas_src>

<mosaic_0001>
module attributes {stable_mosaic.version = 11 : i64} {
  func.func @transformer_agent_kernel(%arg0: i32, %arg1: i32, %arg2: memref<2x8x128xf32, #tpu.memory_space<vmem>>, %arg3: memref<128x128xbf16, #tpu.memory_space<vmem>>, %arg4: memref<1x128xf32, #tpu.memory_space<vmem>>, %arg5: memref<2x128x384xbf16, #tpu.memory_space<vmem>>, %arg6: memref<2x1x384xf32, #tpu.memory_space<vmem>>, %arg7: memref<2x128x128xbf16, #tpu.memory_space<vmem>>, %arg8: memref<2x1x128xf32, #tpu.memory_space<vmem>>, %arg9: memref<2x1x128xf32, #tpu.memory_space<vmem>>, %arg10: memref<2x1x128xf32, #tpu.memory_space<vmem>>, %arg11: memref<2x128x2048xbf16, #tpu.memory_space<vmem>>, %arg12: memref<2x1x2048xf32, #tpu.memory_space<vmem>>, %arg13: memref<2x2048x128xbf16, #tpu.memory_space<vmem>>, %arg14: memref<2x1x128xf32, #tpu.memory_space<vmem>>, %arg15: memref<2x1x128xf32, #tpu.memory_space<vmem>>, %arg16: memref<2x1x128xf32, #tpu.memory_space<vmem>>, %arg17: memref<128x128xbf16, #tpu.memory_space<vmem>>, %arg18: memref<1x128xf32, #tpu.memory_space<vmem>>, %arg19: memref<1x2x128xf32, #tpu.memory_space<vmem>>, %arg20: memref<16x128xf32, #tpu.memory_space<vmem>>) attributes {dimension_semantics = [#tpu.dimension_semantics<parallel>, #tpu.dimension_semantics<arbitrary>], iteration_bounds = array<i64: 1, 2>, scalar_prefetch = 0 : i64, scratch_operands = 1 : i64, tpu.core_type = #tpu.core_type<tc>, window_params = [{transform_indices = @transform_0, window_bounds = array<i64: 2, 8, 128>}, {pipeline_mode = #tpu.pipeline_mode<synchronous>, transform_indices = @transform_1, window_bounds = array<i64: 128, 128>}, {pipeline_mode = #tpu.pipeline_mode<synchronous>, transform_indices = @transform_2, window_bounds = array<i64: 1, 128>}, {pipeline_mode = #tpu.pipeline_mode<synchronous>, transform_indices = @transform_3, window_bounds = array<i64: 2, 128, 384>}, {pipeline_mode = #tpu.pipeline_mode<synchronous>, transform_indices = @transform_4, window_bounds = array<i64: 2, 1, 384>}, {pipeline_mode = #tpu.pipeline_mode<synchronous>, transform_indices = @transform_5, window_bounds = array<i64: 2, 128, 128>}, {pipeline_mode = #tpu.pipeline_mode<synchronous>, transform_indices = @transform_6, window_bounds = array<i64: 2, 1, 128>}, {pipeline_mode = #tpu.pipeline_mode<synchronous>, transform_indices = @transform_7, window_bounds = array<i64: 2, 1, 128>}, {pipeline_mode = #tpu.pipeline_mode<synchronous>, transform_indices = @transform_8, window_bounds = array<i64: 2, 1, 128>}, {pipeline_mode = #tpu.pipeline_mode<synchronous>, transform_indices = @transform_9, window_bounds = array<i64: 2, 128, 2048>}, {pipeline_mode = #tpu.pipeline_mode<synchronous>, transform_indices = @transform_10, window_bounds = array<i64: 2, 1, 2048>}, {pipeline_mode = #tpu.pipeline_mode<synchronous>, transform_indices = @transform_11, window_bounds = array<i64: 2, 2048, 128>}, {pipeline_mode = #tpu.pipeline_mode<synchronous>, transform_indices = @transform_12, window_bounds = array<i64: 2, 1, 128>}, {pipeline_mode = #tpu.pipeline_mode<synchronous>, transform_indices = @transform_13, window_bounds = array<i64: 2, 1, 128>}, {pipeline_mode = #tpu.pipeline_mode<synchronous>, transform_indices = @transform_14, window_bounds = array<i64: 2, 1, 128>}, {pipeline_mode = #tpu.pipeline_mode<synchronous>, transform_indices = @transform_15, window_bounds = array<i64: 128, 128>}, {pipeline_mode = #tpu.pipeline_mode<synchronous>, transform_indices = @transform_16, window_bounds = array<i64: 1, 128>}, {transform_indices = @transform_17, window_bounds = array<i64: 1, 2, 128>}]} {
    %c0_i32 = arith.constant 0 : i32
    %0 = arith.cmpi eq, %arg1, %c0_i32 : i32
    %1 = arith.extui %0 : i1 to i32
    %c0_i32_0 = arith.constant 0 : i32
    %2 = arith.cmpi ne, %1, %c0_i32_0 : i32
    scf.if %2 {
      %c0_59 = arith.constant 0 : index
      %c0_60 = arith.constant 0 : index
      %c0_61 = arith.constant 0 : index
      %179 = vector.load %arg2[%c0_59, %c0_60, %c0_61] : memref<2x8x128xf32, #tpu.memory_space<vmem>>, vector<2x8x128xf32>
      %180 = vector.shape_cast %179 : vector<2x8x128xf32> to vector<16x128xf32>
      %181 = arith.truncf %180 : vector<16x128xf32> to vector<16x128xbf16>
      %c0_62 = arith.constant 0 : index
      %c0_63 = arith.constant 0 : index
      %182 = vector.load %arg3[%c0_62, %c0_63] : memref<128x128xbf16, #tpu.memory_space<vmem>>, vector<128x128xbf16>
      %cst_64 = arith.constant dense<0.000000e+00> : vector<16x128xf32>
      %183 = tpu.matmul %181, %182, %cst_64 {dimension_numbers = #tpu.dot_dimension_numbers<[1], [0], [0], [1], [0, 0, 1, 1], [], []>} : vector<16x128xbf16>, vector<128x128xbf16>, vector<16x128xf32> -> vector<16x128xf32>
      %c0_65 = arith.constant 0 : index
      %c0_66 = arith.constant 0 : index
      %184 = vector.load %arg4[%c0_65, %c0_66] : memref<1x128xf32, #tpu.memory_space<vmem>>, vector<1x128xf32>
      %185 = vector.broadcast %184 : vector<1x128xf32> to vector<16x128xf32>
      %186 = arith.addf %183, %185 : vector<16x128xf32>
      %c0_67 = arith.constant 0 : index
      %c0_68 = arith.constant 0 : index
      %187 = vector.load %arg20[%c0_67, %c0_68] : memref<16x128xf32, #tpu.memory_space<vmem>>, vector<16x128xf32>
      tpu.vector_store %arg20[%c0_67, %c0_68], %186 {strides = array<i32>} : memref<16x128xf32, #tpu.memory_space<vmem>>, vector<16x128xf32>,
    } else {
    }
    %c0 = arith.constant 0 : index
    %c0_1 = arith.constant 0 : index
    %3 = vector.load %arg20[%c0, %c0_1] : memref<16x128xf32, #tpu.memory_space<vmem>>, vector<16x128xf32>
    %4 = arith.truncf %3 : vector<16x128xf32> to vector<16x128xbf16>
    %5 = arith.index_cast %arg1 : i32 to index
    %c0_2 = arith.constant 0 : index
    %c0_3 = arith.constant 0 : index
    %6 = vector.load %arg5[%5, %c0_2, %c0_3] : memref<2x128x384xbf16, #tpu.memory_space<vmem>>, vector<1x128x384xbf16>
    %7 = vector.shape_cast %6 : vector<1x128x384xbf16> to vector<128x384xbf16>
    %cst = arith.constant dense<0.000000e+00> : vector<16x384xf32>
    %8 = tpu.matmul %4, %7, %cst {dimension_numbers = #tpu.dot_dimension_numbers<[1], [0], [0], [1], [0, 0, 1, 1], [], []>} : vector<16x128xbf16>, vector<128x384xbf16>, vector<16x384xf32> -> vector<16x384xf32>
    %9 = arith.index_cast %arg1 : i32 to index
    %c0_4 = arith.constant 0 : index
    %c0_5 = arith.constant 0 : index
    %10 = vector.load %arg6[%9, %c0_4, %c0_5] : memref<2x1x384xf32, #tpu.memory_space<vmem>>, vector<1x1x384xf32>
    %11 = vector.shape_cast %10 : vector<1x1x384xf32> to vector<1x384xf32>
    %12 = vector.broadcast %11 : vector<1x384xf32> to vector<16x384xf32>
    %13 = arith.addf %8, %12 : vector<16x384xf32>
    %14 = vector.shape_cast %13 : vector<16x384xf32> to vector<2x8x384xf32>
    %15 = arith.truncf %14 : vector<2x8x384xf32> to vector<2x8x384xbf16>
    %16 = vector.extract_strided_slice %15 {offsets = [0, 0, 0], sizes = [2, 8, 128], strides = [1, 1, 1]} : vector<2x8x384xbf16> to vector<2x8x128xbf16>
    %17 = vector.extract_strided_slice %15 {offsets = [0, 0, 128], sizes = [2, 8, 128], strides = [1, 1, 1]} : vector<2x8x384xbf16> to vector<2x8x128xbf16>
    %18 = vector.extract_strided_slice %15 {offsets = [0, 0, 256], sizes = [2, 8, 128], strides = [1, 1, 1]} : vector<2x8x384xbf16> to vector<2x8x128xbf16>
    %19 = vector.extract_strided_slice %16 {offsets = [0, 0, 0], sizes = [2, 8, 32], strides = [1, 1, 1]} : vector<2x8x128xbf16> to vector<2x8x32xbf16>
    %20 = vector.extract_strided_slice %17 {offsets = [0, 0, 0], sizes = [2, 8, 32], strides = [1, 1, 1]} : vector<2x8x128xbf16> to vector<2x8x32xbf16>
    %21 = vector.extract_strided_slice %18 {offsets = [0, 0, 0], sizes = [2, 8, 32], strides = [1, 1, 1]} : vector<2x8x128xbf16> to vector<2x8x32xbf16>
    "tpu.trace_start"() <{level = 10 : i32, message = "bqd,bkd->bqk"}> : () -> ()
    %cst_6 = arith.constant dense<0.000000e+00> : vector<2x8x8xf32>
    %22 = tpu.matmul %19, %20, %cst_6 {dimension_numbers = #tpu.dot_dimension_numbers<[2], [2], [1], [1], [0, 0, 0, 1, 1, 1], [0], [0]>} : vector<2x8x32xbf16>, vector<2x8x32xbf16>, vector<2x8x8xf32> -> vector<2x8x8xf32>
    "tpu.trace_stop"() : () -> ()
    %cst_7 = arith.constant dense<0xFF800000> : vector<2x8xf32>
    %23 = vector.multi_reduction <maximumf>, %22, %cst_7 [2] : vector<2x8x8xf32> to vector<2x8xf32>
    %24 = vector.shape_cast %23 : vector<2x8xf32> to vector<2x8x1xf32>
    %25 = vector.broadcast %24 : vector<2x8x1xf32> to vector<2x8x8xf32>
    %26 = arith.subf %22, %25 : vector<2x8x8xf32>
    %27 = math.exp %26 : vector<2x8x8xf32>
    %cst_8 = arith.constant dense<0.000000e+00> : vector<2x8xf32>
    %28 = vector.multi_reduction <add>, %27, %cst_8 [2] : vector<2x8x8xf32> to vector<2x8xf32>
    %29 = vector.shape_cast %28 : vector<2x8xf32> to vector<2x8x1xf32>
    %30 = tpu.reciprocal %29 {approx = true} : vector<2x8x1xf32> -> vector<2x8x1xf32>
    %31 = vector.broadcast %30 : vector<2x8x1xf32> to vector<2x8x8xf32>
    %32 = arith.mulf %27, %31 : vector<2x8x8xf32>
    %33 = arith.truncf %32 : vector<2x8x8xf32> to vector<2x8x8xbf16>
    "tpu.trace_start"() <{level = 10 : i32, message = "bqk,bkd->bqd"}> : () -> ()
    %cst_9 = arith.constant dense<0.000000e+00> : vector<2x8x32xf32>
    %34 = tpu.matmul %33, %21, %cst_9 {dimension_numbers = #tpu.dot_dimension_numbers<[2], [1], [1], [2], [0, 0, 0, 1, 1, 2], [0], [0]>} : vector<2x8x8xbf16>, vector<2x8x32xbf16>, vector<2x8x32xf32> -> vector<2x8x32xf32>
    "tpu.trace_stop"() : () -> ()
    %35 = vector.extract_strided_slice %16 {offsets = [0, 0, 32], sizes = [2, 8, 32], strides = [1, 1, 1]} : vector<2x8x128xbf16> to vector<2x8x32xbf16>
    %36 = vector.extract_strided_slice %17 {offsets = [0, 0, 32], sizes = [2, 8, 32], strides = [1, 1, 1]} : vector<2x8x128xbf16> to vector<2x8x32xbf16>
    %37 = vector.extract_strided_slice %18 {offsets = [0, 0, 32], sizes = [2, 8, 32], strides = [1, 1, 1]} : vector<2x8x128xbf16> to vector<2x8x32xbf16>
    "tpu.trace_start"() <{level = 10 : i32, message = "bqd,bkd->bqk"}> : () -> ()
    %cst_10 = arith.constant dense<0.000000e+00> : vector<2x8x8xf32>
    %38 = tpu.matmul %35, %36, %cst_10 {dimension_numbers = #tpu.dot_dimension_numbers<[2], [2], [1], [1], [0, 0, 0, 1, 1, 1], [0], [0]>} : vector<2x8x32xbf16>, vector<2x8x32xbf16>, vector<2x8x8xf32> -> vector<2x8x8xf32>
    "tpu.trace_stop"() : () -> ()
    %cst_11 = arith.constant dense<0xFF800000> : vector<2x8xf32>
    %39 = vector.multi_reduction <maximumf>, %38, %cst_11 [2] : vector<2x8x8xf32> to vector<2x8xf32>
    %40 = vector.shape_cast %39 : vector<2x8xf32> to vector<2x8x1xf32>
    %41 = vector.broadcast %40 : vector<2x8x1xf32> to vector<2x8x8xf32>
    %42 = arith.subf %38, %41 : vector<2x8x8xf32>
    %43 = math.exp %42 : vector<2x8x8xf32>
    %cst_12 = arith.constant dense<0.000000e+00> : vector<2x8xf32>
    %44 = vector.multi_reduction <add>, %43, %cst_12 [2] : vector<2x8x8xf32> to vector<2x8xf32>
    %45 = vector.shape_cast %44 : vector<2x8xf32> to vector<2x8x1xf32>
    %46 = tpu.reciprocal %45 {approx = true} : vector<2x8x1xf32> -> vector<2x8x1xf32>
    %47 = vector.broadcast %46 : vector<2x8x1xf32> to vector<2x8x8xf32>
    %48 = arith.mulf %43, %47 : vector<2x8x8xf32>
    %49 = arith.truncf %48 : vector<2x8x8xf32> to vector<2x8x8xbf16>
    "tpu.trace_start"() <{level = 10 : i32, message = "bqk,bkd->bqd"}> : () -> ()
    %cst_13 = arith.constant dense<0.000000e+00> : vector<2x8x32xf32>
    %50 = tpu.matmul %49, %37, %cst_13 {dimension_numbers = #tpu.dot_dimension_numbers<[2], [1], [1], [2], [0, 0, 0, 1, 1, 2], [0], [0]>} : vector<2x8x8xbf16>, vector<2x8x32xbf16>, vector<2x8x32xf32> -> vector<2x8x32xf32>
    "tpu.trace_stop"() : () -> ()
    %51 = vector.extract_strided_slice %16 {offsets = [0, 0, 64], sizes = [2, 8, 32], strides = [1, 1, 1]} : vector<2x8x128xbf16> to vector<2x8x32xbf16>
    %52 = vector.extract_strided_slice %17 {offsets = [0, 0, 64], sizes = [2, 8, 32], strides = [1, 1, 1]} : vector<2x8x128xbf16> to vector<2x8x32xbf16>
    %53 = vector.extract_strided_slice %18 {offsets = [0, 0, 64], sizes = [2, 8, 32], strides = [1, 1, 1]} : vector<2x8x128xbf16> to vector<2x8x32xbf16>
    "tpu.trace_start"() <{level = 10 : i32, message = "bqd,bkd->bqk"}> : () -> ()
    %cst_14 = arith.constant dense<0.000000e+00> : vector<2x8x8xf32>
    %54 = tpu.matmul %51, %52, %cst_14 {dimension_numbers = #tpu.dot_dimension_numbers<[2], [2], [1], [1], [0, 0, 0, 1, 1, 1], [0], [0]>} : vector<2x8x32xbf16>, vector<2x8x32xbf16>, vector<2x8x8xf32> -> vector<2x8x8xf32>
    "tpu.trace_stop"() : () -> ()
    %cst_15 = arith.constant dense<0xFF800000> : vector<2x8xf32>
    %55 = vector.multi_reduction <maximumf>, %54, %cst_15 [2] : vector<2x8x8xf32> to vector<2x8xf32>
    %56 = vector.shape_cast %55 : vector<2x8xf32> to vector<2x8x1xf32>
    %57 = vector.broadcast %56 : vector<2x8x1xf32> to vector<2x8x8xf32>
    %58 = arith.subf %54, %57 : vector<2x8x8xf32>
    %59 = math.exp %58 : vector<2x8x8xf32>
    %cst_16 = arith.constant dense<0.000000e+00> : vector<2x8xf32>
    %60 = vector.multi_reduction <add>, %59, %cst_16 [2] : vector<2x8x8xf32> to vector<2x8xf32>
    %61 = vector.shape_cast %60 : vector<2x8xf32> to vector<2x8x1xf32>
    %62 = tpu.reciprocal %61 {approx = true} : vector<2x8x1xf32> -> vector<2x8x1xf32>
    %63 = vector.broadcast %62 : vector<2x8x1xf32> to vector<2x8x8xf32>
    %64 = arith.mulf %59, %63 : vector<2x8x8xf32>
    %65 = arith.truncf %64 : vector<2x8x8xf32> to vector<2x8x8xbf16>
    "tpu.trace_start"() <{level = 10 : i32, message = "bqk,bkd->bqd"}> : () -> ()
    %cst_17 = arith.constant dense<0.000000e+00> : vector<2x8x32xf32>
    %66 = tpu.matmul %65, %53, %cst_17 {dimension_numbers = #tpu.dot_dimension_numbers<[2], [1], [1], [2], [0, 0, 0, 1, 1, 2], [0], [0]>} : vector<2x8x8xbf16>, vector<2x8x32xbf16>, vector<2x8x32xf32> -> vector<2x8x32xf32>
    "tpu.trace_stop"() : () -> ()
    %67 = vector.extract_strided_slice %16 {offsets = [0, 0, 96], sizes = [2, 8, 32], strides = [1, 1, 1]} : vector<2x8x128xbf16> to vector<2x8x32xbf16>
    %68 = vector.extract_strided_slice %17 {offsets = [0, 0, 96], sizes = [2, 8, 32], strides = [1, 1, 1]} : vector<2x8x128xbf16> to vector<2x8x32xbf16>
    %69 = vector.extract_strided_slice %18 {offsets = [0, 0, 96], sizes = [2, 8, 32], strides = [1, 1, 1]} : vector<2x8x128xbf16> to vector<2x8x32xbf16>
    "tpu.trace_start"() <{level = 10 : i32, message = "bqd,bkd->bqk"}> : () -> ()
    %cst_18 = arith.constant dense<0.000000e+00> : vector<2x8x8xf32>
    %70 = tpu.matmul %67, %68, %cst_18 {dimension_numbers = #tpu.dot_dimension_numbers<[2], [2], [1], [1], [0, 0, 0, 1, 1, 1], [0], [0]>} : vector<2x8x32xbf16>, vector<2x8x32xbf16>, vector<2x8x8xf32> -> vector<2x8x8xf32>
    "tpu.trace_stop"() : () -> ()
    %cst_19 = arith.constant dense<0xFF800000> : vector<2x8xf32>
    %71 = vector.multi_reduction <maximumf>, %70, %cst_19 [2] : vector<2x8x8xf32> to vector<2x8xf32>
    %72 = vector.shape_cast %71 : vector<2x8xf32> to vector<2x8x1xf32>
    %73 = vector.broadcast %72 : vector<2x8x1xf32> to vector<2x8x8xf32>
    %74 = arith.subf %70, %73 : vector<2x8x8xf32>
    %75 = math.exp %74 : vector<2x8x8xf32>
    %cst_20 = arith.constant dense<0.000000e+00> : vector<2x8xf32>
    %76 = vector.multi_reduction <add>, %75, %cst_20 [2] : vector<2x8x8xf32> to vector<2x8xf32>
    %77 = vector.shape_cast %76 : vector<2x8xf32> to vector<2x8x1xf32>
    %78 = tpu.reciprocal %77 {approx = true} : vector<2x8x1xf32> -> vector<2x8x1xf32>
    %79 = vector.broadcast %78 : vector<2x8x1xf32> to vector<2x8x8xf32>
    %80 = arith.mulf %75, %79 : vector<2x8x8xf32>
    %81 = arith.truncf %80 : vector<2x8x8xf32> to vector<2x8x8xbf16>
    "tpu.trace_start"() <{level = 10 : i32, message = "bqk,bkd->bqd"}> : () -> ()
    %cst_21 = arith.constant dense<0.000000e+00> : vector<2x8x32xf32>
    %82 = tpu.matmul %81, %69, %cst_21 {dimension_numbers = #tpu.dot_dimension_numbers<[2], [1], [1], [2], [0, 0, 0, 1, 1, 2], [0], [0]>} : vector<2x8x8xbf16>, vector<2x8x32xbf16>, vector<2x8x32xf32> -> vector<2x8x32xf32>
    "tpu.trace_stop"() : () -> ()
    %83 = tpu.concatenate %34, %50, %66, %82 in 2 : vector<2x8x32xf32>, vector<2x8x32xf32>, vector<2x8x32xf32>, vector<2x8x32xf32> -> vector<2x8x128xf32>
    %84 = vector.shape_cast %83 : vector<2x8x128xf32> to vector<16x128xf32>
    %85 = arith.truncf %84 : vector<16x128xf32> to vector<16x128xbf16>
    %86 = arith.index_cast %arg1 : i32 to index
    %c0_22 = arith.constant 0 : index
    %c0_23 = arith.constant 0 : index
    %87 = vector.load %arg7[%86, %c0_22, %c0_23] : memref<2x128x128xbf16, #tpu.memory_space<vmem>>, vector<1x128x128xbf16>
    %88 = vector.shape_cast %87 : vector<1x128x128xbf16> to vector<128x128xbf16>
    %cst_24 = arith.constant dense<0.000000e+00> : vector<16x128xf32>
    %89 = tpu.matmul %85, %88, %cst_24 {dimension_numbers = #tpu.dot_dimension_numbers<[1], [0], [0], [1], [0, 0, 1, 1], [], []>} : vector<16x128xbf16>, vector<128x128xbf16>, vector<16x128xf32> -> vector<16x128xf32>
    %90 = arith.index_cast %arg1 : i32 to index
    %c0_25 = arith.constant 0 : index
    %c0_26 = arith.constant 0 : index
    %91 = vector.load %arg8[%90, %c0_25, %c0_26] : memref<2x1x128xf32, #tpu.memory_space<vmem>>, vector<1x1x128xf32>
    %92 = vector.shape_cast %91 : vector<1x1x128xf32> to vector<1x128xf32>
    %93 = vector.broadcast %92 : vector<1x128xf32> to vector<16x128xf32>
    %94 = arith.addf %89, %93 : vector<16x128xf32>
    %95 = arith.addf %3, %94 : vector<16x128xf32>
    %96 = arith.index_cast %arg1 : i32 to index
    %c0_27 = arith.constant 0 : index
    %c0_28 = arith.constant 0 : index
    %97 = vector.load %arg9[%96, %c0_27, %c0_28] : memref<2x1x128xf32, #tpu.memory_space<vmem>>, vector<1x1x128xf32>
    %98 = vector.shape_cast %97 : vector<1x1x128xf32> to vector<1x128xf32>
    %99 = arith.index_cast %arg1 : i32 to index
    %c0_29 = arith.constant 0 : index
    %c0_30 = arith.constant 0 : index
    %100 = vector.load %arg10[%99, %c0_29, %c0_30] : memref<2x1x128xf32, #tpu.memory_space<vmem>>, vector<1x1x128xf32>
    %101 = vector.shape_cast %100 : vector<1x1x128xf32> to vector<1x128xf32>
    %cst_31 = arith.constant dense<0.000000e+00> : vector<16xf32>
    %102 = vector.multi_reduction <add>, %95, %cst_31 [1] : vector<16x128xf32> to vector<16xf32>
    %103 = vector.shape_cast %102 : vector<16xf32> to vector<16x1xf32>
    %cst_32 = arith.constant 1.280000e+02 : f32
    %104 = vector.broadcast %cst_32 : f32 to vector<16x1xf32>
    %105 = arith.divf %103, %104 : vector<16x1xf32>
    %106 = vector.broadcast %105 : vector<16x1xf32> to vector<16x128xf32>
    %107 = arith.subf %95, %106 : vector<16x128xf32>
    %108 = arith.mulf %107, %107 : vector<16x128xf32>
    %cst_33 = arith.constant dense<0.000000e+00> : vector<16xf32>
    %109 = vector.multi_reduction <add>, %108, %cst_33 [1] : vector<16x128xf32> to vector<16xf32>
    %110 = vector.shape_cast %109 : vector<16xf32> to vector<16x1xf32>
    %cst_34 = arith.constant 1.280000e+02 : f32
    %111 = vector.broadcast %cst_34 : f32 to vector<16x1xf32>
    %112 = arith.divf %110, %111 : vector<16x1xf32>
    %113 = vector.broadcast %105 : vector<16x1xf32> to vector<16x128xf32>
    %114 = arith.subf %95, %113 : vector<16x128xf32>
    %cst_35 = arith.constant 9.99999974E-6 : f32
    %115 = vector.broadcast %cst_35 : f32 to vector<16x1xf32>
    %116 = arith.addf %112, %115 : vector<16x1xf32>
    %117 = math.rsqrt %116 : vector<16x1xf32>
    %118 = vector.broadcast %117 : vector<16x1xf32> to vector<16x128xf32>
    %119 = arith.mulf %114, %118 : vector<16x128xf32>
    %120 = vector.broadcast %98 : vector<1x128xf32> to vector<16x128xf32>
    %121 = arith.mulf %119, %120 : vector<16x128xf32>
    %122 = vector.broadcast %101 : vector<1x128xf32> to vector<16x128xf32>
    %123 = arith.addf %121, %122 : vector<16x128xf32>
    %124 = arith.truncf %123 : vector<16x128xf32> to vector<16x128xbf16>
    %125 = arith.index_cast %arg1 : i32 to index
    %c0_36 = arith.constant 0 : index
    %c0_37 = arith.constant 0 : index
    %126 = vector.load %arg11[%125, %c0_36, %c0_37] : memref<2x128x2048xbf16, #tpu.memory_space<vmem>>, vector<1x128x2048xbf16>
    %127 = vector.shape_cast %126 : vector<1x128x2048xbf16> to vector<128x2048xbf16>
    %cst_38 = arith.constant dense<0.000000e+00> : vector<16x2048xf32>
    %128 = tpu.matmul %124, %127, %cst_38 {dimension_numbers = #tpu.dot_dimension_numbers<[1], [0], [0], [1], [0, 0, 1, 1], [], []>} : vector<16x128xbf16>, vector<128x2048xbf16>, vector<16x2048xf32> -> vector<16x2048xf32>
    %129 = arith.index_cast %arg1 : i32 to index
    %c0_39 = arith.constant 0 : index
    %c0_40 = arith.constant 0 : index
    %130 = vector.load %arg12[%129, %c0_39, %c0_40] : memref<2x1x2048xf32, #tpu.memory_space<vmem>>, vector<1x1x2048xf32>
    %131 = vector.shape_cast %130 : vector<1x1x2048xf32> to vector<1x2048xf32>
    %132 = vector.broadcast %131 : vector<1x2048xf32> to vector<16x2048xf32>
    %133 = arith.addf %128, %132 : vector<16x2048xf32>
    %cst_41 = arith.constant 0.000000e+00 : f32
    %134 = vector.broadcast %cst_41 : f32 to vector<16x2048xf32>
    %135 = arith.maximumf %133, %134 : vector<16x2048xf32>
    %136 = arith.truncf %135 : vector<16x2048xf32> to vector<16x2048xbf16>
    %137 = arith.index_cast %arg1 : i32 to index
    %c0_42 = arith.constant 0 : index
    %c0_43 = arith.constant 0 : index
    %138 = vector.load %arg13[%137, %c0_42, %c0_43] : memref<2x2048x128xbf16, #tpu.memory_space<vmem>>, vector<1x2048x128xbf16>
    %139 = vector.shape_cast %138 : vector<1x2048x128xbf16> to vector<2048x128xbf16>
    %cst_44 = arith.constant dense<0.000000e+00> : vector<16x128xf32>
    %140 = tpu.matmul %136, %139, %cst_44 {dimension_numbers = #tpu.dot_dimension_numbers<[1], [0], [0], [1], [0, 0, 1, 1], [], []>} : vector<16x2048xbf16>, vector<2048x128xbf16>, vector<16x128xf32> -> vector<16x128xf32>
    %141 = arith.index_cast %arg1 : i32 to index
    %c0_45 = arith.constant 0 : index
    %c0_46 = arith.constant 0 : index
    %142 = vector.load %arg14[%141, %c0_45, %c0_46] : memref<2x1x128xf32, #tpu.memory_space<vmem>>, vector<1x1x128xf32>
    %143 = vector.shape_cast %142 : vector<1x1x128xf32> to vector<1x128xf32>
    %144 = vector.broadcast %143 : vector<1x128xf32> to vector<16x128xf32>
    %145 = arith.addf %140, %144 : vector<16x128xf32>
    %146 = arith.addf %123, %145 : vector<16x128xf32>
    %147 = arith.index_cast %arg1 : i32 to index
    %c0_47 = arith.constant 0 : index
    %c0_48 = arith.constant 0 : index
    %148 = vector.load %arg15[%147, %c0_47, %c0_48] : memref<2x1x128xf32, #tpu.memory_space<vmem>>, vector<1x1x128xf32>
    %149 = vector.shape_cast %148 : vector<1x1x128xf32> to vector<1x128xf32>
    %150 = arith.index_cast %arg1 : i32 to index
    %c0_49 = arith.constant 0 : index
    %c0_50 = arith.constant 0 : index
    %151 = vector.load %arg16[%150, %c0_49, %c0_50] : memref<2x1x128xf32, #tpu.memory_space<vmem>>, vector<1x1x128xf32>
    %152 = vector.shape_cast %151 : vector<1x1x128xf32> to vector<1x128xf32>
    %cst_51 = arith.constant dense<0.000000e+00> : vector<16xf32>
    %153 = vector.multi_reduction <add>, %146, %cst_51 [1] : vector<16x128xf32> to vector<16xf32>
    %154 = vector.shape_cast %153 : vector<16xf32> to vector<16x1xf32>
    %cst_52 = arith.constant 1.280000e+02 : f32
    %155 = vector.broadcast %cst_52 : f32 to vector<16x1xf32>
    %156 = arith.divf %154, %155 : vector<16x1xf32>
    %157 = vector.broadcast %156 : vector<16x1xf32> to vector<16x128xf32>
    %158 = arith.subf %146, %157 : vector<16x128xf32>
    %159 = arith.mulf %158, %158 : vector<16x128xf32>
    %cst_53 = arith.constant dense<0.000000e+00> : vector<16xf32>
    %160 = vector.multi_reduction <add>, %159, %cst_53 [1] : vector<16x128xf32> to vector<16xf32>
    %161 = vector.shape_cast %160 : vector<16xf32> to vector<16x1xf32>
    %cst_54 = arith.constant 1.280000e+02 : f32
    %162 = vector.broadcast %cst_54 : f32 to vector<16x1xf32>
    %163 = arith.divf %161, %162 : vector<16x1xf32>
    %164 = vector.broadcast %156 : vector<16x1xf32> to vector<16x128xf32>
    %165 = arith.subf %146, %164 : vector<16x128xf32>
    %cst_55 = arith.constant 9.99999974E-6 : f32
    %166 = vector.broadcast %cst_55 : f32 to vector<16x1xf32>
    %167 = arith.addf %163, %166 : vector<16x1xf32>
    %168 = math.rsqrt %167 : vector<16x1xf32>
    %169 = vector.broadcast %168 : vector<16x1xf32> to vector<16x128xf32>
    %170 = arith.mulf %165, %169 : vector<16x128xf32>
    %171 = vector.broadcast %149 : vector<1x128xf32> to vector<16x128xf32>
    %172 = arith.mulf %170, %171 : vector<16x128xf32>
    %173 = vector.broadcast %152 : vector<1x128xf32> to vector<16x128xf32>
    %174 = arith.addf %172, %173 : vector<16x128xf32>
    %c0_56 = arith.constant 0 : index
    %c0_57 = arith.constant 0 : index
    %175 = vector.load %arg20[%c0_56, %c0_57] : memref<16x128xf32, #tpu.memory_space<vmem>>, vector<16x128xf32>
    tpu.vector_store %arg20[%c0_56, %c0_57], %174 {strides = array<i32>} : memref<16x128xf32, #tpu.memory_space<vmem>>, vector<16x128xf32>,
    %c1_i32 = arith.constant 1 : i32
    %176 = arith.cmpi eq, %arg1, %c1_i32 : i32
    %177 = arith.extui %176 : i1 to i32
    %c0_i32_58 = arith.constant 0 : i32
    %178 = arith.cmpi ne, %177, %c0_i32_58 : i32
    scf.if %178 {
      %c7 = arith.constant 7 : index
      %c0_59 = arith.constant 0 : index
      %179 = tpu.strided_load %arg20[%c7, %c0_59] {strides = array<i32: 8, 1>} : memref<16x128xf32, #tpu.memory_space<vmem>>, vector<2x128xf32>
      %180 = arith.truncf %179 : vector<2x128xf32> to vector<2x128xbf16>
      %c0_60 = arith.constant 0 : index
      %c0_61 = arith.constant 0 : index
      %181 = vector.load %arg17[%c0_60, %c0_61] : memref<128x128xbf16, #tpu.memory_space<vmem>>, vector<128x128xbf16>
      %cst_62 = arith.constant dense<0.000000e+00> : vector<2x128xf32>
      %182 = tpu.matmul %180, %181, %cst_62 {dimension_numbers = #tpu.dot_dimension_numbers<[1], [0], [0], [1], [0, 0, 1, 1], [], []>} : vector<2x128xbf16>, vector<128x128xbf16>, vector<2x128xf32> -> vector<2x128xf32>
      %c0_63 = arith.constant 0 : index
      %c0_64 = arith.constant 0 : index
      %183 = vector.load %arg18[%c0_63, %c0_64] : memref<1x128xf32, #tpu.memory_space<vmem>>, vector<1x128xf32>
      %184 = vector.broadcast %183 : vector<1x128xf32> to vector<2x128xf32>
      %185 = arith.addf %182, %184 : vector<2x128xf32>
      %c0_65 = arith.constant 0 : index
      %c0_66 = arith.constant 0 : index
      %c0_67 = arith.constant 0 : index
      %186 = vector.load %arg19[%c0_65, %c0_66, %c0_67] : memref<1x2x128xf32, #tpu.memory_space<vmem>>, vector<1x2x128xf32>
      %187 = vector.shape_cast %186 : vector<1x2x128xf32> to vector<2x128xf32>
      %188 = vector.shape_cast %185 : vector<2x128xf32> to vector<1x2x128xf32>
      tpu.vector_store %arg19[%c0_65, %c0_66, %c0_67], %188 {strides = array<i32>} : memref<1x2x128xf32, #tpu.memory_space<vmem>>, vector<1x2x128xf32>,
    } else {
    }
    return
  }
  func.func @transform_0(%arg0: i32, %arg1: i32) -> (i32, i32, i32) {
    %c0_i32 = arith.constant 0 : i32
    %c0_i32_0 = arith.constant 0 : i32
    %c0_i32_1 = arith.constant 0 : i32
    return %arg0, %c0_i32, %c0_i32_0 : i32, i32, i32
  }
  func.func @transform_1(%arg0: i32, %arg1: i32) -> (i32, i32) {
    %c0_i32 = arith.constant 0 : i32
    %c0_i32_0 = arith.constant 0 : i32
    %c0_i32_1 = arith.constant 0 : i32
    return %c0_i32, %c0_i32_0 : i32, i32
  }
  func.func @transform_2(%arg0: i32, %arg1: i32) -> (i32, i32) {
    %c0_i32 = arith.constant 0 : i32
    %c0_i32_0 = arith.constant 0 : i32
    %c0_i32_1 = arith.constant 0 : i32
    return %c0_i32, %c0_i32_0 : i32, i32
  }
  func.func @transform_3(%arg0: i32, %arg1: i32) -> (i32, i32, i32) {
    %c0_i32 = arith.constant 0 : i32
    %c0_i32_0 = arith.constant 0 : i32
    %c0_i32_1 = arith.constant 0 : i32
    %c0_i32_2 = arith.constant 0 : i32
    return %c0_i32, %c0_i32_0, %c0_i32_1 : i32, i32, i32
  }
  func.func @transform_4(%arg0: i32, %arg1: i32) -> (i32, i32, i32) {
    %c0_i32 = arith.constant 0 : i32
    %c0_i32_0 = arith.constant 0 : i32
    %c0_i32_1 = arith.constant 0 : i32
    %c0_i32_2 = arith.constant 0 : i32
    return %c0_i32, %c0_i32_0, %c0_i32_1 : i32, i32, i32
  }
  func.func @transform_5(%arg0: i32, %arg1: i32) -> (i32, i32, i32) {
    %c0_i32 = arith.constant 0 : i32
    %c0_i32_0 = arith.constant 0 : i32
    %c0_i32_1 = arith.constant 0 : i32
    %c0_i32_2 = arith.constant 0 : i32
    return %c0_i32, %c0_i32_0, %c0_i32_1 : i32, i32, i32
  }
  func.func @transform_6(%arg0: i32, %arg1: i32) -> (i32, i32, i32) {
    %c0_i32 = arith.constant 0 : i32
    %c0_i32_0 = arith.constant 0 : i32
    %c0_i32_1 = arith.constant 0 : i32
    %c0_i32_2 = arith.constant 0 : i32
    return %c0_i32, %c0_i32_0, %c0_i32_1 : i32, i32, i32
  }
  func.func @transform_7(%arg0: i32, %arg1: i32) -> (i32, i32, i32) {
    %c0_i32 = arith.constant 0 : i32
    %c0_i32_0 = arith.constant 0 : i32
    %c0_i32_1 = arith.constant 0 : i32
    %c0_i32_2 = arith.constant 0 : i32
    return %c0_i32, %c0_i32_0, %c0_i32_1 : i32, i32, i32
  }
  func.func @transform_8(%arg0: i32, %arg1: i32) -> (i32, i32, i32) {
    %c0_i32 = arith.constant 0 : i32
    %c0_i32_0 = arith.constant 0 : i32
    %c0_i32_1 = arith.constant 0 : i32
    %c0_i32_2 = arith.constant 0 : i32
    return %c0_i32, %c0_i32_0, %c0_i32_1 : i32, i32, i32
  }
  func.func @transform_9(%arg0: i32, %arg1: i32) -> (i32, i32, i32) {
    %c0_i32 = arith.constant 0 : i32
    %c0_i32_0 = arith.constant 0 : i32
    %c0_i32_1 = arith.constant 0 : i32
    %c0_i32_2 = arith.constant 0 : i32
    return %c0_i32, %c0_i32_0, %c0_i32_1 : i32, i32, i32
  }
  func.func @transform_10(%arg0: i32, %arg1: i32) -> (i32, i32, i32) {
    %c0_i32 = arith.constant 0 : i32
    %c0_i32_0 = arith.constant 0 : i32
    %c0_i32_1 = arith.constant 0 : i32
    %c0_i32_2 = arith.constant 0 : i32
    return %c0_i32, %c0_i32_0, %c0_i32_1 : i32, i32, i32
  }
  func.func @transform_11(%arg0: i32, %arg1: i32) -> (i32, i32, i32) {
    %c0_i32 = arith.constant 0 : i32
    %c0_i32_0 = arith.constant 0 : i32
    %c0_i32_1 = arith.constant 0 : i32
    %c0_i32_2 = arith.constant 0 : i32
    return %c0_i32, %c0_i32_0, %c0_i32_1 : i32, i32, i32
  }
  func.func @transform_12(%arg0: i32, %arg1: i32) -> (i32, i32, i32) {
    %c0_i32 = arith.constant 0 : i32
    %c0_i32_0 = arith.constant 0 : i32
    %c0_i32_1 = arith.constant 0 : i32
    %c0_i32_2 = arith.constant 0 : i32
    return %c0_i32, %c0_i32_0, %c0_i32_1 : i32, i32, i32
  }
  func.func @transform_13(%arg0: i32, %arg1: i32) -> (i32, i32, i32) {
    %c0_i32 = arith.constant 0 : i32
    %c0_i32_0 = arith.constant 0 : i32
    %c0_i32_1 = arith.constant 0 : i32
    %c0_i32_2 = arith.constant 0 : i32
    return %c0_i32, %c0_i32_0, %c0_i32_1 : i32, i32, i32
  }
  func.func @transform_14(%arg0: i32, %arg1: i32) -> (i32, i32, i32) {
    %c0_i32 = arith.constant 0 : i32
    %c0_i32_0 = arith.constant 0 : i32
    %c0_i32_1 = arith.constant 0 : i32
    %c0_i32_2 = arith.constant 0 : i32
    return %c0_i32, %c0_i32_0, %c0_i32_1 : i32, i32, i32
  }
  func.func @transform_15(%arg0: i32, %arg1: i32) -> (i32, i32) {
    %c0_i32 = arith.constant 0 : i32
    %c0_i32_0 = arith.constant 0 : i32
    %c0_i32_1 = arith.constant 0 : i32
    return %c0_i32, %c0_i32_0 : i32, i32
  }
  func.func @transform_16(%arg0: i32, %arg1: i32) -> (i32, i32) {
    %c0_i32 = arith.constant 0 : i32
    %c0_i32_0 = arith.constant 0 : i32
    %c0_i32_1 = arith.constant 0 : i32
    return %c0_i32, %c0_i32_0 : i32, i32
  }
  func.func @transform_17(%arg0: i32, %arg1: i32) -> (i32, i32, i32) {
    %c0_i32 = arith.constant 0 : i32
    %c0_i32_0 = arith.constant 0 : i32
    %c0_i32_1 = arith.constant 0 : i32
    return %arg0, %c0_i32, %c0_i32_0 : i32, i32, i32
  }
}

</mosaic_0001>

<llo_original>
// kernel: tpu_custom_call.1
$region0: #{tpu_custom_call.1}
  #allocation0 [shape = 'u32[]', space=smem, size = 0x4, offset = 0x4, fixed_abs, tag = 'smem constant byte address 0x4 - core index']
  #allocation1 [shape = 'u32[144,128]{1,0:T(1,128)}', space=vmem, size = 0x12000, scoped, tag = 'internal scratch']
  #allocation2 [shape = 'f32[16,128]{1,0:T(8,128)}', space=vmem, size = 0x2000, scoped, tag = 'scratch operand']
  %s0 = inlined_call_operand.hbm [shape: f32[2,8,128], index: 0, kind: input, shape index: {}]
  %s1 = inlined_call_operand.hbm [shape: bf16[128,128], index: 1, kind: input, shape index: {}]
  %s2 = inlined_call_operand.hbm [shape: f32[1,128], index: 2, kind: input, shape index: {}]
  %s3 = inlined_call_operand.hbm [shape: bf16[2,128,384], index: 3, kind: input, shape index: {}]
  %s4 = inlined_call_operand.vmem [shape: f32[2,1,384], index: 4, kind: input, shape index: {}]
  %s5 = inlined_call_operand.hbm [shape: bf16[2,128,128], index: 5, kind: input, shape index: {}]
  %s6 = inlined_call_operand.vmem [shape: f32[2,1,128], index: 6, kind: input, shape index: {}]
  %s7 = inlined_call_operand.vmem [shape: f32[2,1,128], index: 7, kind: input, shape index: {}]
  %s8 = inlined_call_operand.vmem [shape: f32[2,1,128], index: 8, kind: input, shape index: {}]
  %s9 = inlined_call_operand.hbm [shape: bf16[2,128,2048], index: 9, kind: input, shape index: {}]
  %s10 = inlined_call_operand.hbm [shape: f32[2,1,2048], index: 10, kind: input, shape index: {}]
  %s11 = inlined_call_operand.hbm [shape: bf16[2,2048,128], index: 11, kind: input, shape index: {}]
  %s12 = inlined_call_operand.vmem [shape: f32[2,1,128], index: 12, kind: input, shape index: {}]
  %s13 = inlined_call_operand.vmem [shape: f32[2,1,128], index: 13, kind: input, shape index: {}]
  %s14 = inlined_call_operand.vmem [shape: f32[2,1,128], index: 14, kind: input, shape index: {}]
  %s15 = inlined_call_operand.hbm [shape: bf16[128,128], index: 15, kind: input, shape index: {}]
  %s16 = inlined_call_operand.vmem [shape: f32[1,128], index: 16, kind: input, shape index: {}]
  %s17 = inlined_call_operand.hbm [shape: f32[1,2,128], index: 17, kind: output, shape index: {}]
  %s18 = sld [smem:[#allocation0]]
  $region145: #{tpu_custom_call.1} parent=0
    _
  %s20 = ssub.s32 1, %s18
  %s21 = scalar_select 0, %s20, %s18
  $region1: #{tpu_custom_call.1} parent=0
    #allocation3 [shape = 'u8[8192]{0}', space=vmem, size = 0x2000, scoped, tag = 'input window, operand 0, single buffered']
    #allocation4 [shape = 's32[2]{0}', space=sflag, size = 0x8, scoped, tag = 'scoped memory for tpu_custom_call.1']
    #allocation5 [shape = 's32[2]{0}', space=sflag, size = 0x8, scoped, tag = 'scoped memory for tpu_custom_call.1']
    #allocation6 [shape = 'u8[32768]{0}', space=vmem, size = 0x8000, scoped, tag = 'input window, operand 1, single buffered']
    #allocation7 [shape = 's32[1]{0}', space=sflag, size = 0x4, scoped, tag = 'scoped memory for tpu_custom_call.1']
    #allocation8 [shape = 'u8[512]{0}', space=vmem, size = 0x400, scoped, tag = 'input window, operand 2, single buffered']
    #allocation9 [shape = 'u8[196608]{0}', space=vmem, size = 0x30000, scoped, tag = 'input window, operand 3, single buffered']
    #allocation10 [shape = 's32[1]{0}', space=sflag, size = 0x4, scoped, tag = 'scoped memory for tpu_custom_call.1']
    #allocation11 [shape = 'u8[65536]{0}', space=vmem, size = 0x10000, scoped, tag = 'input window, operand 5, single buffered']
    #allocation12 [shape = 'u8[1048576]{0}', space=vmem, size = 0x100000, scoped, tag = 'input window, operand 9, single buffered']
    #allocation13 [shape = 's32[1]{0}', space=sflag, size = 0x4, scoped, tag = 'scoped memory for tpu_custom_call.1']
    #allocation14 [shape = 'u8[16384]{0}', space=vmem, size = 0x4000, scoped, tag = 'input window, operand 10, single buffered']
    #allocation15 [shape = 'u8[1048576]{0}', space=vmem, size = 0x100000, scoped, tag = 'input window, operand 11, single buffered']
    #allocation16 [shape = 's32[1]{0}', space=sflag, size = 0x4, scoped, tag = 'scoped memory for tpu_custom_call.1']
    #allocation17 [shape = 'u8[32768]{0}', space=vmem, size = 0x8000, scoped, tag = 'input window, operand 15, single buffered']
    #allocation18 [shape = 'u8[1024]{0}', space=vmem, size = 0x400, scoped, tag = 'output window, operand 0, single buffered']
    %22 = vsyncpa [#allocation4], 0
    %23 = vsyncpa [#allocation7], 0
    %24 = vsyncpa [#allocation10], 0
    %25 = vsyncpa [#allocation13], 0
    %26 = vsyncpa [#allocation16], 0
    %27 = vsyncpa [#allocation5], 0
    loop: start=0, step=1, limit=4
    $region2: #{tpu_custom_call.1} parent=1 // loop_pre_header
      _
    $region3: #{tpu_custom_call.1} parent=1 // loop_header
      %s29 = sphi 0, %s33
      %p30 = scmp.ge.s32.totalorder %s29, 4
      %s36 = sphi 0, %s48
      %s37 = sphi 0, %s44
      %s38 = sphi 0, %s36
      %s39 = sphi 0, %s37
      %s40 = sphi 0, %s38
      %s41 = sphi 0, %s39
      %s51 = sphi 0, %s53
      %s54 = sphi 0, %s51
      %s55 = sphi 0, %s54
      %s71 = sphi 0, %s55
      %s75 = sphi 0, %s75
      %s77 = sphi 0, %s75
      %s78 = sphi 0, %s77
      %s92 = sphi 0, %s78
      %s96 = sphi 0, %s96
      %s98 = sphi 0, %s96
      %s99 = sphi 0, %s98
      %s113 = sphi 0, %s99
      %s117 = sphi 0, %s117
      %s119 = sphi 0, %s117
      %s120 = sphi 0, %s119
      %s134 = sphi 0, %s120
      %s138 = sphi 0, %s138
      %s140 = sphi 0, %s138
      %s141 = sphi 0, %s140
      %s155 = sphi 0, %s141
      %s159 = sphi 0, %s159
      %s161 = sphi 0, %s159
      %s162 = sphi 0, %s161
      %s176 = sphi 0, %s162
      %s180 = sphi 0, %s180
      %s182 = sphi 0, %s180
      %s183 = sphi 0, %s182
      %s197 = sphi 0, %s183
      %s201 = sphi 0, %s201
      %s203 = sphi 0, %s201
      %s204 = sphi 0, %s203
      %s218 = sphi 0, %s204
      %s222 = sphi 0, %s222
      %s224 = sphi 0, %s222
      %s225 = sphi 0, %s224
      %s239 = sphi 0, %s225
      %s243 = sphi 0, %s243
      %s245 = sphi 0, %s243
      %s246 = sphi 0, %s245
      %s260 = sphi 0, %s246
      %s264 = sphi 0, %s264
      %s266 = sphi 0, %s264
      %s267 = sphi 0, %s266
      %s281 = sphi 0, %s267
      %s285 = sphi 0, %s285
      %s287 = sphi 0, %s285
      %s288 = sphi 0, %s287
      %s302 = sphi 0, %s288
      %s306 = sphi 0, %s306
      %s308 = sphi 0, %s306
      %s309 = sphi 0, %s308
      %s323 = sphi 0, %s309
      %s327 = sphi 0, %s327
      %s329 = sphi 0, %s327
      %s330 = sphi 0, %s329
      %s344 = sphi 0, %s330
      %s348 = sphi 0, %s348
      %s350 = sphi 0, %s348
      %s351 = sphi 0, %s350
      %s365 = sphi 0, %s351
      %s369 = sphi 0, %s369
      %s371 = sphi 0, %s369
      %s372 = sphi 0, %s371
      %s386 = sphi 0, %s372
      %s390 = sphi 0, %s390
      %s392 = sphi 0, %s390
      %s393 = sphi 0, %s392
      %s407 = sphi 0, %s393
      %s413 = sphi 0, %s415
      %s416 = sphi 0, %s413
      %s417 = sphi 0, %s416
      %s433 = sphi 0, %s417
    $region4: #{tpu_custom_call.1} parent=1 // loop_header_branch
      %32 = sbr.rel (%p30) target = $region8
    $region5: #{tpu_custom_call.1} parent=1 // loop_body
      %s34 = ssub.s32 %s29, 1
      %s35 = ssub.s32 %s29, 2
      %s42 = sadd.s32 1, %s37
      %p43 = scmp.ge.s32.totalorder %s42, 2
      %s44 = scalar_select %p43, 0, %s42
      %s45 = sadd.s32 1, %s36
      %s46 = scalar_select %p43, %s45, %s36
      %p47 = scmp.ge.s32.totalorder %s46, 1
      %s48 = scalar_select %p47, 0, %s46
      %s49 = ssub.s32 %s36, %s48
      %p50 = scmp.eq.s32.totalorder %s49, 0
      %s52 = sadd.s32 %s51, 1
      %s53 = scalar_select %p50, %s51, %s52
      %p56 = pneg %p50
      %p57 = scmp.eq.s32.totalorder %s29, 1
      %p58 = por %p56, %p57
      %p59 = scmp.ne.s32.totalorder %s51, %s54
      %p60 = scmp.eq.s32.totalorder %s29, 0
      %p61 = por %p59, %p60
      %p62 = scmp.ne.s32.totalorder %s51, %s54
      %p63 = scmp.eq.s32.totalorder %s34, 1
      %p64 = por %p62, %p63
      %p65 = scmp.ne.s32.totalorder %s54, %s55
      %p66 = scmp.eq.s32.totalorder %s34, 0
      %p67 = por %p65, %p66
      %p68 = scmp.ne.s32.totalorder %s54, %s55
      %p69 = scmp.eq.s32.totalorder %s35, 1
      %p70 = por %p68, %p69
      %p72 = scmp.ne.s32.totalorder %s55, %s71
      %p73 = scmp.eq.s32.totalorder %s35, 0
      %p74 = por %p72, %p73
      %s76 = sadd.s32 %s75, 1
      %p79 = scmp.eq.s32.totalorder %s29, 1
      %p80 = scmp.ne.s32.totalorder %s75, %s77
      %p81 = scmp.eq.s32.totalorder %s29, 0
      %p82 = por %p80, %p81
      %p83 = scmp.ne.s32.totalorder %s75, %s77
      %p84 = scmp.eq.s32.totalorder %s34, 1
      %p85 = por %p83, %p84
      %p86 = scmp.ne.s32.totalorder %s77, %s78
      %p87 = scmp.eq.s32.totalorder %s34, 0
      %p88 = por %p86, %p87
      %p89 = scmp.ne.s32.totalorder %s77, %s78
      %p90 = scmp.eq.s32.totalorder %s35, 1
      %p91 = por %p89, %p90
      %p93 = scmp.ne.s32.totalorder %s78, %s92
      %p94 = scmp.eq.s32.totalorder %s35, 0
      %p95 = por %p93, %p94
      %s97 = sadd.s32 %s96, 1
      %p100 = scmp.eq.s32.totalorder %s29, 1
      %p101 = scmp.ne.s32.totalorder %s96, %s98
      %p102 = scmp.eq.s32.totalorder %s29, 0
      %p103 = por %p101, %p102
      %p104 = scmp.ne.s32.totalorder %s96, %s98
      %p105 = scmp.eq.s32.totalorder %s34, 1
      %p106 = por %p104, %p105
      %p107 = scmp.ne.s32.totalorder %s98, %s99
      %p108 = scmp.eq.s32.totalorder %s34, 0
      %p109 = por %p107, %p108
      %p110 = scmp.ne.s32.totalorder %s98, %s99
      %p111 = scmp.eq.s32.totalorder %s35, 1
      %p112 = por %p110, %p111
      %p114 = scmp.ne.s32.totalorder %s99, %s113
      %p115 = scmp.eq.s32.totalorder %s35, 0
      %p116 = por %p114, %p115
      %s118 = sadd.s32 %s117, 1
      %p121 = scmp.eq.s32.totalorder %s29, 1
      %p122 = scmp.ne.s32.totalorder %s117, %s119
      %p123 = scmp.eq.s32.totalorder %s29, 0
      %p124 = por %p122, %p123
      %p125 = scmp.ne.s32.totalorder %s117, %s119
      %p126 = scmp.eq.s32.totalorder %s34, 1
      %p127 = por %p125, %p126
      %p128 = scmp.ne.s32.totalorder %s119, %s120
      %p129 = scmp.eq.s32.totalorder %s34, 0
      %p130 = por %p128, %p129
      %p131 = scmp.ne.s32.totalorder %s119, %s120
      %p132 = scmp.eq.s32.totalorder %s35, 1
      %p133 = por %p131, %p132
      %p135 = scmp.ne.s32.totalorder %s120, %s134
      %p136 = scmp.eq.s32.totalorder %s35, 0
      %p137 = por %p135, %p136
      %s139 = sadd.s32 %s138, 1
      %p142 = scmp.eq.s32.totalorder %s29, 1
      %p143 = scmp.ne.s32.totalorder %s138, %s140
      %p144 = scmp.eq.s32.totalorder %s29, 0
      %p145 = por %p143, %p144
      %p146 = scmp.ne.s32.totalorder %s138, %s140
      %p147 = scmp.eq.s32.totalorder %s34, 1
      %p148 = por %p146, %p147
      %p149 = scmp.ne.s32.totalorder %s140, %s141
      %p150 = scmp.eq.s32.totalorder %s34, 0
      %p151 = por %p149, %p150
      %p152 = scmp.ne.s32.totalorder %s140, %s141
      %p153 = scmp.eq.s32.totalorder %s35, 1
      %p154 = por %p152, %p153
      %p156 = scmp.ne.s32.totalorder %s141, %s155
      %p157 = scmp.eq.s32.totalorder %s35, 0
      %p158 = por %p156, %p157
      %s160 = sadd.s32 %s159, 1
      %p163 = scmp.eq.s32.totalorder %s29, 1
      %p164 = scmp.ne.s32.totalorder %s159, %s161
      %p165 = scmp.eq.s32.totalorder %s29, 0
      %p166 = por %p164, %p165
      %p167 = scmp.ne.s32.totalorder %s159, %s161
      %p168 = scmp.eq.s32.totalorder %s34, 1
      %p169 = por %p167, %p168
      %p170 = scmp.ne.s32.totalorder %s161, %s162
      %p171 = scmp.eq.s32.totalorder %s34, 0
      %p172 = por %p170, %p171
      %p173 = scmp.ne.s32.totalorder %s161, %s162
      %p174 = scmp.eq.s32.totalorder %s35, 1
      %p175 = por %p173, %p174
      %p177 = scmp.ne.s32.totalorder %s162, %s176
      %p178 = scmp.eq.s32.totalorder %s35, 0
      %p179 = por %p177, %p178
      %s181 = sadd.s32 %s180, 1
      %p184 = scmp.eq.s32.totalorder %s29, 1
      %p185 = scmp.ne.s32.totalorder %s180, %s182
      %p186 = scmp.eq.s32.totalorder %s29, 0
      %p187 = por %p185, %p186
      %p188 = scmp.ne.s32.totalorder %s180, %s182
      %p189 = scmp.eq.s32.totalorder %s34, 1
      %p190 = por %p188, %p189
      %p191 = scmp.ne.s32.totalorder %s182, %s183
      %p192 = scmp.eq.s32.totalorder %s34, 0
      %p193 = por %p191, %p192
      %p194 = scmp.ne.s32.totalorder %s182, %s183
      %p195 = scmp.eq.s32.totalorder %s35, 1
      %p196 = por %p194, %p195
      %p198 = scmp.ne.s32.totalorder %s183, %s197
      %p199 = scmp.eq.s32.totalorder %s35, 0
      %p200 = por %p198, %p199
      %s202 = sadd.s32 %s201, 1
      %p205 = scmp.eq.s32.totalorder %s29, 1
      %p206 = scmp.ne.s32.totalorder %s201, %s203
      %p207 = scmp.eq.s32.totalorder %s29, 0
      %p208 = por %p206, %p207
      %p209 = scmp.ne.s32.totalorder %s201, %s203
      %p210 = scmp.eq.s32.totalorder %s34, 1
      %p211 = por %p209, %p210
      %p212 = scmp.ne.s32.totalorder %s203, %s204
      %p213 = scmp.eq.s32.totalorder %s34, 0
      %p214 = por %p212, %p213
      %p215 = scmp.ne.s32.totalorder %s203, %s204
      %p216 = scmp.eq.s32.totalorder %s35, 1
      %p217 = por %p215, %p216
      %p219 = scmp.ne.s32.totalorder %s204, %s218
      %p220 = scmp.eq.s32.totalorder %s35, 0
      %p221 = por %p219, %p220
      %s223 = sadd.s32 %s222, 1
      %p226 = scmp.eq.s32.totalorder %s29, 1
      %p227 = scmp.ne.s32.totalorder %s222, %s224
      %p228 = scmp.eq.s32.totalorder %s29, 0
      %p229 = por %p227, %p228
      %p230 = scmp.ne.s32.totalorder %s222, %s224
      %p231 = scmp.eq.s32.totalorder %s34, 1
      %p232 = por %p230, %p231
      %p233 = scmp.ne.s32.totalorder %s224, %s225
      %p234 = scmp.eq.s32.totalorder %s34, 0
      %p235 = por %p233, %p234
      %p236 = scmp.ne.s32.totalorder %s224, %s225
      %p237 = scmp.eq.s32.totalorder %s35, 1
      %p238 = por %p236, %p237
      %p240 = scmp.ne.s32.totalorder %s225, %s239
      %p241 = scmp.eq.s32.totalorder %s35, 0
      %p242 = por %p240, %p241
      %s244 = sadd.s32 %s243, 1
      %p247 = scmp.eq.s32.totalorder %s29, 1
      %p248 = scmp.ne.s32.totalorder %s243, %s245
      %p249 = scmp.eq.s32.totalorder %s29, 0
      %p250 = por %p248, %p249
      %p251 = scmp.ne.s32.totalorder %s243, %s245
      %p252 = scmp.eq.s32.totalorder %s34, 1
      %p253 = por %p251, %p252
      %p254 = scmp.ne.s32.totalorder %s245, %s246
      %p255 = scmp.eq.s32.totalorder %s34, 0
      %p256 = por %p254, %p255
      %p257 = scmp.ne.s32.totalorder %s245, %s246
      %p258 = scmp.eq.s32.totalorder %s35, 1
      %p259 = por %p257, %p258
      %p261 = scmp.ne.s32.totalorder %s246, %s260
      %p262 = scmp.eq.s32.totalorder %s35, 0
      %p263 = por %p261, %p262
      %s265 = sadd.s32 %s264, 1
      %p268 = scmp.eq.s32.totalorder %s29, 1
      %p269 = scmp.ne.s32.totalorder %s264, %s266
      %p270 = scmp.eq.s32.totalorder %s29, 0
      %p271 = por %p269, %p270
      %p272 = scmp.ne.s32.totalorder %s264, %s266
      %p273 = scmp.eq.s32.totalorder %s34, 1
      %p274 = por %p272, %p273
      %p275 = scmp.ne.s32.totalorder %s266, %s267
      %p276 = scmp.eq.s32.totalorder %s34, 0
      %p277 = por %p275, %p276
      %p278 = scmp.ne.s32.totalorder %s266, %s267
      %p279 = scmp.eq.s32.totalorder %s35, 1
      %p280 = por %p278, %p279
      %p282 = scmp.ne.s32.totalorder %s267, %s281
      %p283 = scmp.eq.s32.totalorder %s35, 0
      %p284 = por %p282, %p283
      %s286 = sadd.s32 %s285, 1
      %p289 = scmp.eq.s32.totalorder %s29, 1
      %p290 = scmp.ne.s32.totalorder %s285, %s287
      %p291 = scmp.eq.s32.totalorder %s29, 0
      %p292 = por %p290, %p291
      %p293 = scmp.ne.s32.totalorder %s285, %s287
      %p294 = scmp.eq.s32.totalorder %s34, 1
      %p295 = por %p293, %p294
      %p296 = scmp.ne.s32.totalorder %s287, %s288
      %p297 = scmp.eq.s32.totalorder %s34, 0
      %p298 = por %p296, %p297
      %p299 = scmp.ne.s32.totalorder %s287, %s288
      %p300 = scmp.eq.s32.totalorder %s35, 1
      %p301 = por %p299, %p300
      %p303 = scmp.ne.s32.totalorder %s288, %s302
      %p304 = scmp.eq.s32.totalorder %s35, 0
      %p305 = por %p303, %p304
      %s307 = sadd.s32 %s306, 1
      %p310 = scmp.eq.s32.totalorder %s29, 1
      %p311 = scmp.ne.s32.totalorder %s306, %s308
      %p312 = scmp.eq.s32.totalorder %s29, 0
      %p313 = por %p311, %p312
      %p314 = scmp.ne.s32.totalorder %s306, %s308
      %p315 = scmp.eq.s32.totalorder %s34, 1
      %p316 = por %p314, %p315
      %p317 = scmp.ne.s32.totalorder %s308, %s309
      %p318 = scmp.eq.s32.totalorder %s34, 0
      %p319 = por %p317, %p318
      %p320 = scmp.ne.s32.totalorder %s308, %s309
      %p321 = scmp.eq.s32.totalorder %s35, 1
      %p322 = por %p320, %p321
      %p324 = scmp.ne.s32.totalorder %s309, %s323
      %p325 = scmp.eq.s32.totalorder %s35, 0
      %p326 = por %p324, %p325
      %s328 = sadd.s32 %s327, 1
      %p331 = scmp.eq.s32.totalorder %s29, 1
      %p332 = scmp.ne.s32.totalorder %s327, %s329
      %p333 = scmp.eq.s32.totalorder %s29, 0
      %p334 = por %p332, %p333
      %p335 = scmp.ne.s32.totalorder %s327, %s329
      %p336 = scmp.eq.s32.totalorder %s34, 1
      %p337 = por %p335, %p336
      %p338 = scmp.ne.s32.totalorder %s329, %s330
      %p339 = scmp.eq.s32.totalorder %s34, 0
      %p340 = por %p338, %p339
      %p341 = scmp.ne.s32.totalorder %s329, %s330
      %p342 = scmp.eq.s32.totalorder %s35, 1
      %p343 = por %p341, %p342
      %p345 = scmp.ne.s32.totalorder %s330, %s344
      %p346 = scmp.eq.s32.totalorder %s35, 0
      %p347 = por %p345, %p346
      %s349 = sadd.s32 %s348, 1
      %p352 = scmp.eq.s32.totalorder %s29, 1
      %p353 = scmp.ne.s32.totalorder %s348, %s350
      %p354 = scmp.eq.s32.totalorder %s29, 0
      %p355 = por %p353, %p354
      %p356 = scmp.ne.s32.totalorder %s348, %s350
      %p357 = scmp.eq.s32.totalorder %s34, 1
      %p358 = por %p356, %p357
      %p359 = scmp.ne.s32.totalorder %s350, %s351
      %p360 = scmp.eq.s32.totalorder %s34, 0
      %p361 = por %p359, %p360
      %p362 = scmp.ne.s32.totalorder %s350, %s351
      %p363 = scmp.eq.s32.totalorder %s35, 1
      %p364 = por %p362, %p363
      %p366 = scmp.ne.s32.totalorder %s351, %s365
      %p367 = scmp.eq.s32.totalorder %s35, 0
      %p368 = por %p366, %p367
      %s370 = sadd.s32 %s369, 1
      %p373 = scmp.eq.s32.totalorder %s29, 1
      %p374 = scmp.ne.s32.totalorder %s369, %s371
      %p375 = scmp.eq.s32.totalorder %s29, 0
      %p376 = por %p374, %p375
      %p377 = scmp.ne.s32.totalorder %s369, %s371
      %p378 = scmp.eq.s32.totalorder %s34, 1
      %p379 = por %p377, %p378
      %p380 = scmp.ne.s32.totalorder %s371, %s372
      %p381 = scmp.eq.s32.totalorder %s34, 0
      %p382 = por %p380, %p381
      %p383 = scmp.ne.s32.totalorder %s371, %s372
      %p384 = scmp.eq.s32.totalorder %s35, 1
      %p385 = por %p383, %p384
      %p387 = scmp.ne.s32.totalorder %s372, %s386
      %p388 = scmp.eq.s32.totalorder %s35, 0
      %p389 = por %p387, %p388
      %s391 = sadd.s32 %s390, 1
      %p394 = scmp.eq.s32.totalorder %s29, 1
      %p395 = scmp.ne.s32.totalorder %s390, %s392
      %p396 = scmp.eq.s32.totalorder %s29, 0
      %p397 = por %p395, %p396
      %p398 = scmp.ne.s32.totalorder %s390, %s392
      %p399 = scmp.eq.s32.totalorder %s34, 1
      %p400 = por %p398, %p399
      %p401 = scmp.ne.s32.totalorder %s392, %s393
      %p402 = scmp.eq.s32.totalorder %s34, 0
      %p403 = por %p401, %p402
      %p404 = scmp.ne.s32.totalorder %s392, %s393
      %p405 = scmp.eq.s32.totalorder %s35, 1
      %p406 = por %p404, %p405
      %p408 = scmp.ne.s32.totalorder %s393, %s407
      %p409 = scmp.eq.s32.totalorder %s35, 0
      %p410 = por %p408, %p409
      %s411 = ssub.s32 %s36, %s48
      %p412 = scmp.eq.s32.totalorder %s411, 0
      %s414 = sadd.s32 %s413, 1
      %s415 = scalar_select %p412, %s413, %s414
      %p418 = pneg %p412
      %p419 = scmp.eq.s32.totalorder %s29, 1
      %p420 = por %p418, %p419
      %p421 = scmp.ne.s32.totalorder %s413, %s416
      %p422 = scmp.eq.s32.totalorder %s29, 0
      %p423 = por %p421, %p422
      %p424 = scmp.ne.s32.totalorder %s413, %s416
      %p425 = scmp.eq.s32.totalorder %s34, 1
      %p426 = por %p424, %p425
      %p427 = scmp.ne.s32.totalorder %s416, %s417
      %p428 = scmp.eq.s32.totalorder %s34, 0
      %p429 = por %p427, %p428
      %p430 = scmp.ne.s32.totalorder %s416, %s417
      %p431 = scmp.eq.s32.totalorder %s35, 1
      %p432 = por %p430, %p431
      %p434 = scmp.ne.s32.totalorder %s417, %s433
      %p435 = scmp.eq.s32.totalorder %s35, 0
      %p436 = por %p434, %p435
      %p437 = scmp.le.s32.totalorder 1, %s29
      %p438 = scmp.lt.s32.totalorder %s29, 3
      %p439 = pnand %p437, %p438
      %p440 = pneg %p439
      // Predicated region
      $region9: #{tpu_custom_call.1} parent=5 // pred_check
        _
      $region10: #{tpu_custom_call.1} parent=5 // pred_check_branch
        %442 = sbr.rel (%p439) target = $region12
      $region11: #{tpu_custom_call.1} parent=5 // pred_region
        %s443 = ssub.s32 %s29, 1
        // Predicated region
        $region13: #{tpu_custom_call.1} parent=11 // pred_check
          %p444 = pneg %p67
        $region14: #{tpu_custom_call.1} parent=11 // pred_check_branch
          %446 = sbr.rel (%p444) target = $region16
        $region15: #{tpu_custom_call.1} parent=11 // pred_region
          %s447 = smul.u32 2, %s38
          %s449 = ssub.s32 256, 256
          %450 = vsyncadd [#allocation4], %s449
          %s451 = smul.addr %s447, 128
          %s452 = scalar_lea.hbm %s0, %s451
          %s453 = sshll.u32 [#allocation3], 4
          %s454 = int_to_ptr.vmem [resolvable:$true] %s453
          %459 = dma.hbm_to_vmem [thread:$0]  %s452, 256, %s454, [#allocation4], 128, 128, 8
        $region16: #{tpu_custom_call.1} parent=11 // pred_fallthru
          _
        // Predicated region
        $region17: #{tpu_custom_call.1} parent=11 // pred_check
          %p460 = pneg %p88
        $region18: #{tpu_custom_call.1} parent=11 // pred_check_branch
          %462 = sbr.rel (%p460) target = $region20
        $region19: #{tpu_custom_call.1} parent=11 // pred_region
          %s464 = ssub.s32 1024, 1024
          %465 = vsyncadd [#allocation7], %s464
          %s466 = sshll.u32 [#allocation6], 4
          %s467 = int_to_ptr.vmem [resolvable:$true] %s466
          %472 = dma.hbm_to_vmem [thread:$0]  %s1, 1024, %s467, [#allocation7], 64, 64, 4
        $region20: #{tpu_custom_call.1} parent=11 // pred_fallthru
          _
        // Predicated region
        $region21: #{tpu_custom_call.1} parent=11 // pred_check
          %p473 = pneg %p109
        $region22: #{tpu_custom_call.1} parent=11 // pred_check_branch
          %475 = sbr.rel (%p473) target = $region24
        $region23: #{tpu_custom_call.1} parent=11 // pred_region
          %s477 = ssub.s32 16, 16
          %478 = vsyncadd [#allocation7], %s477
          %s480 = sshll.u32 [#allocation8], 4
          %s481 = int_to_ptr.vmem [resolvable:$true] %s480
          %483 = dma.hbm_to_vmem [thread:$0]  %s2, 16, %s481, [#allocation7]
        $region24: #{tpu_custom_call.1} parent=11 // pred_fallthru
          _
        // Predicated region
        $region25: #{tpu_custom_call.1} parent=11 // pred_check
          %p484 = pneg %p130
        $region26: #{tpu_custom_call.1} parent=11 // pred_check_branch
          %486 = sbr.rel (%p484) target = $region28
        $region27: #{tpu_custom_call.1} parent=11 // pred_region
          %s488 = ssub.s32 6144, 6144
          %489 = vsyncadd [#allocation10], %s488
          %s490 = sshll.u32 [#allocation9], 4
          %s491 = int_to_ptr.vmem [resolvable:$true] %s490
          %496 = dma.hbm_to_vmem [thread:$0]  %s3, 6144, %s491, [#allocation10], 192, 192, 12
        $region28: #{tpu_custom_call.1} parent=11 // pred_fallthru
          _
        // Predicated region
        $region29: #{tpu_custom_call.1} parent=11 // pred_check
          %p497 = pneg %p151
        $region30: #{tpu_custom_call.1} parent=11 // pred_check_branch
          %499 = sbr.rel (%p497) target = $region32
        $region31: #{tpu_custom_call.1} parent=11 // pred_region
          _
        $region32: #{tpu_custom_call.1} parent=11 // pred_fallthru
          _
        // Predicated region
        $region33: #{tpu_custom_call.1} parent=11 // pred_check
          %p500 = pneg %p172
        $region34: #{tpu_custom_call.1} parent=11 // pred_check_branch
          %502 = sbr.rel (%p500) target = $region36
        $region35: #{tpu_custom_call.1} parent=11 // pred_region
          %s504 = ssub.s32 2048, 2048
          %505 = vsyncadd [#allocation10], %s504
          %s506 = sshll.u32 [#allocation11], 4
          %s507 = int_to_ptr.vmem [resolvable:$true] %s506
          %512 = dma.hbm_to_vmem [thread:$0]  %s5, 2048, %s507, [#allocation10], 64, 64, 4
        $region36: #{tpu_custom_call.1} parent=11 // pred_fallthru
          _
        // Predicated region
        $region37: #{tpu_custom_call.1} parent=11 // pred_check
          %p513 = pneg %p193
        $region38: #{tpu_custom_call.1} parent=11 // pred_check_branch
          %515 = sbr.rel (%p513) target = $region40
        $region39: #{tpu_custom_call.1} parent=11 // pred_region
          _
        $region40: #{tpu_custom_call.1} parent=11 // pred_fallthru
          _
        // Predicated region
        $region41: #{tpu_custom_call.1} parent=11 // pred_check
          %p516 = pneg %p214
        $region42: #{tpu_custom_call.1} parent=11 // pred_check_branch
          %518 = sbr.rel (%p516) target = $region44
        $region43: #{tpu_custom_call.1} parent=11 // pred_region
          _
        $region44: #{tpu_custom_call.1} parent=11 // pred_fallthru
          _
        // Predicated region
        $region45: #{tpu_custom_call.1} parent=11 // pred_check
          %p519 = pneg %p235
        $region46: #{tpu_custom_call.1} parent=11 // pred_check_branch
          %521 = sbr.rel (%p519) target = $region48
        $region47: #{tpu_custom_call.1} parent=11 // pred_region
          _
        $region48: #{tpu_custom_call.1} parent=11 // pred_fallthru
          _
        // Predicated region
        $region49: #{tpu_custom_call.1} parent=11 // pred_check
          %p522 = pneg %p256
        $region50: #{tpu_custom_call.1} parent=11 // pred_check_branch
          %524 = sbr.rel (%p522) target = $region52
        $region51: #{tpu_custom_call.1} parent=11 // pred_region
          %s526 = ssub.s32 32768, 32768
          %527 = vsyncadd [#allocation13], %s526
          %s528 = sshll.u32 [#allocation12], 4
          %s529 = int_to_ptr.vmem [resolvable:$true] %s528
          %534 = dma.hbm_to_vmem [thread:$0]  %s9, 32768, %s529, [#allocation13], 1024, 1024, 64
        $region52: #{tpu_custom_call.1} parent=11 // pred_fallthru
          _
        // Predicated region
        $region53: #{tpu_custom_call.1} parent=11 // pred_check
          %p535 = pneg %p277
        $region54: #{tpu_custom_call.1} parent=11 // pred_check_branch
          %537 = sbr.rel (%p535) target = $region56
        $region55: #{tpu_custom_call.1} parent=11 // pred_region
          %s539 = ssub.s32 512, 512
          %540 = vsyncadd [#allocation13], %s539
          %s541 = sshll.u32 [#allocation14], 4
          %s542 = int_to_ptr.vmem [resolvable:$true] %s541
          %547 = dma.hbm_to_vmem [thread:$0]  %s10, 512, %s542, [#allocation13], 256, 256, 16
        $region56: #{tpu_custom_call.1} parent=11 // pred_fallthru
          _
        // Predicated region
        $region57: #{tpu_custom_call.1} parent=11 // pred_check
          %p548 = pneg %p298
        $region58: #{tpu_custom_call.1} parent=11 // pred_check_branch
          %550 = sbr.rel (%p548) target = $region60
        $region59: #{tpu_custom_call.1} parent=11 // pred_region
          %s552 = ssub.s32 32768, 32768
          %553 = vsyncadd [#allocation16], %s552
          %s554 = sshll.u32 [#allocation15], 4
          %s555 = int_to_ptr.vmem [resolvable:$true] %s554
          %560 = dma.hbm_to_vmem [thread:$0]  %s11, 32768, %s555, [#allocation16], 64, 64, 4
        $region60: #{tpu_custom_call.1} parent=11 // pred_fallthru
          _
        // Predicated region
        $region61: #{tpu_custom_call.1} parent=11 // pred_check
          %p561 = pneg %p319
        $region62: #{tpu_custom_call.1} parent=11 // pred_check_branch
          %563 = sbr.rel (%p561) target = $region64
        $region63: #{tpu_custom_call.1} parent=11 // pred_region
          _
        $region64: #{tpu_custom_call.1} parent=11 // pred_fallthru
          _
        // Predicated region
        $region65: #{tpu_custom_call.1} parent=11 // pred_check
          %p564 = pneg %p340
        $region66: #{tpu_custom_call.1} parent=11 // pred_check_branch
          %566 = sbr.rel (%p564) target = $region68
        $region67: #{tpu_custom_call.1} parent=11 // pred_region
          _
        $region68: #{tpu_custom_call.1} parent=11 // pred_fallthru
          _
        // Predicated region
        $region69: #{tpu_custom_call.1} parent=11 // pred_check
          %p567 = pneg %p361
        $region70: #{tpu_custom_call.1} parent=11 // pred_check_branch
          %569 = sbr.rel (%p567) target = $region72
        $region71: #{tpu_custom_call.1} parent=11 // pred_region
          _
        $region72: #{tpu_custom_call.1} parent=11 // pred_fallthru
          _
        // Predicated region
        $region73: #{tpu_custom_call.1} parent=11 // pred_check
          %p570 = pneg %p382
        $region74: #{tpu_custom_call.1} parent=11 // pred_check_branch
          %572 = sbr.rel (%p570) target = $region76
        $region75: #{tpu_custom_call.1} parent=11 // pred_region
          %s574 = ssub.s32 1024, 1024
          %575 = vsyncadd [#allocation16], %s574
          %s576 = sshll.u32 [#allocation17], 4
          %s577 = int_to_ptr.vmem [resolvable:$true] %s576
          %582 = dma.hbm_to_vmem [thread:$0]  %s15, 1024, %s577, [#allocation16], 64, 64, 4
        $region76: #{tpu_custom_call.1} parent=11 // pred_fallthru
          _
        // Predicated region
        $region77: #{tpu_custom_call.1} parent=11 // pred_check
          %p583 = pneg %p403
        $region78: #{tpu_custom_call.1} parent=11 // pred_check_branch
          %585 = sbr.rel (%p583) target = $region80
        $region79: #{tpu_custom_call.1} parent=11 // pred_region
          _
        $region80: #{tpu_custom_call.1} parent=11 // pred_fallthru
          _
      $region12: #{tpu_custom_call.1} parent=5 // pred_fallthru
        _
      %p586 = scmp.lt.s32.totalorder %s29, 2
      // Predicated region
      $region81: #{tpu_custom_call.1} parent=5 // pred_check
        %p587 = pneg %p586
      $region82: #{tpu_custom_call.1} parent=5 // pred_check_branch
        %589 = sbr.rel (%p587) target = $region84
      $region83: #{tpu_custom_call.1} parent=5 // pred_region
        _
      $region84: #{tpu_custom_call.1} parent=5 // pred_fallthru
        _
      %p590 = scmp.le.s32.totalorder 1, %s29
      %p591 = scmp.lt.s32.totalorder %s29, 3
      %p592 = pnand %p590, %p591
      %p593 = pneg %p592
      // Predicated region
      $region85: #{tpu_custom_call.1} parent=5 // pred_check
        _
      $region86: #{tpu_custom_call.1} parent=5 // pred_check_branch
        %595 = sbr.rel (%p592) target = $region88
      $region87: #{tpu_custom_call.1} parent=5 // pred_region
        %s596 = ssub.s32 %s29, 1
        // Predicated region
        $region89: #{tpu_custom_call.1} parent=87 // pred_check
          %p597 = pneg %p67
        $region90: #{tpu_custom_call.1} parent=87 // pred_check_branch
          %599 = sbr.rel (%p597) target = $region92
        $region91: #{tpu_custom_call.1} parent=87 // pred_region
          %600 = dma.done [#allocation4], 256
        $region92: #{tpu_custom_call.1} parent=87 // pred_fallthru
          _
        // Predicated region
        $region93: #{tpu_custom_call.1} parent=87 // pred_check
          %p601 = pneg %p88
        $region94: #{tpu_custom_call.1} parent=87 // pred_check_branch
          %603 = sbr.rel (%p601) target = $region96
        $region95: #{tpu_custom_call.1} parent=87 // pred_region
          %604 = dma.done [#allocation7], 1024
        $region96: #{tpu_custom_call.1} parent=87 // pred_fallthru
          _
        // Predicated region
        $region97: #{tpu_custom_call.1} parent=87 // pred_check
          %p605 = pneg %p109
        $region98: #{tpu_custom_call.1} parent=87 // pred_check_branch
          %607 = sbr.rel (%p605) target = $region100
        $region99: #{tpu_custom_call.1} parent=87 // pred_region
          %608 = dma.done [#allocation7], 16
        $region100: #{tpu_custom_call.1} parent=87 // pred_fallthru
          _
        // Predicated region
        $region101: #{tpu_custom_call.1} parent=87 // pred_check
          %p609 = pneg %p130
        $region102: #{tpu_custom_call.1} parent=87 // pred_check_branch
          %611 = sbr.rel (%p609) target = $region104
        $region103: #{tpu_custom_call.1} parent=87 // pred_region
          %612 = dma.done [#allocation10], 6144
        $region104: #{tpu_custom_call.1} parent=87 // pred_fallthru
          _
        // Predicated region
        $region105: #{tpu_custom_call.1} parent=87 // pred_check
          %p613 = pneg %p172
        $region106: #{tpu_custom_call.1} parent=87 // pred_check_branch
          %615 = sbr.rel (%p613) target = $region108
        $region107: #{tpu_custom_call.1} parent=87 // pred_region
          %616 = dma.done [#allocation10], 2048
        $region108: #{tpu_custom_call.1} parent=87 // pred_fallthru
          _
        // Predicated region
        $region109: #{tpu_custom_call.1} parent=87 // pred_check
          %p617 = pneg %p256
        $region110: #{tpu_custom_call.1} parent=87 // pred_check_branch
          %619 = sbr.rel (%p617) target = $region112
        $region111: #{tpu_custom_call.1} parent=87 // pred_region
          %620 = dma.done [#allocation13], 32768
        $region112: #{tpu_custom_call.1} parent=87 // pred_fallthru
          _
        // Predicated region
        $region113: #{tpu_custom_call.1} parent=87 // pred_check
          %p621 = pneg %p277
        $region114: #{tpu_custom_call.1} parent=87 // pred_check_branch
          %623 = sbr.rel (%p621) target = $region116
        $region115: #{tpu_custom_call.1} parent=87 // pred_region
          %624 = dma.done [#allocation13], 512
        $region116: #{tpu_custom_call.1} parent=87 // pred_fallthru
          _
        // Predicated region
        $region117: #{tpu_custom_call.1} parent=87 // pred_check
          %p625 = pneg %p298
        $region118: #{tpu_custom_call.1} parent=87 // pred_check_branch
          %627 = sbr.rel (%p625) target = $region120
        $region119: #{tpu_custom_call.1} parent=87 // pred_region
          %628 = dma.done [#allocation16], 32768
        $region120: #{tpu_custom_call.1} parent=87 // pred_fallthru
          _
        // Predicated region
        $region121: #{tpu_custom_call.1} parent=87 // pred_check
          %p629 = pneg %p382
        $region122: #{tpu_custom_call.1} parent=87 // pred_check_branch
          %631 = sbr.rel (%p629) target = $region124
        $region123: #{tpu_custom_call.1} parent=87 // pred_region
          %632 = dma.done [#allocation16], 1024
        $region124: #{tpu_custom_call.1} parent=87 // pred_fallthru
          _
        %p633 = pneg %p67
        %p634 = pneg %p64
        %p635 = pneg %p88
        %p636 = pneg %p85
        %p637 = pneg %p109
        %p638 = pneg %p106
        %p639 = pneg %p130
        %p640 = pneg %p127
        %p641 = pneg %p151
        %p642 = pneg %p148
        %p643 = pneg %p172
        %p644 = pneg %p169
        %p645 = pneg %p193
        %p646 = pneg %p190
        %p647 = pneg %p214
        %p648 = pneg %p211
        %p649 = pneg %p235
        %p650 = pneg %p232
        %p651 = pneg %p256
        %p652 = pneg %p253
        %p653 = pneg %p277
        %p654 = pneg %p274
        %p655 = pneg %p298
        %p656 = pneg %p295
        %p657 = pneg %p319
        %p658 = pneg %p316
        %p659 = pneg %p340
        %p660 = pneg %p337
        %p661 = pneg %p361
        %p662 = pneg %p358
        %p663 = pneg %p382
        %p664 = pneg %p379
        %p665 = pneg %p403
        %p666 = pneg %p400
        %p667 = pneg %p429
        %p668 = pneg %p426
        %s669 = smul.u32 2, %s38
        %p671 = scmp.eq.s32.totalorder %s39, 0
        // Predicated region
        $region125: #{tpu_custom_call.1} parent=87 // pred_check
          %p672 = pneg %p671
        $region126: #{tpu_custom_call.1} parent=87 // pred_check_branch
          %674 = sbr.rel (%p672) target = $region128
        $region127: #{tpu_custom_call.1} parent=87 // pred_region
          %v675 = vld [vmem:[#allocation3] sm:$0xff]
          %v676 = vld [vmem:[#allocation3 + $0x8] sm:$0xff]
          %v677 = vpack.c.bf16 %v676, %v675
          %v678 = vld [vmem:[#allocation6] sm:$0xf]
          %v679 = vld [vmem:[#allocation6 + $0x4] sm:$0xf]
          %v680 = vld [vmem:[#allocation6 + $0x8] sm:$0xf]
          %v681 = vld [vmem:[#allocation6 + $0xc] sm:$0xf]
          %v682 = vld [vmem:[#allocation6 + $0x10] sm:$0xf]
          %v683 = vld [vmem:[#allocation6 + $0x14] sm:$0xf]
          %v684 = vld [vmem:[#allocation6 + $0x18] sm:$0xf]
          %v685 = vld [vmem:[#allocation6 + $0x1c] sm:$0xf]
          %v686 = vld [vmem:[#allocation6 + $0x20] sm:$0xf]
          %v687 = vld [vmem:[#allocation6 + $0x24] sm:$0xf]
          %v688 = vld [vmem:[#allocation6 + $0x28] sm:$0xf]
          %v689 = vld [vmem:[#allocation6 + $0x2c] sm:$0xf]
          %v690 = vld [vmem:[#allocation6 + $0x30] sm:$0xf]
          %v691 = vld [vmem:[#allocation6 + $0x34] sm:$0xf]
          %v692 = vld [vmem:[#allocation6 + $0x38] sm:$0xf]
          %v693 = vld [vmem:[#allocation6 + $0x3c] sm:$0xf]
          %v694 = vld [vmem:[#allocation8] sm:$0x1]
          %v696 = vlaneseq
          %v697 = vshrl.u32 %v696, 7
          %v698 = vsub.s32 0, %v697
          %v699 = vrot.slane %v694, %v698
          %v717 = vunpack.c.l.b16 %v678
          %v718 = vunpack.c.l.b16 %v679
          %v719 = vunpack.c.l.b16 %v680
          %v720 = vunpack.c.l.b16 %v681
          %v721 = vunpack.c.l.b16 %v682
          %v722 = vunpack.c.l.b16 %v683
          %v723 = vunpack.c.l.b16 %v684
          %v724 = vunpack.c.l.b16 %v685
          %v725 = vunpack.c.l.b16 %v686
          %v726 = vunpack.c.l.b16 %v687
          %v727 = vunpack.c.l.b16 %v688
          %v728 = vunpack.c.l.b16 %v689
          %v729 = vunpack.c.l.b16 %v690
          %v730 = vunpack.c.l.b16 %v691
          %v731 = vunpack.c.l.b16 %v692
          %v732 = vunpack.c.l.b16 %v693
          %v733 = vpack.c.b16 %v718, %v717
          %v734 = vpack.c.b16 %v720, %v719
          %v735 = vpack.c.b16 %v722, %v721
          %v736 = vpack.c.b16 %v724, %v723
          %v737 = vpack.c.b16 %v726, %v725
          %v738 = vpack.c.b16 %v728, %v727
          %v739 = vpack.c.b16 %v730, %v729
          %v740 = vpack.c.b16 %v732, %v731
          %749 = vmatprep.subr.bf16.mxu0 0
          %750 = vmatpush1.bf16.msra.mxu0 %v740
          %751 = vmatprep.subr.bf16.mxu0 0
          %752 = vmatpush1.bf16.msra.mxu0 %v739
          %753 = vmatprep.subr.bf16.mxu0 0
          %754 = vmatpush1.bf16.msra.mxu0 %v738
          %755 = vmatprep.subr.bf16.mxu0 0
          %756 = vmatpush1.bf16.msra.mxu0 %v737
          %757 = vmatprep.subr.bf16.mxu0 0
          %758 = vmatpush1.bf16.msra.mxu0 %v736
          %759 = vmatprep.subr.bf16.mxu0 0
          %760 = vmatpush1.bf16.msra.mxu0 %v735
          %761 = vmatprep.subr.bf16.mxu0 0
          %762 = vmatpush1.bf16.msra.mxu0 %v734
          %763 = vmatprep.subr.bf16.mxu0 0
          %764 = vmatpush1.bf16.msra.mxu0 %v733
          %765 = vmatprep.subr.bf16.mxu0 0
          %766 = vmatpush2.bf16.msra.mxu0 0
          %767 = vmatprep.subr.bf16.mxu0 0
          %768 = vmatpush2.bf16.msra.mxu0 0
          %769 = vmatprep.subr.bf16.mxu0 0
          %770 = vmatpush2.bf16.msra.mxu0 0
          %771 = vmatprep.subr.bf16.mxu0 0
          %772 = vmatpush2.bf16.msra.mxu0 0
          %773 = vmatprep.subr.bf16.mxu0 0
          %774 = vmatpush2.bf16.msra.mxu0 0
          %775 = vmatprep.subr.bf16.mxu0 0
          %776 = vmatpush2.bf16.msra.mxu0 0
          %777 = vmatprep.subr.bf16.mxu0 0
          %778 = vmatpush2.bf16.msra.mxu0 0
          %779 = vmatprep.subr.bf16.mxu0 0
          %780 = vmatpush2.bf16.msra.mxu0 0
          %781 = vmatprep.mubr.bf16.mxu0 0
          %782 = vmatmul.mubr.bf16.gmra.mxu0 %v677
          %v783 = vpop.f32.mrf.mxu0
          %v784 = vadd.f32 %v699, %v783
          %v785 = vpop.f32.mrf.mxu0
          %v786 = vpop.f32.mrf.mxu0
          %v787 = vadd.f32 %v699, %v786
          %v788 = vpop.f32.mrf.mxu0
          %789 = vdwg.mxu0
          %790 = vst [vmem:[#allocation2] sm:$0xff] %v784
          %791 = vst [vmem:[#allocation2 + $0x8] sm:$0xff] %v787
        $region128: #{tpu_custom_call.1} parent=87 // pred_fallthru
          _
        %v792 = vld [vmem:[#allocation2] sm:$0xff]
        %v793 = vld [vmem:[#allocation2 + $0x8] sm:$0xff]
        %v794 = vpack.c.bf16 %v793, %v792
        %s795 = smul.u32 %s39, 48
        %s796 = smul.addr %s795, 4
        %s797 = scalar_lea.vmem [#allocation9], %s796
        %v798 = vld [vmem:[%s797] sm:$0xff]
        %v799 = vld [vmem:[%s797 + $0x8] sm:$0xf]
        %v800 = vld [vmem:[%s797 + $0xc] sm:$0xff]
        %v801 = vld [vmem:[%s797 + $0x14] sm:$0xf]
        %v802 = vld [vmem:[%s797 + $0x18] sm:$0xff]
        %v803 = vld [vmem:[%s797 + $0x20] sm:$0xf]
        %v804 = vld [vmem:[%s797 + $0x24] sm:$0xff]
        %v805 = vld [vmem:[%s797 + $0x2c] sm:$0xf]
        %v806 = vld [vmem:[%s797 + $0x30] sm:$0xff]
        %v807 = vld [vmem:[%s797 + $0x38] sm:$0xf]
        %v808 = vld [vmem:[%s797 + $0x3c] sm:$0xff]
        %v809 = vld [vmem:[%s797 + $0x44] sm:$0xf]
        %v810 = vld [vmem:[%s797 + $0x48] sm:$0xff]
        %v811 = vld [vmem:[%s797 + $0x50] sm:$0xf]
        %v812 = vld [vmem:[%s797 + $0x54] sm:$0xff]
        %v813 = vld [vmem:[%s797 + $0x5c] sm:$0xf]
        %v814 = vld [vmem:[%s797 + $0x60] sm:$0xff]
        %v815 = vld [vmem:[%s797 + $0x68] sm:$0xf]
        %v816 = vld [vmem:[%s797 + $0x6c] sm:$0xff]
        %v817 = vld [vmem:[%s797 + $0x74] sm:$0xf]
        %v818 = vld [vmem:[%s797 + $0x78] sm:$0xff]
        %v819 = vld [vmem:[%s797 + $0x80] sm:$0xf]
        %v820 = vld [vmem:[%s797 + $0x84] sm:$0xff]
        %v821 = vld [vmem:[%s797 + $0x8c] sm:$0xf]
        %v822 = vld [vmem:[%s797 + $0x90] sm:$0xff]
        %v823 = vld [vmem:[%s797 + $0x98] sm:$0xf]
        %v824 = vld [vmem:[%s797 + $0x9c] sm:$0xff]
        %v825 = vld [vmem:[%s797 + $0xa4] sm:$0xf]
        %v826 = vld [vmem:[%s797 + $0xa8] sm:$0xff]
        %v827 = vld [vmem:[%s797 + $0xb0] sm:$0xf]
        %v828 = vld [vmem:[%s797 + $0xb4] sm:$0xff]
        %v829 = vld [vmem:[%s797 + $0xbc] sm:$0xf]
        %s830 = smul.u32 %s39, 3
        %s831 = scalar_lea.vmem %s4, %s830
        %v832 = vld [vmem:[%s831] sm:$0x7]
        %v834 = vlaneseq
        %v835 = vshrl.u32 %v834, 7
        %v836 = vsub.s32 0, %v835
        %v837 = vrot.slane %v832, %v836
        %v838 = vlaneseq
        %v839 = vshrl.u32 %v838, 7
        %v840 = vsub.s32 1, %v839
        %v841 = vrot.slane %v832, %v840
        %v842 = vlaneseq
        %v843 = vshrl.u32 %v842, 7
        %v844 = vsub.s32 2, %v843
        %v845 = vrot.slane %v832, %v844
        %v881 = vunpack.c.l.b16 %v798
        %v882 = vunpack.c.h.b16 %v798
        %v883 = vunpack.c.l.b16 %v799
        %v884 = vunpack.c.l.b16 %v800
        %v885 = vunpack.c.h.b16 %v800
        %v886 = vunpack.c.l.b16 %v801
        %v887 = vunpack.c.l.b16 %v802
        %v888 = vunpack.c.h.b16 %v802
        %v889 = vunpack.c.l.b16 %v803
        %v890 = vunpack.c.l.b16 %v804
        %v891 = vunpack.c.h.b16 %v804
        %v892 = vunpack.c.l.b16 %v805
        %v893 = vunpack.c.l.b16 %v806
        %v894 = vunpack.c.h.b16 %v806
        %v895 = vunpack.c.l.b16 %v807
        %v896 = vunpack.c.l.b16 %v808
        %v897 = vunpack.c.h.b16 %v808
        %v898 = vunpack.c.l.b16 %v809
        %v899 = vunpack.c.l.b16 %v810
        %v900 = vunpack.c.h.b16 %v810
        %v901 = vunpack.c.l.b16 %v811
        %v902 = vunpack.c.l.b16 %v812
        %v903 = vunpack.c.h.b16 %v812
        %v904 = vunpack.c.l.b16 %v813
        %v905 = vunpack.c.l.b16 %v814
        %v906 = vunpack.c.h.b16 %v814
        %v907 = vunpack.c.l.b16 %v815
        %v908 = vunpack.c.l.b16 %v816
        %v909 = vunpack.c.h.b16 %v816
        %v910 = vunpack.c.l.b16 %v817
        %v911 = vunpack.c.l.b16 %v818
        %v912 = vunpack.c.h.b16 %v818
        %v913 = vunpack.c.l.b16 %v819
        %v914 = vunpack.c.l.b16 %v820
        %v915 = vunpack.c.h.b16 %v820
        %v916 = vunpack.c.l.b16 %v821
        %v917 = vunpack.c.l.b16 %v822
        %v918 = vunpack.c.h.b16 %v822
        %v919 = vunpack.c.l.b16 %v823
        %v920 = vunpack.c.l.b16 %v824
        %v921 = vunpack.c.h.b16 %v824
        %v922 = vunpack.c.l.b16 %v825
        %v923 = vunpack.c.l.b16 %v826
        %v924 = vunpack.c.h.b16 %v826
        %v925 = vunpack.c.l.b16 %v827
        %v926 = vunpack.c.l.b16 %v828
        %v927 = vunpack.c.h.b16 %v828
        %v928 = vunpack.c.l.b16 %v829
        %v929 = vpack.c.b16 %v884, %v881
        %v930 = vpack.c.b16 %v885, %v882
        %v931 = vpack.c.b16 %v886, %v883
        %v932 = vpack.c.b16 %v890, %v887
        %v933 = vpack.c.b16 %v891, %v888
        %v934 = vpack.c.b16 %v892, %v889
        %v935 = vpack.c.b16 %v896, %v893
        %v936 = vpack.c.b16 %v897, %v894
        %v937 = vpack.c.b16 %v898, %v895
        %v938 = vpack.c.b16 %v902, %v899
        %v939 = vpack.c.b16 %v903, %v900
        %v940 = vpack.c.b16 %v904, %v901
        %v941 = vpack.c.b16 %v908, %v905
        %v942 = vpack.c.b16 %v909, %v906
        %v943 = vpack.c.b16 %v910, %v907
        %v944 = vpack.c.b16 %v914, %v911
        %v945 = vpack.c.b16 %v915, %v912
        %v946 = vpack.c.b16 %v916, %v913
        %v947 = vpack.c.b16 %v920, %v917
        %v948 = vpack.c.b16 %v921, %v918
        %v949 = vpack.c.b16 %v922, %v919
        %v950 = vpack.c.b16 %v926, %v923
        %v951 = vpack.c.b16 %v927, %v924
        %v952 = vpack.c.b16 %v928, %v925
        %977 = vmatprep.subr.bf16.mxu0 %v951
        %978 = vmatpush1.bf16.msra.mxu0 %v950
        %979 = vmatprep.subr.bf16.mxu0 %v948
        %980 = vmatpush1.bf16.msra.mxu0 %v947
        %981 = vmatprep.subr.bf16.mxu0 %v945
        %982 = vmatpush1.bf16.msra.mxu0 %v944
        %983 = vmatprep.subr.bf16.mxu0 %v942
        %984 = vmatpush1.bf16.msra.mxu0 %v941
        %985 = vmatprep.subr.bf16.mxu0 %v939
        %986 = vmatpush1.bf16.msra.mxu0 %v938
        %987 = vmatprep.subr.bf16.mxu0 %v936
        %988 = vmatpush1.bf16.msra.mxu0 %v935
        %989 = vmatprep.subr.bf16.mxu0 %v933
        %990 = vmatpush1.bf16.msra.mxu0 %v932
        %991 = vmatprep.subr.bf16.mxu0 %v930
        %992 = vmatpush1.bf16.msra.mxu0 %v929
        %993 = vmatprep.subr.bf16.mxu0 0
        %994 = vmatpush2.bf16.msra.mxu0 0
        %995 = vmatprep.subr.bf16.mxu0 0
        %996 = vmatpush2.bf16.msra.mxu0 0
        %997 = vmatprep.subr.bf16.mxu0 0
        %998 = vmatpush2.bf16.msra.mxu0 0
        %999 = vmatprep.subr.bf16.mxu0 0
        %1000 = vmatpush2.bf16.msra.mxu0 0
        %1001 = vmatprep.subr.bf16.mxu0 0
        %1002 = vmatpush2.bf16.msra.mxu0 0
        %1003 = vmatprep.subr.bf16.mxu0 0
        %1004 = vmatpush2.bf16.msra.mxu0 0
        %1005 = vmatprep.subr.bf16.mxu0 0
        %1006 = vmatpush2.bf16.msra.mxu0 0
        %1007 = vmatprep.subr.bf16.mxu0 0
        %1008 = vmatpush2.bf16.msra.mxu0 0
        %1009 = vmatprep.mubr.bf16.mxu0 0
        %1010 = vmatmul.mubr.bf16.gmra.mxu0 %v794
        %v1011 = vpop.f32.mrf.mxu0
        %v1012 = vadd.f32 %v837, %v1011
        %v1013 = vpop.f32.mrf.mxu0
        %v1014 = vadd.f32 %v841, %v1013
        %v1015 = vpop.f32.mrf.mxu0
        %v1016 = vadd.f32 %v837, %v1015
        %v1017 = vpop.f32.mrf.mxu0
        %v1018 = vadd.f32 %v841, %v1017
        %1019 = vdwg.mxu0
        %1020 = vmatprep.subr.bf16.mxu0 0
        %1021 = vmatpush1.bf16.msra.mxu0 %v952
        %1022 = vmatprep.subr.bf16.mxu0 0
        %1023 = vmatpush1.bf16.msra.mxu0 %v949
        %1024 = vmatprep.subr.bf16.mxu0 0
        %1025 = vmatpush1.bf16.msra.mxu0 %v946
        %1026 = vmatprep.subr.bf16.mxu0 0
        %1027 = vmatpush1.bf16.msra.mxu0 %v943
        %1028 = vmatprep.subr.bf16.mxu0 0
        %1029 = vmatpush1.bf16.msra.mxu0 %v940
        %1030 = vmatprep.subr.bf16.mxu0 0
        %1031 = vmatpush1.bf16.msra.mxu0 %v937
        %1032 = vmatprep.subr.bf16.mxu0 0
        %1033 = vmatpush1.bf16.msra.mxu0 %v934
        %1034 = vmatprep.subr.bf16.mxu0 0
        %1035 = vmatpush1.bf16.msra.mxu0 %v931
        %1036 = vmatprep.subr.bf16.mxu0 0
        %1037 = vmatpush2.bf16.msra.mxu0 0
        %1038 = vmatprep.subr.bf16.mxu0 0
        %1039 = vmatpush2.bf16.msra.mxu0 0
        %1040 = vmatprep.subr.bf16.mxu0 0
        %1041 = vmatpush2.bf16.msra.mxu0 0
        %1042 = vmatprep.subr.bf16.mxu0 0
        %1043 = vmatpush2.bf16.msra.mxu0 0
        %1044 = vmatprep.subr.bf16.mxu0 0
        %1045 = vmatpush2.bf16.msra.mxu0 0
        %1046 = vmatprep.subr.bf16.mxu0 0
        %1047 = vmatpush2.bf16.msra.mxu0 0
        %1048 = vmatprep.subr.bf16.mxu0 0
        %1049 = vmatpush2.bf16.msra.mxu0 0
        %1050 = vmatprep.subr.bf16.mxu0 0
        %1051 = vmatpush2.bf16.msra.mxu0 0
        %1052 = vmatprep.mubr.bf16.mxu0 0
        %1053 = vmatmul.mubr.bf16.gmra.mxu0 %v794
        %v1054 = vpop.f32.mrf.mxu0
        %v1055 = vadd.f32 %v845, %v1054
        %v1056 = vpop.f32.mrf.mxu0
        %v1057 = vpop.f32.mrf.mxu0
        %v1058 = vadd.f32 %v845, %v1057
        %v1059 = vpop.f32.mrf.mxu0
        %1060 = vdwg.mxu0
        %v1061 = vpack.c.bf16 %v1012, %v1012
        %v1062 = vpack.c.bf16 %v1014, %v1014
        %v1063 = vpack.c.bf16 %v1055, %v1055
        %v1064 = vpack.c.bf16 %v1016, %v1016
        %v1065 = vpack.c.bf16 %v1018, %v1018
        %v1066 = vpack.c.bf16 %v1058, %v1058
        %vm1067 = vcmask 261120
        %v1069 = vsel %vm1067, %v1061, 0
        %v1072 = vsel %vm1067, %v1062, 0
        %1074 = vmatprep.subr.bf16.mxu0 0
        %1075 = vmatpush1.bf16.xpose.msra.mxu0 0
        %1076 = vmatprep.subr.bf16.mxu0 0
        %1077 = vmatpush1.bf16.xpose.msra.mxu0 0
        %1078 = vmatprep.subr.bf16.mxu0 0
        %1079 = vmatpush1.bf16.xpose.msra.mxu0 0
        %1080 = vmatprep.subr.bf16.mxu0 0
        %1081 = vmatpush1.bf16.xpose.msra.mxu0 0
        %1082 = vmatprep.subr.bf16.mxu0 0
        %1083 = vmatpush1.bf16.xpose.msra.mxu0 0
        %1084 = vmatprep.subr.bf16.mxu0 0
        %1085 = vmatpush1.bf16.xpose.msra.mxu0 0
        %1086 = vmatprep.subr.bf16.mxu0 0
        %1087 = vmatpush1.bf16.xpose.msra.mxu0 0
        %1088 = vmatprep.subr.bf16.mxu0 0
        %1089 = vmatpush1.bf16.xpose.msra.mxu0 %v1072
        %1090 = vmatprep.subr.bf16.mxu0 0
        %1091 = vmatpush2.bf16.xpose.msra.mxu0 0
        %1092 = vmatprep.subr.bf16.mxu0 0
        %1093 = vmatpush2.bf16.xpose.msra.mxu0 0
        %1094 = vmatprep.subr.bf16.mxu0 0
        %1095 = vmatpush2.bf16.xpose.msra.mxu0 0
        %1096 = vmatprep.subr.bf16.mxu0 0
        %1097 = vmatpush2.bf16.xpose.msra.mxu0 0
        %1098 = vmatprep.subr.bf16.mxu0 0
        %1099 = vmatpush2.bf16.xpose.msra.mxu0 0
        %1100 = vmatprep.subr.bf16.mxu0 0
        %1101 = vmatpush2.bf16.xpose.msra.mxu0 0
        %1102 = vmatprep.subr.bf16.mxu0 0
        %1103 = vmatpush2.bf16.xpose.msra.mxu0 0
        %1104 = vmatprep.subr.bf16.mxu0 0
        %1105 = vmatpush2.bf16.xpose.msra.mxu0 0
        %1106 = vmatprep.mubr.bf16.mxu0 0
        %1107 = vmatmul.mubr.bf16.gmra.mxu0 %v1069
        %v1108 = vpop.f32.mrf.mxu0
        %v1109 = vadd.f32 0.0, %v1108
        %v1110 = vpop.f32.mrf.mxu0
        %v1111 = vpop.f32.mrf.mxu0
        %v1112 = vpop.f32.mrf.mxu0
        %1113 = vdwg.mxu0
        %v1115 = vsel %vm1067, %v1064, 0
        %v1118 = vsel %vm1067, %v1065, 0
        %1120 = vmatprep.subr.bf16.mxu0 0
        %1121 = vmatpush1.bf16.xpose.msra.mxu0 0
        %1122 = vmatprep.subr.bf16.mxu0 0
        %1123 = vmatpush1.bf16.xpose.msra.mxu0 0
        %1124 = vmatprep.subr.bf16.mxu0 0
        %1125 = vmatpush1.bf16.xpose.msra.mxu0 0
        %1126 = vmatprep.subr.bf16.mxu0 0
        %1127 = vmatpush1.bf16.xpose.msra.mxu0 0
        %1128 = vmatprep.subr.bf16.mxu0 0
        %1129 = vmatpush1.bf16.xpose.msra.mxu0 0
        %1130 = vmatprep.subr.bf16.mxu0 0
        %1131 = vmatpush1.bf16.xpose.msra.mxu0 0
        %1132 = vmatprep.subr.bf16.mxu0 0
        %1133 = vmatpush1.bf16.xpose.msra.mxu0 0
        %1134 = vmatprep.subr.bf16.mxu0 0
        %1135 = vmatpush1.bf16.xpose.msra.mxu0 %v1118
        %1136 = vmatprep.subr.bf16.mxu0 0
        %1137 = vmatpush2.bf16.xpose.msra.mxu0 0
        %1138 = vmatprep.subr.bf16.mxu0 0
        %1139 = vmatpush2.bf16.xpose.msra.mxu0 0
        %1140 = vmatprep.subr.bf16.mxu0 0
        %1141 = vmatpush2.bf16.xpose.msra.mxu0 0
        %1142 = vmatprep.subr.bf16.mxu0 0
        %1143 = vmatpush2.bf16.xpose.msra.mxu0 0
        %1144 = vmatprep.subr.bf16.mxu0 0
        %1145 = vmatpush2.bf16.xpose.msra.mxu0 0
        %1146 = vmatprep.subr.bf16.mxu0 0
        %1147 = vmatpush2.bf16.xpose.msra.mxu0 0
        %1148 = vmatprep.subr.bf16.mxu0 0
        %1149 = vmatpush2.bf16.xpose.msra.mxu0 0
        %1150 = vmatprep.subr.bf16.mxu0 0
        %1151 = vmatpush2.bf16.xpose.msra.mxu0 0
        %1152 = vmatprep.mubr.bf16.mxu0 0
        %1153 = vmatmul.mubr.bf16.gmra.mxu0 %v1115
        %v1154 = vpop.f32.mrf.mxu0
        %v1155 = vadd.f32 0.0, %v1154
        %v1156 = vpop.f32.mrf.mxu0
        %v1157 = vpop.f32.mrf.mxu0
        %v1158 = vpop.f32.mrf.mxu0
        %1159 = vdwg.mxu0
        %vm1160 = vcmask 64512
        %v1161 = vsel %vm1160, %v1109, -inf
        %1162 = vmax.xlane.f32.xlu0 %v1161
        %v1163 = vpop.xlane.xlu0 %1162
        %v1164 = vsel %vm1160, %v1155, -inf
        %1165 = vmax.xlane.f32.xlu0 %v1164
        %v1166 = vpop.xlane.xlu0 %1165
        %v1167 = vsub.f32 %v1109, %v1163
        %v1168 = vsub.f32 %v1155, %v1166
        %v1169 = vmul.f32 %v1167, 1.442695
        %v1170 = vpow.pop %v1169
        %v1171 = vmul.f32 %v1168, 1.442695
        %v1172 = vpow.pop %v1171
        %v1173 = vsel %vm1160, %v1170, 0.0
        %1174 = vadd.xlane.f32.xlu0 %v1173
        %v1175 = vpop.xlane.xlu0 %1174
        %v1176 = vsel %vm1160, %v1172, 0.0
        %1177 = vadd.xlane.f32.xlu0 %v1176
        %v1178 = vpop.xlane.xlu0 %1177
        %v1179 = vrcp.pop %v1175
        %v1180 = vrcp.pop %v1178
        %v1181 = vmul.f32 %v1170, %v1179
        %v1182 = vmul.f32 %v1172, %v1180
        %v1183 = vpack.c.bf16 %v1181, %v1181
        %v1184 = vpack.c.bf16 %v1182, %v1182
        %v1186 = vsel %vm1160, %v1183, 0
        %vm1188 = vcmask 1043456
        %v1190 = vsel %vm1188, %v1063, 0
        %1192 = vmatprep.subr.bf16.mxu0 0
        %1193 = vmatpush1.bf16.msra.mxu0 0
        %1194 = vmatprep.subr.bf16.mxu0 0
        %1195 = vmatpush1.bf16.msra.mxu0 0
        %1196 = vmatprep.subr.bf16.mxu0 0
        %1197 = vmatpush1.bf16.msra.mxu0 0
        %1198 = vmatprep.subr.bf16.mxu0 0
        %1199 = vmatpush1.bf16.msra.mxu0 0
        %1200 = vmatprep.subr.bf16.mxu0 0
        %1201 = vmatpush1.bf16.msra.mxu0 0
        %1202 = vmatprep.subr.bf16.mxu0 0
        %1203 = vmatpush1.bf16.msra.mxu0 0
        %1204 = vmatprep.subr.bf16.mxu0 0
        %1205 = vmatpush1.bf16.msra.mxu0 0
        %1206 = vmatprep.subr.bf16.mxu0 0
        %1207 = vmatpush1.bf16.msra.mxu0 %v1190
        %1208 = vmatprep.subr.bf16.mxu0 0
        %1209 = vmatpush2.bf16.msra.mxu0 0
        %1210 = vmatprep.subr.bf16.mxu0 0
        %1211 = vmatpush2.bf16.msra.mxu0 0
        %1212 = vmatprep.subr.bf16.mxu0 0
        %1213 = vmatpush2.bf16.msra.mxu0 0
        %1214 = vmatprep.subr.bf16.mxu0 0
        %1215 = vmatpush2.bf16.msra.mxu0 0
        %1216 = vmatprep.subr.bf16.mxu0 0
        %1217 = vmatpush2.bf16.msra.mxu0 0
        %1218 = vmatprep.subr.bf16.mxu0 0
        %1219 = vmatpush2.bf16.msra.mxu0 0
        %1220 = vmatprep.subr.bf16.mxu0 0
        %1221 = vmatpush2.bf16.msra.mxu0 0
        %1222 = vmatprep.subr.bf16.mxu0 0
        %1223 = vmatpush2.bf16.msra.mxu0 0
        %1224 = vmatprep.mubr.bf16.mxu0 0
        %1225 = vmatmul.mubr.bf16.gmra.mxu0 %v1186
        %v1226 = vpop.f32.mrf.mxu0
        %v1227 = vadd.f32 0.0, %v1226
        %v1228 = vpop.f32.mrf.mxu0
        %v1229 = vpop.f32.mrf.mxu0
        %v1230 = vpop.f32.mrf.mxu0
        %1231 = vdwg.mxu0
        %v1233 = vsel %vm1160, %v1184, 0
        %v1236 = vsel %vm1188, %v1066, 0
        %1238 = vmatprep.subr.bf16.mxu0 0
        %1239 = vmatpush1.bf16.msra.mxu0 0
        %1240 = vmatprep.subr.bf16.mxu0 0
        %1241 = vmatpush1.bf16.msra.mxu0 0
        %1242 = vmatprep.subr.bf16.mxu0 0
        %1243 = vmatpush1.bf16.msra.mxu0 0
        %1244 = vmatprep.subr.bf16.mxu0 0
        %1245 = vmatpush1.bf16.msra.mxu0 0
        %1246 = vmatprep.subr.bf16.mxu0 0
        %1247 = vmatpush1.bf16.msra.mxu0 0
        %1248 = vmatprep.subr.bf16.mxu0 0
        %1249 = vmatpush1.bf16.msra.mxu0 0
        %1250 = vmatprep.subr.bf16.mxu0 0
        %1251 = vmatpush1.bf16.msra.mxu0 0
        %1252 = vmatprep.subr.bf16.mxu0 0
        %1253 = vmatpush1.bf16.msra.mxu0 %v1236
        %1254 = vmatprep.subr.bf16.mxu0 0
        %1255 = vmatpush2.bf16.msra.mxu0 0
        %1256 = vmatprep.subr.bf16.mxu0 0
        %1257 = vmatpush2.bf16.msra.mxu0 0
        %1258 = vmatprep.subr.bf16.mxu0 0
        %1259 = vmatpush2.bf16.msra.mxu0 0
        %1260 = vmatprep.subr.bf16.mxu0 0
        %1261 = vmatpush2.bf16.msra.mxu0 0
        %1262 = vmatprep.subr.bf16.mxu0 0
        %1263 = vmatpush2.bf16.msra.mxu0 0
        %1264 = vmatprep.subr.bf16.mxu0 0
        %1265 = vmatpush2.bf16.msra.mxu0 0
        %1266 = vmatprep.subr.bf16.mxu0 0
        %1267 = vmatpush2.bf16.msra.mxu0 0
        %1268 = vmatprep.subr.bf16.mxu0 0
        %1269 = vmatpush2.bf16.msra.mxu0 0
        %1270 = vmatprep.mubr.bf16.mxu0 0
        %1271 = vmatmul.mubr.bf16.gmra.mxu0 %v1233
        %v1272 = vpop.f32.mrf.mxu0
        %v1273 = vadd.f32 0.0, %v1272
        %v1274 = vpop.f32.mrf.mxu0
        %v1275 = vpop.f32.mrf.mxu0
        %v1276 = vpop.f32.mrf.mxu0
        %1277 = vdwg.mxu0
        %1279 = vrot.lane.b32.xlu0 %v1061, 96
        %v1280 = vpop.permute.xlu0 %1279
        %1282 = vrot.lane.b32.xlu0 %v1062, 96
        %v1283 = vpop.permute.xlu0 %1282
        %v1285 = vsel %vm1067, %v1280, 0
        %v1288 = vsel %vm1067, %v1283, 0
        %1290 = vmatprep.subr.bf16.mxu0 0
        %1291 = vmatpush1.bf16.xpose.msra.mxu0 0
        %1292 = vmatprep.subr.bf16.mxu0 0
        %1293 = vmatpush1.bf16.xpose.msra.mxu0 0
        %1294 = vmatprep.subr.bf16.mxu0 0
        %1295 = vmatpush1.bf16.xpose.msra.mxu0 0
        %1296 = vmatprep.subr.bf16.mxu0 0
        %1297 = vmatpush1.bf16.xpose.msra.mxu0 0
        %1298 = vmatprep.subr.bf16.mxu0 0
        %1299 = vmatpush1.bf16.xpose.msra.mxu0 0
        %1300 = vmatprep.subr.bf16.mxu0 0
        %1301 = vmatpush1.bf16.xpose.msra.mxu0 0
        %1302 = vmatprep.subr.bf16.mxu0 0
        %1303 = vmatpush1.bf16.xpose.msra.mxu0 0
        %1304 = vmatprep.subr.bf16.mxu0 0
        %1305 = vmatpush1.bf16.xpose.msra.mxu0 %v1288
        %1306 = vmatprep.subr.bf16.mxu0 0
        %1307 = vmatpush2.bf16.xpose.msra.mxu0 0
        %1308 = vmatprep.subr.bf16.mxu0 0
        %1309 = vmatpush2.bf16.xpose.msra.mxu0 0
        %1310 = vmatprep.subr.bf16.mxu0 0
        %1311 = vmatpush2.bf16.xpose.msra.mxu0 0
        %1312 = vmatprep.subr.bf16.mxu0 0
        %1313 = vmatpush2.bf16.xpose.msra.mxu0 0
        %1314 = vmatprep.subr.bf16.mxu0 0
        %1315 = vmatpush2.bf16.xpose.msra.mxu0 0
        %1316 = vmatprep.subr.bf16.mxu0 0
        %1317 = vmatpush2.bf16.xpose.msra.mxu0 0
        %1318 = vmatprep.subr.bf16.mxu0 0
        %1319 = vmatpush2.bf16.xpose.msra.mxu0 0
        %1320 = vmatprep.subr.bf16.mxu0 0
        %1321 = vmatpush2.bf16.xpose.msra.mxu0 0
        %1322 = vmatprep.mubr.bf16.mxu0 0
        %1323 = vmatmul.mubr.bf16.gmra.mxu0 %v1285
        %v1324 = vpop.f32.mrf.mxu0
        %v1325 = vadd.f32 0.0, %v1324
        %v1326 = vpop.f32.mrf.mxu0
        %v1327 = vpop.f32.mrf.mxu0
        %v1328 = vpop.f32.mrf.mxu0
        %1329 = vdwg.mxu0
        %1331 = vrot.lane.b32.xlu0 %v1064, 96
        %v1332 = vpop.permute.xlu0 %1331
        %1334 = vrot.lane.b32.xlu0 %v1065, 96
        %v1335 = vpop.permute.xlu0 %1334
        %v1337 = vsel %vm1067, %v1332, 0
        %v1340 = vsel %vm1067, %v1335, 0
        %1342 = vmatprep.subr.bf16.mxu0 0
        %1343 = vmatpush1.bf16.xpose.msra.mxu0 0
        %1344 = vmatprep.subr.bf16.mxu0 0
        %1345 = vmatpush1.bf16.xpose.msra.mxu0 0
        %1346 = vmatprep.subr.bf16.mxu0 0
        %1347 = vmatpush1.bf16.xpose.msra.mxu0 0
        %1348 = vmatprep.subr.bf16.mxu0 0
        %1349 = vmatpush1.bf16.xpose.msra.mxu0 0
        %1350 = vmatprep.subr.bf16.mxu0 0
        %1351 = vmatpush1.bf16.xpose.msra.mxu0 0
        %1352 = vmatprep.subr.bf16.mxu0 0
        %1353 = vmatpush1.bf16.xpose.msra.mxu0 0
        %1354 = vmatprep.subr.bf16.mxu0 0
        %1355 = vmatpush1.bf16.xpose.msra.mxu0 0
        %1356 = vmatprep.subr.bf16.mxu0 0
        %1357 = vmatpush1.bf16.xpose.msra.mxu0 %v1340
        %1358 = vmatprep.subr.bf16.mxu0 0
        %1359 = vmatpush2.bf16.xpose.msra.mxu0 0
        %1360 = vmatprep.subr.bf16.mxu0 0
        %1361 = vmatpush2.bf16.xpose.msra.mxu0 0
        %1362 = vmatprep.subr.bf16.mxu0 0
        %1363 = vmatpush2.bf16.xpose.msra.mxu0 0
        %1364 = vmatprep.subr.bf16.mxu0 0
        %1365 = vmatpush2.bf16.xpose.msra.mxu0 0
        %1366 = vmatprep.subr.bf16.mxu0 0
        %1367 = vmatpush2.bf16.xpose.msra.mxu0 0
        %1368 = vmatprep.subr.bf16.mxu0 0
        %1369 = vmatpush2.bf16.xpose.msra.mxu0 0
        %1370 = vmatprep.subr.bf16.mxu0 0
        %1371 = vmatpush2.bf16.xpose.msra.mxu0 0
        %1372 = vmatprep.subr.bf16.mxu0 0
        %1373 = vmatpush2.bf16.xpose.msra.mxu0 0
        %1374 = vmatprep.mubr.bf16.mxu0 0
        %1375 = vmatmul.mubr.bf16.gmra.mxu0 %v1337
        %v1376 = vpop.f32.mrf.mxu0
        %v1377 = vadd.f32 0.0, %v1376
        %v1378 = vpop.f32.mrf.mxu0
        %v1379 = vpop.f32.mrf.mxu0
        %v1380 = vpop.f32.mrf.mxu0
        %1381 = vdwg.mxu0
        %v1382 = vsel %vm1160, %v1325, -inf
        %1383 = vmax.xlane.f32.xlu0 %v1382
        %v1384 = vpop.xlane.xlu0 %1383
        %v1385 = vsel %vm1160, %v1377, -inf
        %1386 = vmax.xlane.f32.xlu0 %v1385
        %v1387 = vpop.xlane.xlu0 %1386
        %v1388 = vsub.f32 %v1325, %v1384
        %v1389 = vsub.f32 %v1377, %v1387
        %v1390 = vmul.f32 %v1388, 1.442695
        %v1391 = vpow.pop %v1390
        %v1392 = vmul.f32 %v1389, 1.442695
        %v1393 = vpow.pop %v1392
        %v1394 = vsel %vm1160, %v1391, 0.0
        %1395 = vadd.xlane.f32.xlu0 %v1394
        %v1396 = vpop.xlane.xlu0 %1395
        %v1397 = vsel %vm1160, %v1393, 0.0
        %1398 = vadd.xlane.f32.xlu0 %v1397
        %v1399 = vpop.xlane.xlu0 %1398
        %v1400 = vrcp.pop %v1396
        %v1401 = vrcp.pop %v1399
        %v1402 = vmul.f32 %v1391, %v1400
        %v1403 = vmul.f32 %v1393, %v1401
        %v1404 = vpack.c.bf16 %v1402, %v1402
        %v1405 = vpack.c.bf16 %v1403, %v1403
        %1407 = vrot.lane.b32.xlu0 %v1063, 96
        %v1408 = vpop.permute.xlu0 %1407
        %v1410 = vsel %vm1160, %v1404, 0
        %v1413 = vsel %vm1188, %v1408, 0
        %1415 = vmatprep.subr.bf16.mxu0 0
        %1416 = vmatpush1.bf16.msra.mxu0 0
        %1417 = vmatprep.subr.bf16.mxu0 0
        %1418 = vmatpush1.bf16.msra.mxu0 0
        %1419 = vmatprep.subr.bf16.mxu0 0
        %1420 = vmatpush1.bf16.msra.mxu0 0
        %1421 = vmatprep.subr.bf16.mxu0 0
        %1422 = vmatpush1.bf16.msra.mxu0 0
        %1423 = vmatprep.subr.bf16.mxu0 0
        %1424 = vmatpush1.bf16.msra.mxu0 0
        %1425 = vmatprep.subr.bf16.mxu0 0
        %1426 = vmatpush1.bf16.msra.mxu0 0
        %1427 = vmatprep.subr.bf16.mxu0 0
        %1428 = vmatpush1.bf16.msra.mxu0 0
        %1429 = vmatprep.subr.bf16.mxu0 0
        %1430 = vmatpush1.bf16.msra.mxu0 %v1413
        %1431 = vmatprep.subr.bf16.mxu0 0
        %1432 = vmatpush2.bf16.msra.mxu0 0
        %1433 = vmatprep.subr.bf16.mxu0 0
        %1434 = vmatpush2.bf16.msra.mxu0 0
        %1435 = vmatprep.subr.bf16.mxu0 0
        %1436 = vmatpush2.bf16.msra.mxu0 0
        %1437 = vmatprep.subr.bf16.mxu0 0
        %1438 = vmatpush2.bf16.msra.mxu0 0
        %1439 = vmatprep.subr.bf16.mxu0 0
        %1440 = vmatpush2.bf16.msra.mxu0 0
        %1441 = vmatprep.subr.bf16.mxu0 0
        %1442 = vmatpush2.bf16.msra.mxu0 0
        %1443 = vmatprep.subr.bf16.mxu0 0
        %1444 = vmatpush2.bf16.msra.mxu0 0
        %1445 = vmatprep.subr.bf16.mxu0 0
        %1446 = vmatpush2.bf16.msra.mxu0 0
        %1447 = vmatprep.mubr.bf16.mxu0 0
        %1448 = vmatmul.mubr.bf16.gmra.mxu0 %v1410
        %v1449 = vpop.f32.mrf.mxu0
        %v1450 = vadd.f32 0.0, %v1449
        %v1451 = vpop.f32.mrf.mxu0
        %v1452 = vpop.f32.mrf.mxu0
        %v1453 = vpop.f32.mrf.mxu0
        %1454 = vdwg.mxu0
        %1456 = vrot.lane.b32.xlu0 %v1066, 96
        %v1457 = vpop.permute.xlu0 %1456
        %v1459 = vsel %vm1160, %v1405, 0
        %v1462 = vsel %vm1188, %v1457, 0
        %1464 = vmatprep.subr.bf16.mxu0 0
        %1465 = vmatpush1.bf16.msra.mxu0 0
        %1466 = vmatprep.subr.bf16.mxu0 0
        %1467 = vmatpush1.bf16.msra.mxu0 0
        %1468 = vmatprep.subr.bf16.mxu0 0
        %1469 = vmatpush1.bf16.msra.mxu0 0
        %1470 = vmatprep.subr.bf16.mxu0 0
        %1471 = vmatpush1.bf16.msra.mxu0 0
        %1472 = vmatprep.subr.bf16.mxu0 0
        %1473 = vmatpush1.bf16.msra.mxu0 0
        %1474 = vmatprep.subr.bf16.mxu0 0
        %1475 = vmatpush1.bf16.msra.mxu0 0
        %1476 = vmatprep.subr.bf16.mxu0 0
        %1477 = vmatpush1.bf16.msra.mxu0 0
        %1478 = vmatprep.subr.bf16.mxu0 0
        %1479 = vmatpush1.bf16.msra.mxu0 %v1462
        %1480 = vmatprep.subr.bf16.mxu0 0
        %1481 = vmatpush2.bf16.msra.mxu0 0
        %1482 = vmatprep.subr.bf16.mxu0 0
        %1483 = vmatpush2.bf16.msra.mxu0 0
        %1484 = vmatprep.subr.bf16.mxu0 0
        %1485 = vmatpush2.bf16.msra.mxu0 0
        %1486 = vmatprep.subr.bf16.mxu0 0
        %1487 = vmatpush2.bf16.msra.mxu0 0
        %1488 = vmatprep.subr.bf16.mxu0 0
        %1489 = vmatpush2.bf16.msra.mxu0 0
        %1490 = vmatprep.subr.bf16.mxu0 0
        %1491 = vmatpush2.bf16.msra.mxu0 0
        %1492 = vmatprep.subr.bf16.mxu0 0
        %1493 = vmatpush2.bf16.msra.mxu0 0
        %1494 = vmatprep.subr.bf16.mxu0 0
        %1495 = vmatpush2.bf16.msra.mxu0 0
        %1496 = vmatprep.mubr.bf16.mxu0 0
        %1497 = vmatmul.mubr.bf16.gmra.mxu0 %v1459
        %v1498 = vpop.f32.mrf.mxu0
        %v1499 = vadd.f32 0.0, %v1498
        %v1500 = vpop.f32.mrf.mxu0
        %v1501 = vpop.f32.mrf.mxu0
        %v1502 = vpop.f32.mrf.mxu0
        %1503 = vdwg.mxu0
        %1504 = vrot.lane.b32.xlu0 %v1061, 64
        %v1505 = vpop.permute.xlu0 %1504
        %1506 = vrot.lane.b32.xlu0 %v1062, 64
        %v1507 = vpop.permute.xlu0 %1506
        %v1509 = vsel %vm1067, %v1505, 0
        %v1512 = vsel %vm1067, %v1507, 0
        %1514 = vmatprep.subr.bf16.mxu0 0
        %1515 = vmatpush1.bf16.xpose.msra.mxu0 0
        %1516 = vmatprep.subr.bf16.mxu0 0
        %1517 = vmatpush1.bf16.xpose.msra.mxu0 0
        %1518 = vmatprep.subr.bf16.mxu0 0
        %1519 = vmatpush1.bf16.xpose.msra.mxu0 0
        %1520 = vmatprep.subr.bf16.mxu0 0
        %1521 = vmatpush1.bf16.xpose.msra.mxu0 0
        %1522 = vmatprep.subr.bf16.mxu0 0
        %1523 = vmatpush1.bf16.xpose.msra.mxu0 0
        %1524 = vmatprep.subr.bf16.mxu0 0
        %1525 = vmatpush1.bf16.xpose.msra.mxu0 0
        %1526 = vmatprep.subr.bf16.mxu0 0
        %1527 = vmatpush1.bf16.xpose.msra.mxu0 0
        %1528 = vmatprep.subr.bf16.mxu0 0
        %1529 = vmatpush1.bf16.xpose.msra.mxu0 %v1512
        %1530 = vmatprep.subr.bf16.mxu0 0
        %1531 = vmatpush2.bf16.xpose.msra.mxu0 0
        %1532 = vmatprep.subr.bf16.mxu0 0
        %1533 = vmatpush2.bf16.xpose.msra.mxu0 0
        %1534 = vmatprep.subr.bf16.mxu0 0
        %1535 = vmatpush2.bf16.xpose.msra.mxu0 0
        %1536 = vmatprep.subr.bf16.mxu0 0
        %1537 = vmatpush2.bf16.xpose.msra.mxu0 0
        %1538 = vmatprep.subr.bf16.mxu0 0
        %1539 = vmatpush2.bf16.xpose.msra.mxu0 0
        %1540 = vmatprep.subr.bf16.mxu0 0
        %1541 = vmatpush2.bf16.xpose.msra.mxu0 0
        %1542 = vmatprep.subr.bf16.mxu0 0
        %1543 = vmatpush2.bf16.xpose.msra.mxu0 0
        %1544 = vmatprep.subr.bf16.mxu0 0
        %1545 = vmatpush2.bf16.xpose.msra.mxu0 0
        %1546 = vmatprep.mubr.bf16.mxu0 0
        %1547 = vmatmul.mubr.bf16.gmra.mxu0 %v1509
        %v1548 = vpop.f32.mrf.mxu0
        %v1549 = vadd.f32 0.0, %v1548
        %v1550 = vpop.f32.mrf.mxu0
        %v1551 = vpop.f32.mrf.mxu0
        %v1552 = vpop.f32.mrf.mxu0
        %1553 = vdwg.mxu0
        %1554 = vrot.lane.b32.xlu0 %v1064, 64
        %v1555 = vpop.permute.xlu0 %1554
        %1556 = vrot.lane.b32.xlu0 %v1065, 64
        %v1557 = vpop.permute.xlu0 %1556
        %v1559 = vsel %vm1067, %v1555, 0
        %v1562 = vsel %vm1067, %v1557, 0
        %1564 = vmatprep.subr.bf16.mxu0 0
        %1565 = vmatpush1.bf16.xpose.msra.mxu0 0
        %1566 = vmatprep.subr.bf16.mxu0 0
        %1567 = vmatpush1.bf16.xpose.msra.mxu0 0
        %1568 = vmatprep.subr.bf16.mxu0 0
        %1569 = vmatpush1.bf16.xpose.msra.mxu0 0
        %1570 = vmatprep.subr.bf16.mxu0 0
        %1571 = vmatpush1.bf16.xpose.msra.mxu0 0
        %1572 = vmatprep.subr.bf16.mxu0 0
        %1573 = vmatpush1.bf16.xpose.msra.mxu0 0
        %1574 = vmatprep.subr.bf16.mxu0 0
        %1575 = vmatpush1.bf16.xpose.msra.mxu0 0
        %1576 = vmatprep.subr.bf16.mxu0 0
        %1577 = vmatpush1.bf16.xpose.msra.mxu0 0
        %1578 = vmatprep.subr.bf16.mxu0 0
        %1579 = vmatpush1.bf16.xpose.msra.mxu0 %v1562
        %1580 = vmatprep.subr.bf16.mxu0 0
        %1581 = vmatpush2.bf16.xpose.msra.mxu0 0
        %1582 = vmatprep.subr.bf16.mxu0 0
        %1583 = vmatpush2.bf16.xpose.msra.mxu0 0
        %1584 = vmatprep.subr.bf16.mxu0 0
        %1585 = vmatpush2.bf16.xpose.msra.mxu0 0
        %1586 = vmatprep.subr.bf16.mxu0 0
        %1587 = vmatpush2.bf16.xpose.msra.mxu0 0
        %1588 = vmatprep.subr.bf16.mxu0 0
        %1589 = vmatpush2.bf16.xpose.msra.mxu0 0
        %1590 = vmatprep.subr.bf16.mxu0 0
        %1591 = vmatpush2.bf16.xpose.msra.mxu0 0
        %1592 = vmatprep.subr.bf16.mxu0 0
        %1593 = vmatpush2.bf16.xpose.msra.mxu0 0
        %1594 = vmatprep.subr.bf16.mxu0 0
        %1595 = vmatpush2.bf16.xpose.msra.mxu0 0
        %1596 = vmatprep.mubr.bf16.mxu0 0
        %1597 = vmatmul.mubr.bf16.gmra.mxu0 %v1559
        %v1598 = vpop.f32.mrf.mxu0
        %v1599 = vadd.f32 0.0, %v1598
        %v1600 = vpop.f32.mrf.mxu0
        %v1601 = vpop.f32.mrf.mxu0
        %v1602 = vpop.f32.mrf.mxu0
        %1603 = vdwg.mxu0
        %v1604 = vsel %vm1160, %v1549, -inf
        %1605 = vmax.xlane.f32.xlu0 %v1604
        %v1606 = vpop.xlane.xlu0 %1605
        %v1607 = vsel %vm1160, %v1599, -inf
        %1608 = vmax.xlane.f32.xlu0 %v1607
        %v1609 = vpop.xlane.xlu0 %1608
        %v1610 = vsub.f32 %v1549, %v1606
        %v1611 = vsub.f32 %v1599, %v1609
        %v1612 = vmul.f32 %v1610, 1.442695
        %v1613 = vpow.pop %v1612
        %v1614 = vmul.f32 %v1611, 1.442695
        %v1615 = vpow.pop %v1614
        %v1616 = vsel %vm1160, %v1613, 0.0
        %1617 = vadd.xlane.f32.xlu0 %v1616
        %v1618 = vpop.xlane.xlu0 %1617
        %v1619 = vsel %vm1160, %v1615, 0.0
        %1620 = vadd.xlane.f32.xlu0 %v1619
        %v1621 = vpop.xlane.xlu0 %1620
        %v1622 = vrcp.pop %v1618
        %v1623 = vrcp.pop %v1621
        %v1624 = vmul.f32 %v1613, %v1622
        %v1625 = vmul.f32 %v1615, %v1623
        %v1626 = vpack.c.bf16 %v1624, %v1624
        %v1627 = vpack.c.bf16 %v1625, %v1625
        %1628 = vrot.lane.b32.xlu0 %v1063, 64
        %v1629 = vpop.permute.xlu0 %1628
        %v1631 = vsel %vm1160, %v1626, 0
        %v1634 = vsel %vm1188, %v1629, 0
        %1636 = vmatprep.subr.bf16.mxu0 0
        %1637 = vmatpush1.bf16.msra.mxu0 0
        %1638 = vmatprep.subr.bf16.mxu0 0
        %1639 = vmatpush1.bf16.msra.mxu0 0
        %1640 = vmatprep.subr.bf16.mxu0 0
        %1641 = vmatpush1.bf16.msra.mxu0 0
        %1642 = vmatprep.subr.bf16.mxu0 0
        %1643 = vmatpush1.bf16.msra.mxu0 0
        %1644 = vmatprep.subr.bf16.mxu0 0
        %1645 = vmatpush1.bf16.msra.mxu0 0
        %1646 = vmatprep.subr.bf16.mxu0 0
        %1647 = vmatpush1.bf16.msra.mxu0 0
        %1648 = vmatprep.subr.bf16.mxu0 0
        %1649 = vmatpush1.bf16.msra.mxu0 0
        %1650 = vmatprep.subr.bf16.mxu0 0
        %1651 = vmatpush1.bf16.msra.mxu0 %v1634
        %1652 = vmatprep.subr.bf16.mxu0 0
        %1653 = vmatpush2.bf16.msra.mxu0 0
        %1654 = vmatprep.subr.bf16.mxu0 0
        %1655 = vmatpush2.bf16.msra.mxu0 0
        %1656 = vmatprep.subr.bf16.mxu0 0
        %1657 = vmatpush2.bf16.msra.mxu0 0
        %1658 = vmatprep.subr.bf16.mxu0 0
        %1659 = vmatpush2.bf16.msra.mxu0 0
        %1660 = vmatprep.subr.bf16.mxu0 0
        %1661 = vmatpush2.bf16.msra.mxu0 0
        %1662 = vmatprep.subr.bf16.mxu0 0
        %1663 = vmatpush2.bf16.msra.mxu0 0
        %1664 = vmatprep.subr.bf16.mxu0 0
        %1665 = vmatpush2.bf16.msra.mxu0 0
        %1666 = vmatprep.subr.bf16.mxu0 0
        %1667 = vmatpush2.bf16.msra.mxu0 0
        %1668 = vmatprep.mubr.bf16.mxu0 0
        %1669 = vmatmul.mubr.bf16.gmra.mxu0 %v1631
        %v1670 = vpop.f32.mrf.mxu0
        %v1671 = vadd.f32 0.0, %v1670
        %v1672 = vpop.f32.mrf.mxu0
        %v1673 = vpop.f32.mrf.mxu0
        %v1674 = vpop.f32.mrf.mxu0
        %1675 = vdwg.mxu0
        %1676 = vrot.lane.b32.xlu0 %v1066, 64
        %v1677 = vpop.permute.xlu0 %1676
        %v1679 = vsel %vm1160, %v1627, 0
        %v1682 = vsel %vm1188, %v1677, 0
        %1684 = vmatprep.subr.bf16.mxu0 0
        %1685 = vmatpush1.bf16.msra.mxu0 0
        %1686 = vmatprep.subr.bf16.mxu0 0
        %1687 = vmatpush1.bf16.msra.mxu0 0
        %1688 = vmatprep.subr.bf16.mxu0 0
        %1689 = vmatpush1.bf16.msra.mxu0 0
        %1690 = vmatprep.subr.bf16.mxu0 0
        %1691 = vmatpush1.bf16.msra.mxu0 0
        %1692 = vmatprep.subr.bf16.mxu0 0
        %1693 = vmatpush1.bf16.msra.mxu0 0
        %1694 = vmatprep.subr.bf16.mxu0 0
        %1695 = vmatpush1.bf16.msra.mxu0 0
        %1696 = vmatprep.subr.bf16.mxu0 0
        %1697 = vmatpush1.bf16.msra.mxu0 0
        %1698 = vmatprep.subr.bf16.mxu0 0
        %1699 = vmatpush1.bf16.msra.mxu0 %v1682
        %1700 = vmatprep.subr.bf16.mxu0 0
        %1701 = vmatpush2.bf16.msra.mxu0 0
        %1702 = vmatprep.subr.bf16.mxu0 0
        %1703 = vmatpush2.bf16.msra.mxu0 0
        %1704 = vmatprep.subr.bf16.mxu0 0
        %1705 = vmatpush2.bf16.msra.mxu0 0
        %1706 = vmatprep.subr.bf16.mxu0 0
        %1707 = vmatpush2.bf16.msra.mxu0 0
        %1708 = vmatprep.subr.bf16.mxu0 0
        %1709 = vmatpush2.bf16.msra.mxu0 0
        %1710 = vmatprep.subr.bf16.mxu0 0
        %1711 = vmatpush2.bf16.msra.mxu0 0
        %1712 = vmatprep.subr.bf16.mxu0 0
        %1713 = vmatpush2.bf16.msra.mxu0 0
        %1714 = vmatprep.subr.bf16.mxu0 0
        %1715 = vmatpush2.bf16.msra.mxu0 0
        %1716 = vmatprep.mubr.bf16.mxu0 0
        %1717 = vmatmul.mubr.bf16.gmra.mxu0 %v1679
        %v1718 = vpop.f32.mrf.mxu0
        %v1719 = vadd.f32 0.0, %v1718
        %v1720 = vpop.f32.mrf.mxu0
        %v1721 = vpop.f32.mrf.mxu0
        %v1722 = vpop.f32.mrf.mxu0
        %1723 = vdwg.mxu0
        %1724 = vrot.lane.b32.xlu0 %v1061, 32
        %v1725 = vpop.permute.xlu0 %1724
        %1726 = vrot.lane.b32.xlu0 %v1062, 32
        %v1727 = vpop.permute.xlu0 %1726
        %v1729 = vsel %vm1067, %v1725, 0
        %v1732 = vsel %vm1067, %v1727, 0
        %1734 = vmatprep.subr.bf16.mxu0 0
        %1735 = vmatpush1.bf16.xpose.msra.mxu0 0
        %1736 = vmatprep.subr.bf16.mxu0 0
        %1737 = vmatpush1.bf16.xpose.msra.mxu0 0
        %1738 = vmatprep.subr.bf16.mxu0 0
        %1739 = vmatpush1.bf16.xpose.msra.mxu0 0
        %1740 = vmatprep.subr.bf16.mxu0 0
        %1741 = vmatpush1.bf16.xpose.msra.mxu0 0
        %1742 = vmatprep.subr.bf16.mxu0 0
        %1743 = vmatpush1.bf16.xpose.msra.mxu0 0
        %1744 = vmatprep.subr.bf16.mxu0 0
        %1745 = vmatpush1.bf16.xpose.msra.mxu0 0
        %1746 = vmatprep.subr.bf16.mxu0 0
        %1747 = vmatpush1.bf16.xpose.msra.mxu0 0
        %1748 = vmatprep.subr.bf16.mxu0 0
        %1749 = vmatpush1.bf16.xpose.msra.mxu0 %v1732
        %1750 = vmatprep.subr.bf16.mxu0 0
        %1751 = vmatpush2.bf16.xpose.msra.mxu0 0
        %1752 = vmatprep.subr.bf16.mxu0 0
        %1753 = vmatpush2.bf16.xpose.msra.mxu0 0
        %1754 = vmatprep.subr.bf16.mxu0 0
        %1755 = vmatpush2.bf16.xpose.msra.mxu0 0
        %1756 = vmatprep.subr.bf16.mxu0 0
        %1757 = vmatpush2.bf16.xpose.msra.mxu0 0
        %1758 = vmatprep.subr.bf16.mxu0 0
        %1759 = vmatpush2.bf16.xpose.msra.mxu0 0
        %1760 = vmatprep.subr.bf16.mxu0 0
        %1761 = vmatpush2.bf16.xpose.msra.mxu0 0
        %1762 = vmatprep.subr.bf16.mxu0 0
        %1763 = vmatpush2.bf16.xpose.msra.mxu0 0
        %1764 = vmatprep.subr.bf16.mxu0 0
        %1765 = vmatpush2.bf16.xpose.msra.mxu0 0
        %1766 = vmatprep.mubr.bf16.mxu0 0
        %1767 = vmatmul.mubr.bf16.gmra.mxu0 %v1729
        %v1768 = vpop.f32.mrf.mxu0
        %v1769 = vadd.f32 0.0, %v1768
        %v1770 = vpop.f32.mrf.mxu0
        %v1771 = vpop.f32.mrf.mxu0
        %v1772 = vpop.f32.mrf.mxu0
        %1773 = vdwg.mxu0
        %1774 = vrot.lane.b32.xlu0 %v1064, 32
        %v1775 = vpop.permute.xlu0 %1774
        %1776 = vrot.lane.b32.xlu0 %v1065, 32
        %v1777 = vpop.permute.xlu0 %1776
        %v1779 = vsel %vm1067, %v1775, 0
        %v1782 = vsel %vm1067, %v1777, 0
        %1784 = vmatprep.subr.bf16.mxu0 0
        %1785 = vmatpush1.bf16.xpose.msra.mxu0 0
        %1786 = vmatprep.subr.bf16.mxu0 0
        %1787 = vmatpush1.bf16.xpose.msra.mxu0 0
        %1788 = vmatprep.subr.bf16.mxu0 0
        %1789 = vmatpush1.bf16.xpose.msra.mxu0 0
        %1790 = vmatprep.subr.bf16.mxu0 0
        %1791 = vmatpush1.bf16.xpose.msra.mxu0 0
        %1792 = vmatprep.subr.bf16.mxu0 0
        %1793 = vmatpush1.bf16.xpose.msra.mxu0 0
        %1794 = vmatprep.subr.bf16.mxu0 0
        %1795 = vmatpush1.bf16.xpose.msra.mxu0 0
        %1796 = vmatprep.subr.bf16.mxu0 0
        %1797 = vmatpush1.bf16.xpose.msra.mxu0 0
        %1798 = vmatprep.subr.bf16.mxu0 0
        %1799 = vmatpush1.bf16.xpose.msra.mxu0 %v1782
        %1800 = vmatprep.subr.bf16.mxu0 0
        %1801 = vmatpush2.bf16.xpose.msra.mxu0 0
        %1802 = vmatprep.subr.bf16.mxu0 0
        %1803 = vmatpush2.bf16.xpose.msra.mxu0 0
        %1804 = vmatprep.subr.bf16.mxu0 0
        %1805 = vmatpush2.bf16.xpose.msra.mxu0 0
        %1806 = vmatprep.subr.bf16.mxu0 0
        %1807 = vmatpush2.bf16.xpose.msra.mxu0 0
        %1808 = vmatprep.subr.bf16.mxu0 0
        %1809 = vmatpush2.bf16.xpose.msra.mxu0 0
        %1810 = vmatprep.subr.bf16.mxu0 0
        %1811 = vmatpush2.bf16.xpose.msra.mxu0 0
        %1812 = vmatprep.subr.bf16.mxu0 0
        %1813 = vmatpush2.bf16.xpose.msra.mxu0 0
        %1814 = vmatprep.subr.bf16.mxu0 0
        %1815 = vmatpush2.bf16.xpose.msra.mxu0 0
        %1816 = vmatprep.mubr.bf16.mxu0 0
        %1817 = vmatmul.mubr.bf16.gmra.mxu0 %v1779
        %v1818 = vpop.f32.mrf.mxu0
        %v1819 = vadd.f32 0.0, %v1818
        %v1820 = vpop.f32.mrf.mxu0
        %v1821 = vpop.f32.mrf.mxu0
        %v1822 = vpop.f32.mrf.mxu0
        %1823 = vdwg.mxu0
        %v1824 = vsel %vm1160, %v1769, -inf
        %1825 = vmax.xlane.f32.xlu0 %v1824
        %v1826 = vpop.xlane.xlu0 %1825
        %v1827 = vsel %vm1160, %v1819, -inf
        %1828 = vmax.xlane.f32.xlu0 %v1827
        %v1829 = vpop.xlane.xlu0 %1828
        %v1830 = vsub.f32 %v1769, %v1826
        %v1831 = vsub.f32 %v1819, %v1829
        %v1832 = vmul.f32 %v1830, 1.442695
        %v1833 = vpow.pop %v1832
        %v1834 = vmul.f32 %v1831, 1.442695
        %v1835 = vpow.pop %v1834
        %v1836 = vsel %vm1160, %v1833, 0.0
        %1837 = vadd.xlane.f32.xlu0 %v1836
        %v1838 = vpop.xlane.xlu0 %1837
        %v1839 = vsel %vm1160, %v1835, 0.0
        %1840 = vadd.xlane.f32.xlu0 %v1839
        %v1841 = vpop.xlane.xlu0 %1840
        %v1842 = vrcp.pop %v1838
        %v1843 = vrcp.pop %v1841
        %v1844 = vmul.f32 %v1833, %v1842
        %v1845 = vmul.f32 %v1835, %v1843
        %v1846 = vpack.c.bf16 %v1844, %v1844
        %v1847 = vpack.c.bf16 %v1845, %v1845
        %1848 = vrot.lane.b32.xlu0 %v1063, 32
        %v1849 = vpop.permute.xlu0 %1848
        %v1851 = vsel %vm1160, %v1846, 0
        %v1854 = vsel %vm1188, %v1849, 0
        %1856 = vmatprep.subr.bf16.mxu0 0
        %1857 = vmatpush1.bf16.msra.mxu0 0
        %1858 = vmatprep.subr.bf16.mxu0 0
        %1859 = vmatpush1.bf16.msra.mxu0 0
        %1860 = vmatprep.subr.bf16.mxu0 0
        %1861 = vmatpush1.bf16.msra.mxu0 0
        %1862 = vmatprep.subr.bf16.mxu0 0
        %1863 = vmatpush1.bf16.msra.mxu0 0
        %1864 = vmatprep.subr.bf16.mxu0 0
        %1865 = vmatpush1.bf16.msra.mxu0 0
        %1866 = vmatprep.subr.bf16.mxu0 0
        %1867 = vmatpush1.bf16.msra.mxu0 0
        %1868 = vmatprep.subr.bf16.mxu0 0
        %1869 = vmatpush1.bf16.msra.mxu0 0
        %1870 = vmatprep.subr.bf16.mxu0 0
        %1871 = vmatpush1.bf16.msra.mxu0 %v1854
        %1872 = vmatprep.subr.bf16.mxu0 0
        %1873 = vmatpush2.bf16.msra.mxu0 0
        %1874 = vmatprep.subr.bf16.mxu0 0
        %1875 = vmatpush2.bf16.msra.mxu0 0
        %1876 = vmatprep.subr.bf16.mxu0 0
        %1877 = vmatpush2.bf16.msra.mxu0 0
        %1878 = vmatprep.subr.bf16.mxu0 0
        %1879 = vmatpush2.bf16.msra.mxu0 0
        %1880 = vmatprep.subr.bf16.mxu0 0
        %1881 = vmatpush2.bf16.msra.mxu0 0
        %1882 = vmatprep.subr.bf16.mxu0 0
        %1883 = vmatpush2.bf16.msra.mxu0 0
        %1884 = vmatprep.subr.bf16.mxu0 0
        %1885 = vmatpush2.bf16.msra.mxu0 0
        %1886 = vmatprep.subr.bf16.mxu0 0
        %1887 = vmatpush2.bf16.msra.mxu0 0
        %1888 = vmatprep.mubr.bf16.mxu0 0
        %1889 = vmatmul.mubr.bf16.gmra.mxu0 %v1851
        %v1890 = vpop.f32.mrf.mxu0
        %v1891 = vadd.f32 0.0, %v1890
        %v1892 = vpop.f32.mrf.mxu0
        %v1893 = vpop.f32.mrf.mxu0
        %v1894 = vpop.f32.mrf.mxu0
        %1895 = vdwg.mxu0
        %1896 = vrot.lane.b32.xlu0 %v1066, 32
        %v1897 = vpop.permute.xlu0 %1896
        %v1899 = vsel %vm1160, %v1847, 0
        %v1902 = vsel %vm1188, %v1897, 0
        %1904 = vmatprep.subr.bf16.mxu0 0
        %1905 = vmatpush1.bf16.msra.mxu0 0
        %1906 = vmatprep.subr.bf16.mxu0 0
        %1907 = vmatpush1.bf16.msra.mxu0 0
        %1908 = vmatprep.subr.bf16.mxu0 0
        %1909 = vmatpush1.bf16.msra.mxu0 0
        %1910 = vmatprep.subr.bf16.mxu0 0
        %1911 = vmatpush1.bf16.msra.mxu0 0
        %1912 = vmatprep.subr.bf16.mxu0 0
        %1913 = vmatpush1.bf16.msra.mxu0 0
        %1914 = vmatprep.subr.bf16.mxu0 0
        %1915 = vmatpush1.bf16.msra.mxu0 0
        %1916 = vmatprep.subr.bf16.mxu0 0
        %1917 = vmatpush1.bf16.msra.mxu0 0
        %1918 = vmatprep.subr.bf16.mxu0 0
        %1919 = vmatpush1.bf16.msra.mxu0 %v1902
        %1920 = vmatprep.subr.bf16.mxu0 0
        %1921 = vmatpush2.bf16.msra.mxu0 0
        %1922 = vmatprep.subr.bf16.mxu0 0
        %1923 = vmatpush2.bf16.msra.mxu0 0
        %1924 = vmatprep.subr.bf16.mxu0 0
        %1925 = vmatpush2.bf16.msra.mxu0 0
        %1926 = vmatprep.subr.bf16.mxu0 0
        %1927 = vmatpush2.bf16.msra.mxu0 0
        %1928 = vmatprep.subr.bf16.mxu0 0
        %1929 = vmatpush2.bf16.msra.mxu0 0
        %1930 = vmatprep.subr.bf16.mxu0 0
        %1931 = vmatpush2.bf16.msra.mxu0 0
        %1932 = vmatprep.subr.bf16.mxu0 0
        %1933 = vmatpush2.bf16.msra.mxu0 0
        %1934 = vmatprep.subr.bf16.mxu0 0
        %1935 = vmatpush2.bf16.msra.mxu0 0
        %1936 = vmatprep.mubr.bf16.mxu0 0
        %1937 = vmatmul.mubr.bf16.gmra.mxu0 %v1899
        %v1938 = vpop.f32.mrf.mxu0
        %v1939 = vadd.f32 0.0, %v1938
        %v1940 = vpop.f32.mrf.mxu0
        %v1941 = vpop.f32.mrf.mxu0
        %v1942 = vpop.f32.mrf.mxu0
        %1943 = vdwg.mxu0
        %1946 = vrot.lane.b32.xlu0 %v1450, 32
        %v1947 = vpop.permute.xlu0 %1946
        %1948 = vrot.lane.b32.xlu0 %v1499, 32
        %v1949 = vpop.permute.xlu0 %1948
        %1954 = vrot.lane.b32.xlu0 %v1671, 64
        %v1955 = vpop.permute.xlu0 %1954
        %1956 = vrot.lane.b32.xlu0 %v1719, 64
        %v1957 = vpop.permute.xlu0 %1956
        %1962 = vrot.lane.b32.xlu0 %v1891, 96
        %v1963 = vpop.permute.xlu0 %1962
        %1964 = vrot.lane.b32.xlu0 %v1939, 96
        %v1965 = vpop.permute.xlu0 %1964
        %v1968 = vsel %vm1067, %v1227, %v1947
        %v1969 = vsel %vm1067, %v1273, %v1949
        %vm1970 = vcmask 523264
        %v1971 = vsel %vm1970, %v1968, %v1955
        %v1972 = vsel %vm1970, %v1969, %v1957
        %vm1973 = vcmask 785408
        %v1974 = vsel %vm1973, %v1971, %v1963
        %v1975 = vsel %vm1973, %v1972, %v1965
        %v1976 = vpack.c.bf16 %v1975, %v1974
        %s1977 = smul.u32 %s39, 16
        %s1978 = smul.addr %s1977, 4
        %s1979 = scalar_lea.vmem [#allocation11], %s1978
        %v1980 = vld [vmem:[%s1979] sm:$0xf]
        %v1981 = vld [vmem:[%s1979 + $0x4] sm:$0xf]
        %v1982 = vld [vmem:[%s1979 + $0x8] sm:$0xf]
        %v1983 = vld [vmem:[%s1979 + $0xc] sm:$0xf]
        %v1984 = vld [vmem:[%s1979 + $0x10] sm:$0xf]
        %v1985 = vld [vmem:[%s1979 + $0x14] sm:$0xf]
        %v1986 = vld [vmem:[%s1979 + $0x18] sm:$0xf]
        %v1987 = vld [vmem:[%s1979 + $0x1c] sm:$0xf]
        %v1988 = vld [vmem:[%s1979 + $0x20] sm:$0xf]
        %v1989 = vld [vmem:[%s1979 + $0x24] sm:$0xf]
        %v1990 = vld [vmem:[%s1979 + $0x28] sm:$0xf]
        %v1991 = vld [vmem:[%s1979 + $0x2c] sm:$0xf]
        %v1992 = vld [vmem:[%s1979 + $0x30] sm:$0xf]
        %v1993 = vld [vmem:[%s1979 + $0x34] sm:$0xf]
        %v1994 = vld [vmem:[%s1979 + $0x38] sm:$0xf]
        %v1995 = vld [vmem:[%s1979 + $0x3c] sm:$0xf]
        %s1996 = scalar_lea.vmem %s6, %s39
        %v1997 = vld [vmem:[%s1996] sm:$0x1]
        %v1999 = vlaneseq
        %v2000 = vshrl.u32 %v1999, 7
        %v2001 = vsub.s32 0, %v2000
        %v2002 = vrot.slane %v1997, %v2001
        %v2020 = vunpack.c.l.b16 %v1980
        %v2021 = vunpack.c.l.b16 %v1981
        %v2022 = vunpack.c.l.b16 %v1982
        %v2023 = vunpack.c.l.b16 %v1983
        %v2024 = vunpack.c.l.b16 %v1984
        %v2025 = vunpack.c.l.b16 %v1985
        %v2026 = vunpack.c.l.b16 %v1986
        %v2027 = vunpack.c.l.b16 %v1987
        %v2028 = vunpack.c.l.b16 %v1988
        %v2029 = vunpack.c.l.b16 %v1989
        %v2030 = vunpack.c.l.b16 %v1990
        %v2031 = vunpack.c.l.b16 %v1991
        %v2032 = vunpack.c.l.b16 %v1992
        %v2033 = vunpack.c.l.b16 %v1993
        %v2034 = vunpack.c.l.b16 %v1994
        %v2035 = vunpack.c.l.b16 %v1995
        %v2036 = vpack.c.b16 %v2021, %v2020
        %v2037 = vpack.c.b16 %v2023, %v2022
        %v2038 = vpack.c.b16 %v2025, %v2024
        %v2039 = vpack.c.b16 %v2027, %v2026
        %v2040 = vpack.c.b16 %v2029, %v2028
        %v2041 = vpack.c.b16 %v2031, %v2030
        %v2042 = vpack.c.b16 %v2033, %v2032
        %v2043 = vpack.c.b16 %v2035, %v2034
        %2052 = vmatprep.subr.bf16.mxu0 0
        %2053 = vmatpush1.bf16.msra.mxu0 %v2043
        %2054 = vmatprep.subr.bf16.mxu0 0
        %2055 = vmatpush1.bf16.msra.mxu0 %v2042
        %2056 = vmatprep.subr.bf16.mxu0 0
        %2057 = vmatpush1.bf16.msra.mxu0 %v2041
        %2058 = vmatprep.subr.bf16.mxu0 0
        %2059 = vmatpush1.bf16.msra.mxu0 %v2040
        %2060 = vmatprep.subr.bf16.mxu0 0
        %2061 = vmatpush1.bf16.msra.mxu0 %v2039
        %2062 = vmatprep.subr.bf16.mxu0 0
        %2063 = vmatpush1.bf16.msra.mxu0 %v2038
        %2064 = vmatprep.subr.bf16.mxu0 0
        %2065 = vmatpush1.bf16.msra.mxu0 %v2037
        %2066 = vmatprep.subr.bf16.mxu0 0
        %2067 = vmatpush1.bf16.msra.mxu0 %v2036
        %2068 = vmatprep.subr.bf16.mxu0 0
        %2069 = vmatpush2.bf16.msra.mxu0 0
        %2070 = vmatprep.subr.bf16.mxu0 0
        %2071 = vmatpush2.bf16.msra.mxu0 0
        %2072 = vmatprep.subr.bf16.mxu0 0
        %2073 = vmatpush2.bf16.msra.mxu0 0
        %2074 = vmatprep.subr.bf16.mxu0 0
        %2075 = vmatpush2.bf16.msra.mxu0 0
        %2076 = vmatprep.subr.bf16.mxu0 0
        %2077 = vmatpush2.bf16.msra.mxu0 0
        %2078 = vmatprep.subr.bf16.mxu0 0
        %2079 = vmatpush2.bf16.msra.mxu0 0
        %2080 = vmatprep.subr.bf16.mxu0 0
        %2081 = vmatpush2.bf16.msra.mxu0 0
        %2082 = vmatprep.subr.bf16.mxu0 0
        %2083 = vmatpush2.bf16.msra.mxu0 0
        %2084 = vmatprep.mubr.bf16.mxu0 0
        %2085 = vmatmul.mubr.bf16.gmra.mxu0 %v1976
        %v2086 = vpop.f32.mrf.mxu0
        %v2087 = vadd.f32 %v2002, %v2086
        %v2088 = vpop.f32.mrf.mxu0
        %v2089 = vpop.f32.mrf.mxu0
        %v2090 = vadd.f32 %v2002, %v2089
        %v2091 = vpop.f32.mrf.mxu0
        %2092 = vdwg.mxu0
        %v2093 = vadd.f32 %v792, %v2087
        %v2094 = vadd.f32 %v793, %v2090
        %s2095 = scalar_lea.vmem %s7, %s39
        %v2096 = vld [vmem:[%s2095] sm:$0x1]
        %s2097 = scalar_lea.vmem %s8, %s39
        %v2098 = vld [vmem:[%s2097] sm:$0x1]
        %2099 = vadd.xlane.f32.xlu0 %v2093
        %v2100 = vpop.xlane.xlu0 %2099
        %2101 = vadd.xlane.f32.xlu0 %v2094
        %v2102 = vpop.xlane.xlu0 %2101
        %v2103 = vrcp.pop 128.0
        %v2104 = vmul.f32 %v2100, %v2103
        %v2105 = vmul.f32 %v2102, %v2103
        %v2106 = vsub.f32 %v2093, %v2104
        %v2107 = vsub.f32 %v2094, %v2105
        %v2108 = vmul.f32 %v2106, %v2106
        %v2109 = vmul.f32 %v2107, %v2107
        %2110 = vadd.xlane.f32.xlu0 %v2108
        %v2111 = vpop.xlane.xlu0 %2110
        %2112 = vadd.xlane.f32.xlu0 %v2109
        %v2113 = vpop.xlane.xlu0 %2112
        %v2114 = vmul.f32 %v2111, %v2103
        %v2115 = vmul.f32 %v2113, %v2103
        %v2116 = vadd.f32 %v2114, 1e-05
        %v2117 = vadd.f32 %v2115, 1e-05
        %v2118 = vrsqrt.pop %v2116
        %v2119 = vrsqrt.pop %v2117
        %v2120 = vmul.f32 %v2106, %v2118
        %v2121 = vmul.f32 %v2107, %v2119
        %v2123 = vlaneseq
        %v2124 = vshrl.u32 %v2123, 7
        %v2125 = vsub.s32 0, %v2124
        %v2126 = vrot.slane %v2096, %v2125
        %v2128 = vmul.f32 %v2120, %v2126
        %v2129 = vmul.f32 %v2121, %v2126
        %v2131 = vlaneseq
        %v2132 = vshrl.u32 %v2131, 7
        %v2133 = vsub.s32 0, %v2132
        %v2134 = vrot.slane %v2098, %v2133
        %v2136 = vadd.f32 %v2128, %v2134
        %v2137 = vadd.f32 %v2129, %v2134
        %v2138 = vpack.c.bf16 %v2137, %v2136
        %s2139 = smul.u32 %s39, 256
        %s2140 = smul.addr %s2139, 4
        %s2141 = scalar_lea.vmem [#allocation12], %s2140
        %v2142 = vld [vmem:[%s2141] sm:$0xff]
        %v2143 = vld [vmem:[%s2141 + $0x8] sm:$0xff]
        %v2144 = vld [vmem:[%s2141 + $0x10] sm:$0xff]
        %v2145 = vld [vmem:[%s2141 + $0x18] sm:$0xff]
        %v2146 = vld [vmem:[%s2141 + $0x20] sm:$0xff]
        %v2147 = vld [vmem:[%s2141 + $0x28] sm:$0xff]
        %v2148 = vld [vmem:[%s2141 + $0x30] sm:$0xff]
        %v2149 = vld [vmem:[%s2141 + $0x38] sm:$0xff]
        %v2150 = vld [vmem:[%s2141 + $0x40] sm:$0xff]
        %v2151 = vld [vmem:[%s2141 + $0x48] sm:$0xff]
        %v2152 = vld [vmem:[%s2141 + $0x50] sm:$0xff]
        %v2153 = vld [vmem:[%s2141 + $0x58] sm:$0xff]
        %v2154 = vld [vmem:[%s2141 + $0x60] sm:$0xff]
        %v2155 = vld [vmem:[%s2141 + $0x68] sm:$0xff]
        %v2156 = vld [vmem:[%s2141 + $0x70] sm:$0xff]
        %v2157 = vld [vmem:[%s2141 + $0x78] sm:$0xff]
        %v2158 = vld [vmem:[%s2141 + $0x80] sm:$0xff]
        %v2159 = vld [vmem:[%s2141 + $0x88] sm:$0xff]
        %v2160 = vld [vmem:[%s2141 + $0x90] sm:$0xff]
        %v2161 = vld [vmem:[%s2141 + $0x98] sm:$0xff]
        %v2162 = vld [vmem:[%s2141 + $0xa0] sm:$0xff]
        %v2163 = vld [vmem:[%s2141 + $0xa8] sm:$0xff]
        %v2164 = vld [vmem:[%s2141 + $0xb0] sm:$0xff]
        %v2165 = vld [vmem:[%s2141 + $0xb8] sm:$0xff]
        %v2166 = vld [vmem:[%s2141 + $0xc0] sm:$0xff]
        %v2167 = vld [vmem:[%s2141 + $0xc8] sm:$0xff]
        %v2168 = vld [vmem:[%s2141 + $0xd0] sm:$0xff]
        %v2169 = vld [vmem:[%s2141 + $0xd8] sm:$0xff]
        %v2170 = vld [vmem:[%s2141 + $0xe0] sm:$0xff]
        %v2171 = vld [vmem:[%s2141 + $0xe8] sm:$0xff]
        %v2172 = vld [vmem:[%s2141 + $0xf0] sm:$0xff]
        %v2173 = vld [vmem:[%s2141 + $0xf8] sm:$0xff]
        %v2174 = vld [vmem:[%s2141 + $0x100] sm:$0xff]
        %v2175 = vld [vmem:[%s2141 + $0x108] sm:$0xff]
        %v2176 = vld [vmem:[%s2141 + $0x110] sm:$0xff]
        %v2177 = vld [vmem:[%s2141 + $0x118] sm:$0xff]
        %v2178 = vld [vmem:[%s2141 + $0x120] sm:$0xff]
        %v2179 = vld [vmem:[%s2141 + $0x128] sm:$0xff]
        %v2180 = vld [vmem:[%s2141 + $0x130] sm:$0xff]
        %v2181 = vld [vmem:[%s2141 + $0x138] sm:$0xff]
        %v2182 = vld [vmem:[%s2141 + $0x140] sm:$0xff]
        %v2183 = vld [vmem:[%s2141 + $0x148] sm:$0xff]
        %v2184 = vld [vmem:[%s2141 + $0x150] sm:$0xff]
        %v2185 = vld [vmem:[%s2141 + $0x158] sm:$0xff]
        %v2186 = vld [vmem:[%s2141 + $0x160] sm:$0xff]
        %v2187 = vld [vmem:[%s2141 + $0x168] sm:$0xff]
        %v2188 = vld [vmem:[%s2141 + $0x170] sm:$0xff]
        %v2189 = vld [vmem:[%s2141 + $0x178] sm:$0xff]
        %v2190 = vld [vmem:[%s2141 + $0x180] sm:$0xff]
        %v2191 = vld [vmem:[%s2141 + $0x188] sm:$0xff]
        %v2192 = vld [vmem:[%s2141 + $0x190] sm:$0xff]
        %v2193 = vld [vmem:[%s2141 + $0x198] sm:$0xff]
        %v2194 = vld [vmem:[%s2141 + $0x1a0] sm:$0xff]
        %v2195 = vld [vmem:[%s2141 + $0x1a8] sm:$0xff]
        %v2196 = vld [vmem:[%s2141 + $0x1b0] sm:$0xff]
        %v2197 = vld [vmem:[%s2141 + $0x1b8] sm:$0xff]
        %v2198 = vld [vmem:[%s2141 + $0x1c0] sm:$0xff]
        %v2199 = vld [vmem:[%s2141 + $0x1c8] sm:$0xff]
        %v2200 = vld [vmem:[%s2141 + $0x1d0] sm:$0xff]
        %v2201 = vld [vmem:[%s2141 + $0x1d8] sm:$0xff]
        %v2202 = vld [vmem:[%s2141 + $0x1e0] sm:$0xff]
        %v2203 = vld [vmem:[%s2141 + $0x1e8] sm:$0xff]
        %v2204 = vld [vmem:[%s2141 + $0x1f0] sm:$0xff]
        %v2205 = vld [vmem:[%s2141 + $0x1f8] sm:$0xff]
        %v2206 = vld [vmem:[%s2141 + $0x200] sm:$0xff]
        %v2207 = vld [vmem:[%s2141 + $0x208] sm:$0xff]
        %v2208 = vld [vmem:[%s2141 + $0x210] sm:$0xff]
        %v2209 = vld [vmem:[%s2141 + $0x218] sm:$0xff]
        %v2210 = vld [vmem:[%s2141 + $0x220] sm:$0xff]
        %v2211 = vld [vmem:[%s2141 + $0x228] sm:$0xff]
        %v2212 = vld [vmem:[%s2141 + $0x230] sm:$0xff]
        %v2213 = vld [vmem:[%s2141 + $0x238] sm:$0xff]
        %v2214 = vld [vmem:[%s2141 + $0x240] sm:$0xff]
        %v2215 = vld [vmem:[%s2141 + $0x248] sm:$0xff]
        %v2216 = vld [vmem:[%s2141 + $0x250] sm:$0xff]
        %v2217 = vld [vmem:[%s2141 + $0x258] sm:$0xff]
        %v2218 = vld [vmem:[%s2141 + $0x260] sm:$0xff]
        %v2219 = vld [vmem:[%s2141 + $0x268] sm:$0xff]
        %v2220 = vld [vmem:[%s2141 + $0x270] sm:$0xff]
        %v2221 = vld [vmem:[%s2141 + $0x278] sm:$0xff]
        %v2222 = vld [vmem:[%s2141 + $0x280] sm:$0xff]
        %v2223 = vld [vmem:[%s2141 + $0x288] sm:$0xff]
        %v2224 = vld [vmem:[%s2141 + $0x290] sm:$0xff]
        %v2225 = vld [vmem:[%s2141 + $0x298] sm:$0xff]
        %v2226 = vld [vmem:[%s2141 + $0x2a0] sm:$0xff]
        %v2227 = vld [vmem:[%s2141 + $0x2a8] sm:$0xff]
        %v2228 = vld [vmem:[%s2141 + $0x2b0] sm:$0xff]
        %v2229 = vld [vmem:[%s2141 + $0x2b8] sm:$0xff]
        %v2230 = vld [vmem:[%s2141 + $0x2c0] sm:$0xff]
        %v2231 = vld [vmem:[%s2141 + $0x2c8] sm:$0xff]
        %v2232 = vld [vmem:[%s2141 + $0x2d0] sm:$0xff]
        %v2233 = vld [vmem:[%s2141 + $0x2d8] sm:$0xff]
        %v2234 = vld [vmem:[%s2141 + $0x2e0] sm:$0xff]
        %v2235 = vld [vmem:[%s2141 + $0x2e8] sm:$0xff]
        %v2236 = vld [vmem:[%s2141 + $0x2f0] sm:$0xff]
        %v2237 = vld [vmem:[%s2141 + $0x2f8] sm:$0xff]
        %v2238 = vld [vmem:[%s2141 + $0x300] sm:$0xff]
        %v2239 = vld [vmem:[%s2141 + $0x308] sm:$0xff]
        %v2240 = vld [vmem:[%s2141 + $0x310] sm:$0xff]
        %v2241 = vld [vmem:[%s2141 + $0x318] sm:$0xff]
        %v2242 = vld [vmem:[%s2141 + $0x320] sm:$0xff]
        %v2243 = vld [vmem:[%s2141 + $0x328] sm:$0xff]
        %v2244 = vld [vmem:[%s2141 + $0x330] sm:$0xff]
        %v2245 = vld [vmem:[%s2141 + $0x338] sm:$0xff]
        %v2246 = vld [vmem:[%s2141 + $0x340] sm:$0xff]
        %v2247 = vld [vmem:[%s2141 + $0x348] sm:$0xff]
        %v2248 = vld [vmem:[%s2141 + $0x350] sm:$0xff]
        %v2249 = vld [vmem:[%s2141 + $0x358] sm:$0xff]
        %v2250 = vld [vmem:[%s2141 + $0x360] sm:$0xff]
        %v2251 = vld [vmem:[%s2141 + $0x368] sm:$0xff]
        %v2252 = vld [vmem:[%s2141 + $0x370] sm:$0xff]
        %v2253 = vld [vmem:[%s2141 + $0x378] sm:$0xff]
        %v2254 = vld [vmem:[%s2141 + $0x380] sm:$0xff]
        %v2255 = vld [vmem:[%s2141 + $0x388] sm:$0xff]
        %v2256 = vld [vmem:[%s2141 + $0x390] sm:$0xff]
        %v2257 = vld [vmem:[%s2141 + $0x398] sm:$0xff]
        %v2258 = vld [vmem:[%s2141 + $0x3a0] sm:$0xff]
        %v2259 = vld [vmem:[%s2141 + $0x3a8] sm:$0xff]
        %v2260 = vld [vmem:[%s2141 + $0x3b0] sm:$0xff]
        %v2261 = vld [vmem:[%s2141 + $0x3b8] sm:$0xff]
        %v2262 = vld [vmem:[%s2141 + $0x3c0] sm:$0xff]
        %v2263 = vld [vmem:[%s2141 + $0x3c8] sm:$0xff]
        %v2264 = vld [vmem:[%s2141 + $0x3d0] sm:$0xff]
        %v2265 = vld [vmem:[%s2141 + $0x3d8] sm:$0xff]
        %v2266 = vld [vmem:[%s2141 + $0x3e0] sm:$0xff]
        %v2267 = vld [vmem:[%s2141 + $0x3e8] sm:$0xff]
        %v2268 = vld [vmem:[%s2141 + $0x3f0] sm:$0xff]
        %v2269 = vld [vmem:[%s2141 + $0x3f8] sm:$0xff]
        %s2270 = scalar_lea.vmem [#allocation14], %s1977
        %v2271 = vld [vmem:[%s2270] sm:$0xff]
        %v2272 = vld [vmem:[%s2270 + $0x8] sm:$0xff]
        %v2275 = vlaneseq
        %v2276 = vshrl.u32 %v2275, 7
        %v2277 = vsub.s32 0, %v2276
        %v2278 = vrot.slane %v2271, %v2277
        %v2279 = vlaneseq
        %v2280 = vshrl.u32 %v2279, 7
        %v2281 = vsub.s32 1, %v2280
        %v2282 = vrot.slane %v2271, %v2281
        %v2283 = vlaneseq
        %v2284 = vshrl.u32 %v2283, 7
        %v2285 = vsub.s32 2, %v2284
        %v2286 = vrot.slane %v2271, %v2285
        %v2287 = vlaneseq
        %v2288 = vshrl.u32 %v2287, 7
        %v2289 = vsub.s32 3, %v2288
        %v2290 = vrot.slane %v2271, %v2289
        %v2291 = vlaneseq
        %v2292 = vshrl.u32 %v2291, 7
        %v2293 = vsub.s32 4, %v2292
        %v2294 = vrot.slane %v2271, %v2293
        %v2295 = vlaneseq
        %v2296 = vshrl.u32 %v2295, 7
        %v2297 = vsub.s32 5, %v2296
        %v2298 = vrot.slane %v2271, %v2297
        %v2299 = vlaneseq
        %v2300 = vshrl.u32 %v2299, 7
        %v2301 = vsub.s32 6, %v2300
        %v2302 = vrot.slane %v2271, %v2301
        %v2303 = vlaneseq
        %v2304 = vshrl.u32 %v2303, 7
        %v2305 = vsub.s32 7, %v2304
        %v2306 = vrot.slane %v2271, %v2305
        %v2307 = vlaneseq
        %v2308 = vshrl.u32 %v2307, 7
        %v2309 = vsub.s32 0, %v2308
        %v2310 = vrot.slane %v2272, %v2309
        %v2311 = vlaneseq
        %v2312 = vshrl.u32 %v2311, 7
        %v2313 = vsub.s32 1, %v2312
        %v2314 = vrot.slane %v2272, %v2313
        %v2315 = vlaneseq
        %v2316 = vshrl.u32 %v2315, 7
        %v2317 = vsub.s32 2, %v2316
        %v2318 = vrot.slane %v2272, %v2317
        %v2319 = vlaneseq
        %v2320 = vshrl.u32 %v2319, 7
        %v2321 = vsub.s32 3, %v2320
        %v2322 = vrot.slane %v2272, %v2321
        %v2323 = vlaneseq
        %v2324 = vshrl.u32 %v2323, 7
        %v2325 = vsub.s32 4, %v2324
        %v2326 = vrot.slane %v2272, %v2325
        %v2327 = vlaneseq
        %v2328 = vshrl.u32 %v2327, 7
        %v2329 = vsub.s32 5, %v2328
        %v2330 = vrot.slane %v2272, %v2329
        %v2331 = vlaneseq
        %v2332 = vshrl.u32 %v2331, 7
        %v2333 = vsub.s32 6, %v2332
        %v2334 = vrot.slane %v2272, %v2333
        %v2335 = vlaneseq
        %v2336 = vshrl.u32 %v2335, 7
        %v2337 = vsub.s32 7, %v2336
        %v2338 = vrot.slane %v2272, %v2337
        %v2483 = vunpack.c.l.b16 %v2142
        %v2484 = vunpack.c.h.b16 %v2142
        %v2485 = vunpack.c.l.b16 %v2143
        %v2486 = vunpack.c.h.b16 %v2143
        %v2487 = vunpack.c.l.b16 %v2144
        %v2488 = vunpack.c.h.b16 %v2144
        %v2489 = vunpack.c.l.b16 %v2145
        %v2490 = vunpack.c.h.b16 %v2145
        %v2491 = vunpack.c.l.b16 %v2146
        %v2492 = vunpack.c.h.b16 %v2146
        %v2493 = vunpack.c.l.b16 %v2147
        %v2494 = vunpack.c.h.b16 %v2147
        %v2495 = vunpack.c.l.b16 %v2148
        %v2496 = vunpack.c.h.b16 %v2148
        %v2497 = vunpack.c.l.b16 %v2149
        %v2498 = vunpack.c.h.b16 %v2149
        %v2499 = vunpack.c.l.b16 %v2150
        %v2500 = vunpack.c.h.b16 %v2150
        %v2501 = vunpack.c.l.b16 %v2151
        %v2502 = vunpack.c.h.b16 %v2151
        %v2503 = vunpack.c.l.b16 %v2152
        %v2504 = vunpack.c.h.b16 %v2152
        %v2505 = vunpack.c.l.b16 %v2153
        %v2506 = vunpack.c.h.b16 %v2153
        %v2507 = vunpack.c.l.b16 %v2154
        %v2508 = vunpack.c.h.b16 %v2154
        %v2509 = vunpack.c.l.b16 %v2155
        %v2510 = vunpack.c.h.b16 %v2155
        %v2511 = vunpack.c.l.b16 %v2156
        %v2512 = vunpack.c.h.b16 %v2156
        %v2513 = vunpack.c.l.b16 %v2157
        %v2514 = vunpack.c.h.b16 %v2157
        %v2515 = vunpack.c.l.b16 %v2158
        %v2516 = vunpack.c.h.b16 %v2158
        %v2517 = vunpack.c.l.b16 %v2159
        %v2518 = vunpack.c.h.b16 %v2159
        %v2519 = vunpack.c.l.b16 %v2160
        %v2520 = vunpack.c.h.b16 %v2160
        %v2521 = vunpack.c.l.b16 %v2161
        %v2522 = vunpack.c.h.b16 %v2161
        %v2523 = vunpack.c.l.b16 %v2162
        %v2524 = vunpack.c.h.b16 %v2162
        %v2525 = vunpack.c.l.b16 %v2163
        %v2526 = vunpack.c.h.b16 %v2163
        %v2527 = vunpack.c.l.b16 %v2164
        %v2528 = vunpack.c.h.b16 %v2164
        %v2529 = vunpack.c.l.b16 %v2165
        %v2530 = vunpack.c.h.b16 %v2165
        %v2531 = vunpack.c.l.b16 %v2166
        %v2532 = vunpack.c.h.b16 %v2166
        %v2533 = vunpack.c.l.b16 %v2167
        %v2534 = vunpack.c.h.b16 %v2167
        %v2535 = vunpack.c.l.b16 %v2168
        %v2536 = vunpack.c.h.b16 %v2168
        %v2537 = vunpack.c.l.b16 %v2169
        %v2538 = vunpack.c.h.b16 %v2169
        %v2539 = vunpack.c.l.b16 %v2170
        %v2540 = vunpack.c.h.b16 %v2170
        %v2541 = vunpack.c.l.b16 %v2171
        %v2542 = vunpack.c.h.b16 %v2171
        %v2543 = vunpack.c.l.b16 %v2172
        %v2544 = vunpack.c.h.b16 %v2172
        %v2545 = vunpack.c.l.b16 %v2173
        %v2546 = vunpack.c.h.b16 %v2173
        %v2547 = vunpack.c.l.b16 %v2174
        %v2548 = vunpack.c.h.b16 %v2174
        %v2549 = vunpack.c.l.b16 %v2175
        %v2550 = vunpack.c.h.b16 %v2175
        %v2551 = vunpack.c.l.b16 %v2176
        %v2552 = vunpack.c.h.b16 %v2176
        %v2553 = vunpack.c.l.b16 %v2177
        %v2554 = vunpack.c.h.b16 %v2177
        %v2555 = vunpack.c.l.b16 %v2178
        %v2556 = vunpack.c.h.b16 %v2178
        %v2557 = vunpack.c.l.b16 %v2179
        %v2558 = vunpack.c.h.b16 %v2179
        %v2559 = vunpack.c.l.b16 %v2180
        %v2560 = vunpack.c.h.b16 %v2180
        %v2561 = vunpack.c.l.b16 %v2181
        %v2562 = vunpack.c.h.b16 %v2181
        %v2563 = vunpack.c.l.b16 %v2182
        %v2564 = vunpack.c.h.b16 %v2182
        %v2565 = vunpack.c.l.b16 %v2183
        %v2566 = vunpack.c.h.b16 %v2183
        %v2567 = vunpack.c.l.b16 %v2184
        %v2568 = vunpack.c.h.b16 %v2184
        %v2569 = vunpack.c.l.b16 %v2185
        %v2570 = vunpack.c.h.b16 %v2185
        %v2571 = vunpack.c.l.b16 %v2186
        %v2572 = vunpack.c.h.b16 %v2186
        %v2573 = vunpack.c.l.b16 %v2187
        %v2574 = vunpack.c.h.b16 %v2187
        %v2575 = vunpack.c.l.b16 %v2188
        %v2576 = vunpack.c.h.b16 %v2188
        %v2577 = vunpack.c.l.b16 %v2189
        %v2578 = vunpack.c.h.b16 %v2189
        %v2579 = vunpack.c.l.b16 %v2190
        %v2580 = vunpack.c.h.b16 %v2190
        %v2581 = vunpack.c.l.b16 %v2191
        %v2582 = vunpack.c.h.b16 %v2191
        %v2583 = vunpack.c.l.b16 %v2192
        %v2584 = vunpack.c.h.b16 %v2192
        %v2585 = vunpack.c.l.b16 %v2193
        %v2586 = vunpack.c.h.b16 %v2193
        %v2587 = vunpack.c.l.b16 %v2194
        %v2588 = vunpack.c.h.b16 %v2194
        %v2589 = vunpack.c.l.b16 %v2195
        %v2590 = vunpack.c.h.b16 %v2195
        %v2591 = vunpack.c.l.b16 %v2196
        %v2592 = vunpack.c.h.b16 %v2196
        %v2593 = vunpack.c.l.b16 %v2197
        %v2594 = vunpack.c.h.b16 %v2197
        %v2595 = vunpack.c.l.b16 %v2198
        %v2596 = vunpack.c.h.b16 %v2198
        %v2597 = vunpack.c.l.b16 %v2199
        %v2598 = vunpack.c.h.b16 %v2199
        %v2599 = vunpack.c.l.b16 %v2200
        %v2600 = vunpack.c.h.b16 %v2200
        %v2601 = vunpack.c.l.b16 %v2201
        %v2602 = vunpack.c.h.b16 %v2201
        %v2603 = vunpack.c.l.b16 %v2202
        %v2604 = vunpack.c.h.b16 %v2202
        %v2605 = vunpack.c.l.b16 %v2203
        %v2606 = vunpack.c.h.b16 %v2203
        %v2607 = vunpack.c.l.b16 %v2204
        %v2608 = vunpack.c.h.b16 %v2204
        %v2609 = vunpack.c.l.b16 %v2205
        %v2610 = vunpack.c.h.b16 %v2205
        %v2611 = vunpack.c.l.b16 %v2206
        %v2612 = vunpack.c.h.b16 %v2206
        %v2613 = vunpack.c.l.b16 %v2207
        %v2614 = vunpack.c.h.b16 %v2207
        %v2615 = vunpack.c.l.b16 %v2208
        %v2616 = vunpack.c.h.b16 %v2208
        %v2617 = vunpack.c.l.b16 %v2209
        %v2618 = vunpack.c.h.b16 %v2209
        %v2619 = vunpack.c.l.b16 %v2210
        %v2620 = vunpack.c.h.b16 %v2210
        %v2621 = vunpack.c.l.b16 %v2211
        %v2622 = vunpack.c.h.b16 %v2211
        %v2623 = vunpack.c.l.b16 %v2212
        %v2624 = vunpack.c.h.b16 %v2212
        %v2625 = vunpack.c.l.b16 %v2213
        %v2626 = vunpack.c.h.b16 %v2213
        %v2627 = vunpack.c.l.b16 %v2214
        %v2628 = vunpack.c.h.b16 %v2214
        %v2629 = vunpack.c.l.b16 %v2215
        %v2630 = vunpack.c.h.b16 %v2215
        %v2631 = vunpack.c.l.b16 %v2216
        %v2632 = vunpack.c.h.b16 %v2216
        %v2633 = vunpack.c.l.b16 %v2217
        %v2634 = vunpack.c.h.b16 %v2217
        %v2635 = vunpack.c.l.b16 %v2218
        %v2636 = vunpack.c.h.b16 %v2218
        %v2637 = vunpack.c.l.b16 %v2219
        %v2638 = vunpack.c.h.b16 %v2219
        %v2639 = vunpack.c.l.b16 %v2220
        %v2640 = vunpack.c.h.b16 %v2220
        %v2641 = vunpack.c.l.b16 %v2221
        %v2642 = vunpack.c.h.b16 %v2221
        %v2643 = vunpack.c.l.b16 %v2222
        %v2644 = vunpack.c.h.b16 %v2222
        %v2645 = vunpack.c.l.b16 %v2223
        %v2646 = vunpack.c.h.b16 %v2223
        %v2647 = vunpack.c.l.b16 %v2224
        %v2648 = vunpack.c.h.b16 %v2224
        %v2649 = vunpack.c.l.b16 %v2225
        %v2650 = vunpack.c.h.b16 %v2225
        %v2651 = vunpack.c.l.b16 %v2226
        %v2652 = vunpack.c.h.b16 %v2226
        %v2653 = vunpack.c.l.b16 %v2227
        %v2654 = vunpack.c.h.b16 %v2227
        %v2655 = vunpack.c.l.b16 %v2228
        %v2656 = vunpack.c.h.b16 %v2228
        %v2657 = vunpack.c.l.b16 %v2229
        %v2658 = vunpack.c.h.b16 %v2229
        %v2659 = vunpack.c.l.b16 %v2230
        %v2660 = vunpack.c.h.b16 %v2230
        %v2661 = vunpack.c.l.b16 %v2231
        %v2662 = vunpack.c.h.b16 %v2231
        %v2663 = vunpack.c.l.b16 %v2232
        %v2664 = vunpack.c.h.b16 %v2232
        %v2665 = vunpack.c.l.b16 %v2233
        %v2666 = vunpack.c.h.b16 %v2233
        %v2667 = vunpack.c.l.b16 %v2234
        %v2668 = vunpack.c.h.b16 %v2234
        %v2669 = vunpack.c.l.b16 %v2235
        %v2670 = vunpack.c.h.b16 %v2235
        %v2671 = vunpack.c.l.b16 %v2236
        %v2672 = vunpack.c.h.b16 %v2236
        %v2673 = vunpack.c.l.b16 %v2237
        %v2674 = vunpack.c.h.b16 %v2237
        %v2675 = vunpack.c.l.b16 %v2238
        %v2676 = vunpack.c.h.b16 %v2238
        %v2677 = vunpack.c.l.b16 %v2239
        %v2678 = vunpack.c.h.b16 %v2239
        %v2679 = vunpack.c.l.b16 %v2240
        %v2680 = vunpack.c.h.b16 %v2240
        %v2681 = vunpack.c.l.b16 %v2241
        %v2682 = vunpack.c.h.b16 %v2241
        %v2683 = vunpack.c.l.b16 %v2242
        %v2684 = vunpack.c.h.b16 %v2242
        %v2685 = vunpack.c.l.b16 %v2243
        %v2686 = vunpack.c.h.b16 %v2243
        %v2687 = vunpack.c.l.b16 %v2244
        %v2688 = vunpack.c.h.b16 %v2244
        %v2689 = vunpack.c.l.b16 %v2245
        %v2690 = vunpack.c.h.b16 %v2245
        %v2691 = vunpack.c.l.b16 %v2246
        %v2692 = vunpack.c.h.b16 %v2246
        %v2693 = vunpack.c.l.b16 %v2247
        %v2694 = vunpack.c.h.b16 %v2247
        %v2695 = vunpack.c.l.b16 %v2248
        %v2696 = vunpack.c.h.b16 %v2248
        %v2697 = vunpack.c.l.b16 %v2249
        %v2698 = vunpack.c.h.b16 %v2249
        %v2699 = vunpack.c.l.b16 %v2250
        %v2700 = vunpack.c.h.b16 %v2250
        %v2701 = vunpack.c.l.b16 %v2251
        %v2702 = vunpack.c.h.b16 %v2251
        %v2703 = vunpack.c.l.b16 %v2252
        %v2704 = vunpack.c.h.b16 %v2252
        %v2705 = vunpack.c.l.b16 %v2253
        %v2706 = vunpack.c.h.b16 %v2253
        %v2707 = vunpack.c.l.b16 %v2254
        %v2708 = vunpack.c.h.b16 %v2254
        %v2709 = vunpack.c.l.b16 %v2255
        %v2710 = vunpack.c.h.b16 %v2255
        %v2711 = vunpack.c.l.b16 %v2256
        %v2712 = vunpack.c.h.b16 %v2256
        %v2713 = vunpack.c.l.b16 %v2257
        %v2714 = vunpack.c.h.b16 %v2257
        %v2715 = vunpack.c.l.b16 %v2258
        %v2716 = vunpack.c.h.b16 %v2258
        %v2717 = vunpack.c.l.b16 %v2259
        %v2718 = vunpack.c.h.b16 %v2259
        %v2719 = vunpack.c.l.b16 %v2260
        %v2720 = vunpack.c.h.b16 %v2260
        %v2721 = vunpack.c.l.b16 %v2261
        %v2722 = vunpack.c.h.b16 %v2261
        %v2723 = vunpack.c.l.b16 %v2262
        %v2724 = vunpack.c.h.b16 %v2262
        %v2725 = vunpack.c.l.b16 %v2263
        %v2726 = vunpack.c.h.b16 %v2263
        %v2727 = vunpack.c.l.b16 %v2264
        %v2728 = vunpack.c.h.b16 %v2264
        %v2729 = vunpack.c.l.b16 %v2265
        %v2730 = vunpack.c.h.b16 %v2265
        %v2731 = vunpack.c.l.b16 %v2266
        %v2732 = vunpack.c.h.b16 %v2266
        %v2733 = vunpack.c.l.b16 %v2267
        %v2734 = vunpack.c.h.b16 %v2267
        %v2735 = vunpack.c.l.b16 %v2268
        %v2736 = vunpack.c.h.b16 %v2268
        %v2737 = vunpack.c.l.b16 %v2269
        %v2738 = vunpack.c.h.b16 %v2269
        %v2739 = vpack.c.b16 %v2499, %v2483
        %v2740 = vpack.c.b16 %v2500, %v2484
        %v2741 = vpack.c.b16 %v2501, %v2485
        %v2742 = vpack.c.b16 %v2502, %v2486
        %v2743 = vpack.c.b16 %v2503, %v2487
        %v2744 = vpack.c.b16 %v2504, %v2488
        %v2745 = vpack.c.b16 %v2505, %v2489
        %v2746 = vpack.c.b16 %v2506, %v2490
        %v2747 = vpack.c.b16 %v2507, %v2491
        %v2748 = vpack.c.b16 %v2508, %v2492
        %v2749 = vpack.c.b16 %v2509, %v2493
        %v2750 = vpack.c.b16 %v2510, %v2494
        %v2751 = vpack.c.b16 %v2511, %v2495
        %v2752 = vpack.c.b16 %v2512, %v2496
        %v2753 = vpack.c.b16 %v2513, %v2497
        %v2754 = vpack.c.b16 %v2514, %v2498
        %v2755 = vpack.c.b16 %v2531, %v2515
        %v2756 = vpack.c.b16 %v2532, %v2516
        %v2757 = vpack.c.b16 %v2533, %v2517
        %v2758 = vpack.c.b16 %v2534, %v2518
        %v2759 = vpack.c.b16 %v2535, %v2519
        %v2760 = vpack.c.b16 %v2536, %v2520
        %v2761 = vpack.c.b16 %v2537, %v2521
        %v2762 = vpack.c.b16 %v2538, %v2522
        %v2763 = vpack.c.b16 %v2539, %v2523
        %v2764 = vpack.c.b16 %v2540, %v2524
        %v2765 = vpack.c.b16 %v2541, %v2525
        %v2766 = vpack.c.b16 %v2542, %v2526
        %v2767 = vpack.c.b16 %v2543, %v2527
        %v2768 = vpack.c.b16 %v2544, %v2528
        %v2769 = vpack.c.b16 %v2545, %v2529
        %v2770 = vpack.c.b16 %v2546, %v2530
        %v2771 = vpack.c.b16 %v2563, %v2547
        %v2772 = vpack.c.b16 %v2564, %v2548
        %v2773 = vpack.c.b16 %v2565, %v2549
        %v2774 = vpack.c.b16 %v2566, %v2550
        %v2775 = vpack.c.b16 %v2567, %v2551
        %v2776 = vpack.c.b16 %v2568, %v2552
        %v2777 = vpack.c.b16 %v2569, %v2553
        %v2778 = vpack.c.b16 %v2570, %v2554
        %v2779 = vpack.c.b16 %v2571, %v2555
        %v2780 = vpack.c.b16 %v2572, %v2556
        %v2781 = vpack.c.b16 %v2573, %v2557
        %v2782 = vpack.c.b16 %v2574, %v2558
        %v2783 = vpack.c.b16 %v2575, %v2559
        %v2784 = vpack.c.b16 %v2576, %v2560
        %v2785 = vpack.c.b16 %v2577, %v2561
        %v2786 = vpack.c.b16 %v2578, %v2562
        %v2787 = vpack.c.b16 %v2595, %v2579
        %v2788 = vpack.c.b16 %v2596, %v2580
        %v2789 = vpack.c.b16 %v2597, %v2581
        %v2790 = vpack.c.b16 %v2598, %v2582
        %v2791 = vpack.c.b16 %v2599, %v2583
        %v2792 = vpack.c.b16 %v2600, %v2584
        %v2793 = vpack.c.b16 %v2601, %v2585
        %v2794 = vpack.c.b16 %v2602, %v2586
        %v2795 = vpack.c.b16 %v2603, %v2587
        %v2796 = vpack.c.b16 %v2604, %v2588
        %v2797 = vpack.c.b16 %v2605, %v2589
        %v2798 = vpack.c.b16 %v2606, %v2590
        %v2799 = vpack.c.b16 %v2607, %v2591
        %v2800 = vpack.c.b16 %v2608, %v2592
        %v2801 = vpack.c.b16 %v2609, %v2593
        %v2802 = vpack.c.b16 %v2610, %v2594
        %v2803 = vpack.c.b16 %v2627, %v2611
        %v2804 = vpack.c.b16 %v2628, %v2612
        %v2805 = vpack.c.b16 %v2629, %v2613
        %v2806 = vpack.c.b16 %v2630, %v2614
        %v2807 = vpack.c.b16 %v2631, %v2615
        %v2808 = vpack.c.b16 %v2632, %v2616
        %v2809 = vpack.c.b16 %v2633, %v2617
        %v2810 = vpack.c.b16 %v2634, %v2618
        %v2811 = vpack.c.b16 %v2635, %v2619
        %v2812 = vpack.c.b16 %v2636, %v2620
        %v2813 = vpack.c.b16 %v2637, %v2621
        %v2814 = vpack.c.b16 %v2638, %v2622
        %v2815 = vpack.c.b16 %v2639, %v2623
        %v2816 = vpack.c.b16 %v2640, %v2624
        %v2817 = vpack.c.b16 %v2641, %v2625
        %v2818 = vpack.c.b16 %v2642, %v2626
        %v2819 = vpack.c.b16 %v2659, %v2643
        %v2820 = vpack.c.b16 %v2660, %v2644
        %v2821 = vpack.c.b16 %v2661, %v2645
        %v2822 = vpack.c.b16 %v2662, %v2646
        %v2823 = vpack.c.b16 %v2663, %v2647
        %v2824 = vpack.c.b16 %v2664, %v2648
        %v2825 = vpack.c.b16 %v2665, %v2649
        %v2826 = vpack.c.b16 %v2666, %v2650
        %v2827 = vpack.c.b16 %v2667, %v2651
        %v2828 = vpack.c.b16 %v2668, %v2652
        %v2829 = vpack.c.b16 %v2669, %v2653
        %v2830 = vpack.c.b16 %v2670, %v2654
        %v2831 = vpack.c.b16 %v2671, %v2655
        %v2832 = vpack.c.b16 %v2672, %v2656
        %v2833 = vpack.c.b16 %v2673, %v2657
        %v2834 = vpack.c.b16 %v2674, %v2658
        %v2835 = vpack.c.b16 %v2691, %v2675
        %v2836 = vpack.c.b16 %v2692, %v2676
        %v2837 = vpack.c.b16 %v2693, %v2677
        %v2838 = vpack.c.b16 %v2694, %v2678
        %v2839 = vpack.c.b16 %v2695, %v2679
        %v2840 = vpack.c.b16 %v2696, %v2680
        %v2841 = vpack.c.b16 %v2697, %v2681
        %v2842 = vpack.c.b16 %v2698, %v2682
        %v2843 = vpack.c.b16 %v2699, %v2683
        %v2844 = vpack.c.b16 %v2700, %v2684
        %v2845 = vpack.c.b16 %v2701, %v2685
        %v2846 = vpack.c.b16 %v2702, %v2686
        %v2847 = vpack.c.b16 %v2703, %v2687
        %v2848 = vpack.c.b16 %v2704, %v2688
        %v2849 = vpack.c.b16 %v2705, %v2689
        %v2850 = vpack.c.b16 %v2706, %v2690
        %v2851 = vpack.c.b16 %v2723, %v2707
        %v2852 = vpack.c.b16 %v2724, %v2708
        %v2853 = vpack.c.b16 %v2725, %v2709
        %v2854 = vpack.c.b16 %v2726, %v2710
        %v2855 = vpack.c.b16 %v2727, %v2711
        %v2856 = vpack.c.b16 %v2728, %v2712
        %v2857 = vpack.c.b16 %v2729, %v2713
        %v2858 = vpack.c.b16 %v2730, %v2714
        %v2859 = vpack.c.b16 %v2731, %v2715
        %v2860 = vpack.c.b16 %v2732, %v2716
        %v2861 = vpack.c.b16 %v2733, %v2717
        %v2862 = vpack.c.b16 %v2734, %v2718
        %v2863 = vpack.c.b16 %v2735, %v2719
        %v2864 = vpack.c.b16 %v2736, %v2720
        %v2865 = vpack.c.b16 %v2737, %v2721
        %v2866 = vpack.c.b16 %v2738, %v2722
        %2995 = vmatprep.subr.bf16.mxu0 %v2852
        %2996 = vmatpush1.bf16.msra.mxu0 %v2851
        %2997 = vmatprep.subr.bf16.mxu0 %v2836
        %2998 = vmatpush1.bf16.msra.mxu0 %v2835
        %2999 = vmatprep.subr.bf16.mxu0 %v2820
        %3000 = vmatpush1.bf16.msra.mxu0 %v2819
        %3001 = vmatprep.subr.bf16.mxu0 %v2804
        %3002 = vmatpush1.bf16.msra.mxu0 %v2803
        %3003 = vmatprep.subr.bf16.mxu0 %v2788
        %3004 = vmatpush1.bf16.msra.mxu0 %v2787
        %3005 = vmatprep.subr.bf16.mxu0 %v2772
        %3006 = vmatpush1.bf16.msra.mxu0 %v2771
        %3007 = vmatprep.subr.bf16.mxu0 %v2756
        %3008 = vmatpush1.bf16.msra.mxu0 %v2755
        %3009 = vmatprep.subr.bf16.mxu0 %v2740
        %3010 = vmatpush1.bf16.msra.mxu0 %v2739
        %3011 = vmatprep.subr.bf16.mxu0 0
        %3012 = vmatpush2.bf16.msra.mxu0 0
        %3013 = vmatprep.subr.bf16.mxu0 0
        %3014 = vmatpush2.bf16.msra.mxu0 0
        %3015 = vmatprep.subr.bf16.mxu0 0
        %3016 = vmatpush2.bf16.msra.mxu0 0
        %3017 = vmatprep.subr.bf16.mxu0 0
        %3018 = vmatpush2.bf16.msra.mxu0 0
        %3019 = vmatprep.subr.bf16.mxu0 0
        %3020 = vmatpush2.bf16.msra.mxu0 0
        %3021 = vmatprep.subr.bf16.mxu0 0
        %3022 = vmatpush2.bf16.msra.mxu0 0
        %3023 = vmatprep.subr.bf16.mxu0 0
        %3024 = vmatpush2.bf16.msra.mxu0 0
        %3025 = vmatprep.subr.bf16.mxu0 0
        %3026 = vmatpush2.bf16.msra.mxu0 0
        %3027 = vmatprep.mubr.bf16.mxu0 0
        %3028 = vmatmul.mubr.bf16.gmra.mxu0 %v2138
        %v3029 = vpop.f32.mrf.mxu0
        %v3030 = vadd.f32 %v2278, %v3029
        %v3031 = vpop.f32.mrf.mxu0
        %v3032 = vadd.f32 %v2282, %v3031
        %v3033 = vpop.f32.mrf.mxu0
        %v3034 = vadd.f32 %v2278, %v3033
        %v3035 = vpop.f32.mrf.mxu0
        %v3036 = vadd.f32 %v2282, %v3035
        %3037 = vdwg.mxu0
        %3038 = vmatprep.subr.bf16.mxu0 %v2854
        %3039 = vmatpush1.bf16.msra.mxu0 %v2853
        %3040 = vmatprep.subr.bf16.mxu0 %v2838
        %3041 = vmatpush1.bf16.msra.mxu0 %v2837
        %3042 = vmatprep.subr.bf16.mxu0 %v2822
        %3043 = vmatpush1.bf16.msra.mxu0 %v2821
        %3044 = vmatprep.subr.bf16.mxu0 %v2806
        %3045 = vmatpush1.bf16.msra.mxu0 %v2805
        %3046 = vmatprep.subr.bf16.mxu0 %v2790
        %3047 = vmatpush1.bf16.msra.mxu0 %v2789
        %3048 = vmatprep.subr.bf16.mxu0 %v2774
        %3049 = vmatpush1.bf16.msra.mxu0 %v2773
        %3050 = vmatprep.subr.bf16.mxu0 %v2758
        %3051 = vmatpush1.bf16.msra.mxu0 %v2757
        %3052 = vmatprep.subr.bf16.mxu0 %v2742
        %3053 = vmatpush1.bf16.msra.mxu0 %v2741
        %3054 = vmatprep.subr.bf16.mxu0 0
        %3055 = vmatpush2.bf16.msra.mxu0 0
        %3056 = vmatprep.subr.bf16.mxu0 0
        %3057 = vmatpush2.bf16.msra.mxu0 0
        %3058 = vmatprep.subr.bf16.mxu0 0
        %3059 = vmatpush2.bf16.msra.mxu0 0
        %3060 = vmatprep.subr.bf16.mxu0 0
        %3061 = vmatpush2.bf16.msra.mxu0 0
        %3062 = vmatprep.subr.bf16.mxu0 0
        %3063 = vmatpush2.bf16.msra.mxu0 0
        %3064 = vmatprep.subr.bf16.mxu0 0
        %3065 = vmatpush2.bf16.msra.mxu0 0
        %3066 = vmatprep.subr.bf16.mxu0 0
        %3067 = vmatpush2.bf16.msra.mxu0 0
        %3068 = vmatprep.subr.bf16.mxu0 0
        %3069 = vmatpush2.bf16.msra.mxu0 0
        %3070 = vmatprep.mubr.bf16.mxu0 0
        %3071 = vmatmul.mubr.bf16.gmra.mxu0 %v2138
        %v3072 = vpop.f32.mrf.mxu0
        %v3073 = vadd.f32 %v2286, %v3072
        %v3074 = vpop.f32.mrf.mxu0
        %v3075 = vadd.f32 %v2290, %v3074
        %v3076 = vpop.f32.mrf.mxu0
        %v3077 = vadd.f32 %v2286, %v3076
        %v3078 = vpop.f32.mrf.mxu0
        %v3079 = vadd.f32 %v2290, %v3078
        %3080 = vdwg.mxu0
        %3081 = vmatprep.subr.bf16.mxu0 %v2856
        %3082 = vmatpush1.bf16.msra.mxu0 %v2855
        %3083 = vmatprep.subr.bf16.mxu0 %v2840
        %3084 = vmatpush1.bf16.msra.mxu0 %v2839
        %3085 = vmatprep.subr.bf16.mxu0 %v2824
        %3086 = vmatpush1.bf16.msra.mxu0 %v2823
        %3087 = vmatprep.subr.bf16.mxu0 %v2808
        %3088 = vmatpush1.bf16.msra.mxu0 %v2807
        %3089 = vmatprep.subr.bf16.mxu0 %v2792
        %3090 = vmatpush1.bf16.msra.mxu0 %v2791
        %3091 = vmatprep.subr.bf16.mxu0 %v2776
        %3092 = vmatpush1.bf16.msra.mxu0 %v2775
        %3093 = vmatprep.subr.bf16.mxu0 %v2760
        %3094 = vmatpush1.bf16.msra.mxu0 %v2759
        %3095 = vmatprep.subr.bf16.mxu0 %v2744
        %3096 = vmatpush1.bf16.msra.mxu0 %v2743
        %3097 = vmatprep.subr.bf16.mxu0 0
        %3098 = vmatpush2.bf16.msra.mxu0 0
        %3099 = vmatprep.subr.bf16.mxu0 0
        %3100 = vmatpush2.bf16.msra.mxu0 0
        %3101 = vmatprep.subr.bf16.mxu0 0
        %3102 = vmatpush2.bf16.msra.mxu0 0
        %3103 = vmatprep.subr.bf16.mxu0 0
        %3104 = vmatpush2.bf16.msra.mxu0 0
        %3105 = vmatprep.subr.bf16.mxu0 0
        %3106 = vmatpush2.bf16.msra.mxu0 0
        %3107 = vmatprep.subr.bf16.mxu0 0
        %3108 = vmatpush2.bf16.msra.mxu0 0
        %3109 = vmatprep.subr.bf16.mxu0 0
        %3110 = vmatpush2.bf16.msra.mxu0 0
        %3111 = vmatprep.subr.bf16.mxu0 0
        %3112 = vmatpush2.bf16.msra.mxu0 0
        %3113 = vmatprep.mubr.bf16.mxu0 0
        %3114 = vmatmul.mubr.bf16.gmra.mxu0 %v2138
        %v3115 = vpop.f32.mrf.mxu0
        %v3116 = vadd.f32 %v2294, %v3115
        %v3117 = vpop.f32.mrf.mxu0
        %v3118 = vadd.f32 %v2298, %v3117
        %v3119 = vpop.f32.mrf.mxu0
        %v3120 = vadd.f32 %v2294, %v3119
        %v3121 = vpop.f32.mrf.mxu0
        %v3122 = vadd.f32 %v2298, %v3121
        %3123 = vdwg.mxu0
        %3124 = vmatprep.subr.bf16.mxu0 %v2858
        %3125 = vmatpush1.bf16.msra.mxu0 %v2857
        %3126 = vmatprep.subr.bf16.mxu0 %v2842
        %3127 = vmatpush1.bf16.msra.mxu0 %v2841
        %3128 = vmatprep.subr.bf16.mxu0 %v2826
        %3129 = vmatpush1.bf16.msra.mxu0 %v2825
        %3130 = vmatprep.subr.bf16.mxu0 %v2810
        %3131 = vmatpush1.bf16.msra.mxu0 %v2809
        %3132 = vmatprep.subr.bf16.mxu0 %v2794
        %3133 = vmatpush1.bf16.msra.mxu0 %v2793
        %3134 = vmatprep.subr.bf16.mxu0 %v2778
        %3135 = vmatpush1.bf16.msra.mxu0 %v2777
        %3136 = vmatprep.subr.bf16.mxu0 %v2762
        %3137 = vmatpush1.bf16.msra.mxu0 %v2761
        %3138 = vmatprep.subr.bf16.mxu0 %v2746
        %3139 = vmatpush1.bf16.msra.mxu0 %v2745
        %3140 = vmatprep.subr.bf16.mxu0 0
        %3141 = vmatpush2.bf16.msra.mxu0 0
        %3142 = vmatprep.subr.bf16.mxu0 0
        %3143 = vmatpush2.bf16.msra.mxu0 0
        %3144 = vmatprep.subr.bf16.mxu0 0
        %3145 = vmatpush2.bf16.msra.mxu0 0
        %3146 = vmatprep.subr.bf16.mxu0 0
        %3147 = vmatpush2.bf16.msra.mxu0 0
        %3148 = vmatprep.subr.bf16.mxu0 0
        %3149 = vmatpush2.bf16.msra.mxu0 0
        %3150 = vmatprep.subr.bf16.mxu0 0
        %3151 = vmatpush2.bf16.msra.mxu0 0
        %3152 = vmatprep.subr.bf16.mxu0 0
        %3153 = vmatpush2.bf16.msra.mxu0 0
        %3154 = vmatprep.subr.bf16.mxu0 0
        %3155 = vmatpush2.bf16.msra.mxu0 0
        %3156 = vmatprep.mubr.bf16.mxu0 0
        %3157 = vmatmul.mubr.bf16.gmra.mxu0 %v2138
        %v3158 = vpop.f32.mrf.mxu0
        %v3159 = vadd.f32 %v2302, %v3158
        %v3160 = vpop.f32.mrf.mxu0
        %v3161 = vadd.f32 %v2306, %v3160
        %v3162 = vpop.f32.mrf.mxu0
        %v3163 = vadd.f32 %v2302, %v3162
        %v3164 = vpop.f32.mrf.mxu0
        %v3165 = vadd.f32 %v2306, %v3164
        %3166 = vdwg.mxu0
        %3167 = vmatprep.subr.bf16.mxu0 %v2860
        %3168 = vmatpush1.bf16.msra.mxu0 %v2859
        %3169 = vmatprep.subr.bf16.mxu0 %v2844
        %3170 = vmatpush1.bf16.msra.mxu0 %v2843
        %3171 = vmatprep.subr.bf16.mxu0 %v2828
        %3172 = vmatpush1.bf16.msra.mxu0 %v2827
        %3173 = vmatprep.subr.bf16.mxu0 %v2812
        %3174 = vmatpush1.bf16.msra.mxu0 %v2811
        %3175 = vmatprep.subr.bf16.mxu0 %v2796
        %3176 = vmatpush1.bf16.msra.mxu0 %v2795
        %3177 = vmatprep.subr.bf16.mxu0 %v2780
        %3178 = vmatpush1.bf16.msra.mxu0 %v2779
        %3179 = vmatprep.subr.bf16.mxu0 %v2764
        %3180 = vmatpush1.bf16.msra.mxu0 %v2763
        %3181 = vmatprep.subr.bf16.mxu0 %v2748
        %3182 = vmatpush1.bf16.msra.mxu0 %v2747
        %3183 = vmatprep.subr.bf16.mxu0 0
        %3184 = vmatpush2.bf16.msra.mxu0 0
        %3185 = vmatprep.subr.bf16.mxu0 0
        %3186 = vmatpush2.bf16.msra.mxu0 0
        %3187 = vmatprep.subr.bf16.mxu0 0
        %3188 = vmatpush2.bf16.msra.mxu0 0
        %3189 = vmatprep.subr.bf16.mxu0 0
        %3190 = vmatpush2.bf16.msra.mxu0 0
        %3191 = vmatprep.subr.bf16.mxu0 0
        %3192 = vmatpush2.bf16.msra.mxu0 0
        %3193 = vmatprep.subr.bf16.mxu0 0
        %3194 = vmatpush2.bf16.msra.mxu0 0
        %3195 = vmatprep.subr.bf16.mxu0 0
        %3196 = vmatpush2.bf16.msra.mxu0 0
        %3197 = vmatprep.subr.bf16.mxu0 0
        %3198 = vmatpush2.bf16.msra.mxu0 0
        %3199 = vmatprep.mubr.bf16.mxu0 0
        %3200 = vmatmul.mubr.bf16.gmra.mxu0 %v2138
        %v3201 = vpop.f32.mrf.mxu0
        %v3202 = vadd.f32 %v2310, %v3201
        %v3203 = vpop.f32.mrf.mxu0
        %v3204 = vadd.f32 %v2314, %v3203
        %v3205 = vpop.f32.mrf.mxu0
        %v3206 = vadd.f32 %v2310, %v3205
        %v3207 = vpop.f32.mrf.mxu0
        %v3208 = vadd.f32 %v2314, %v3207
        %3209 = vdwg.mxu0
        %3210 = vmatprep.subr.bf16.mxu0 %v2862
        %3211 = vmatpush1.bf16.msra.mxu0 %v2861
        %3212 = vmatprep.subr.bf16.mxu0 %v2846
        %3213 = vmatpush1.bf16.msra.mxu0 %v2845
        %3214 = vmatprep.subr.bf16.mxu0 %v2830
        %3215 = vmatpush1.bf16.msra.mxu0 %v2829
        %3216 = vmatprep.subr.bf16.mxu0 %v2814
        %3217 = vmatpush1.bf16.msra.mxu0 %v2813
        %3218 = vmatprep.subr.bf16.mxu0 %v2798
        %3219 = vmatpush1.bf16.msra.mxu0 %v2797
        %3220 = vmatprep.subr.bf16.mxu0 %v2782
        %3221 = vmatpush1.bf16.msra.mxu0 %v2781
        %3222 = vmatprep.subr.bf16.mxu0 %v2766
        %3223 = vmatpush1.bf16.msra.mxu0 %v2765
        %3224 = vmatprep.subr.bf16.mxu0 %v2750
        %3225 = vmatpush1.bf16.msra.mxu0 %v2749
        %3226 = vmatprep.subr.bf16.mxu0 0
        %3227 = vmatpush2.bf16.msra.mxu0 0
        %3228 = vmatprep.subr.bf16.mxu0 0
        %3229 = vmatpush2.bf16.msra.mxu0 0
        %3230 = vmatprep.subr.bf16.mxu0 0
        %3231 = vmatpush2.bf16.msra.mxu0 0
        %3232 = vmatprep.subr.bf16.mxu0 0
        %3233 = vmatpush2.bf16.msra.mxu0 0
        %3234 = vmatprep.subr.bf16.mxu0 0
        %3235 = vmatpush2.bf16.msra.mxu0 0
        %3236 = vmatprep.subr.bf16.mxu0 0
        %3237 = vmatpush2.bf16.msra.mxu0 0
        %3238 = vmatprep.subr.bf16.mxu0 0
        %3239 = vmatpush2.bf16.msra.mxu0 0
        %3240 = vmatprep.subr.bf16.mxu0 0
        %3241 = vmatpush2.bf16.msra.mxu0 0
        %3242 = vmatprep.mubr.bf16.mxu0 0
        %3243 = vmatmul.mubr.bf16.gmra.mxu0 %v2138
        %v3244 = vpop.f32.mrf.mxu0
        %v3245 = vadd.f32 %v2318, %v3244
        %v3246 = vpop.f32.mrf.mxu0
        %v3247 = vadd.f32 %v2322, %v3246
        %v3248 = vpop.f32.mrf.mxu0
        %v3249 = vadd.f32 %v2318, %v3248
        %v3250 = vpop.f32.mrf.mxu0
        %v3251 = vadd.f32 %v2322, %v3250
        %3252 = vdwg.mxu0
        %3253 = vmatprep.subr.bf16.mxu0 %v2864
        %3254 = vmatpush1.bf16.msra.mxu0 %v2863
        %3255 = vmatprep.subr.bf16.mxu0 %v2848
        %3256 = vmatpush1.bf16.msra.mxu0 %v2847
        %3257 = vmatprep.subr.bf16.mxu0 %v2832
        %3258 = vmatpush1.bf16.msra.mxu0 %v2831
        %3259 = vmatprep.subr.bf16.mxu0 %v2816
        %3260 = vmatpush1.bf16.msra.mxu0 %v2815
        %3261 = vmatprep.subr.bf16.mxu0 %v2800
        %3262 = vmatpush1.bf16.msra.mxu0 %v2799
        %3263 = vmatprep.subr.bf16.mxu0 %v2784
        %3264 = vmatpush1.bf16.msra.mxu0 %v2783
        %3265 = vmatprep.subr.bf16.mxu0 %v2768
        %3266 = vmatpush1.bf16.msra.mxu0 %v2767
        %3267 = vmatprep.subr.bf16.mxu0 %v2752
        %3268 = vmatpush1.bf16.msra.mxu0 %v2751
        %3269 = vmatprep.subr.bf16.mxu0 0
        %3270 = vmatpush2.bf16.msra.mxu0 0
        %3271 = vmatprep.subr.bf16.mxu0 0
        %3272 = vmatpush2.bf16.msra.mxu0 0
        %3273 = vmatprep.subr.bf16.mxu0 0
        %3274 = vmatpush2.bf16.msra.mxu0 0
        %3275 = vmatprep.subr.bf16.mxu0 0
        %3276 = vmatpush2.bf16.msra.mxu0 0
        %3277 = vmatprep.subr.bf16.mxu0 0
        %3278 = vmatpush2.bf16.msra.mxu0 0
        %3279 = vmatprep.subr.bf16.mxu0 0
        %3280 = vmatpush2.bf16.msra.mxu0 0
        %3281 = vmatprep.subr.bf16.mxu0 0
        %3282 = vmatpush2.bf16.msra.mxu0 0
        %3283 = vmatprep.subr.bf16.mxu0 0
        %3284 = vmatpush2.bf16.msra.mxu0 0
        %3285 = vmatprep.mubr.bf16.mxu0 0
        %3286 = vmatmul.mubr.bf16.gmra.mxu0 %v2138
        %v3287 = vpop.f32.mrf.mxu0
        %v3288 = vadd.f32 %v2326, %v3287
        %v3289 = vpop.f32.mrf.mxu0
        %v3290 = vadd.f32 %v2330, %v3289
        %v3291 = vpop.f32.mrf.mxu0
        %v3292 = vadd.f32 %v2326, %v3291
        %v3293 = vpop.f32.mrf.mxu0
        %v3294 = vadd.f32 %v2330, %v3293
        %3295 = vdwg.mxu0
        %3296 = vmatprep.subr.bf16.mxu0 %v2866
        %3297 = vmatpush1.bf16.msra.mxu0 %v2865
        %3298 = vmatprep.subr.bf16.mxu0 %v2850
        %3299 = vmatpush1.bf16.msra.mxu0 %v2849
        %3300 = vmatprep.subr.bf16.mxu0 %v2834
        %3301 = vmatpush1.bf16.msra.mxu0 %v2833
        %3302 = vmatprep.subr.bf16.mxu0 %v2818
        %3303 = vmatpush1.bf16.msra.mxu0 %v2817
        %3304 = vmatprep.subr.bf16.mxu0 %v2802
        %3305 = vmatpush1.bf16.msra.mxu0 %v2801
        %3306 = vmatprep.subr.bf16.mxu0 %v2786
        %3307 = vmatpush1.bf16.msra.mxu0 %v2785
        %3308 = vmatprep.subr.bf16.mxu0 %v2770
        %3309 = vmatpush1.bf16.msra.mxu0 %v2769
        %3310 = vmatprep.subr.bf16.mxu0 %v2754
        %3311 = vmatpush1.bf16.msra.mxu0 %v2753
        %3312 = vmatprep.subr.bf16.mxu0 0
        %3313 = vmatpush2.bf16.msra.mxu0 0
        %3314 = vmatprep.subr.bf16.mxu0 0
        %3315 = vmatpush2.bf16.msra.mxu0 0
        %3316 = vmatprep.subr.bf16.mxu0 0
        %3317 = vmatpush2.bf16.msra.mxu0 0
        %3318 = vmatprep.subr.bf16.mxu0 0
        %3319 = vmatpush2.bf16.msra.mxu0 0
        %3320 = vmatprep.subr.bf16.mxu0 0
        %3321 = vmatpush2.bf16.msra.mxu0 0
        %3322 = vmatprep.subr.bf16.mxu0 0
        %3323 = vmatpush2.bf16.msra.mxu0 0
        %3324 = vmatprep.subr.bf16.mxu0 0
        %3325 = vmatpush2.bf16.msra.mxu0 0
        %3326 = vmatprep.subr.bf16.mxu0 0
        %3327 = vmatpush2.bf16.msra.mxu0 0
        %3328 = vmatprep.mubr.bf16.mxu0 0
        %3329 = vmatmul.mubr.bf16.gmra.mxu0 %v2138
        %v3330 = vpop.f32.mrf.mxu0
        %v3331 = vadd.f32 %v2334, %v3330
        %v3332 = vpop.f32.mrf.mxu0
        %v3333 = vadd.f32 %v2338, %v3332
        %v3334 = vpop.f32.mrf.mxu0
        %v3335 = vadd.f32 %v2334, %v3334
        %v3336 = vpop.f32.mrf.mxu0
        %v3337 = vadd.f32 %v2338, %v3336
        %3338 = vdwg.mxu0
        %v3339 = vmax.f32 %v3030, 0.0
        %v3340 = vmax.f32 %v3032, 0.0
        %v3341 = vmax.f32 %v3073, 0.0
        %v3342 = vmax.f32 %v3075, 0.0
        %v3343 = vmax.f32 %v3116, 0.0
        %v3344 = vmax.f32 %v3118, 0.0
        %v3345 = vmax.f32 %v3159, 0.0
        %v3346 = vmax.f32 %v3161, 0.0
        %v3347 = vmax.f32 %v3202, 0.0
        %v3348 = vmax.f32 %v3204, 0.0
        %v3349 = vmax.f32 %v3245, 0.0
        %v3350 = vmax.f32 %v3247, 0.0
        %v3351 = vmax.f32 %v3288, 0.0
        %v3352 = vmax.f32 %v3290, 0.0
        %v3353 = vmax.f32 %v3331, 0.0
        %v3354 = vmax.f32 %v3333, 0.0
        %v3355 = vmax.f32 %v3034, 0.0
        %v3356 = vmax.f32 %v3036, 0.0
        %v3357 = vmax.f32 %v3077, 0.0
        %v3358 = vmax.f32 %v3079, 0.0
        %v3359 = vmax.f32 %v3120, 0.0
        %v3360 = vmax.f32 %v3122, 0.0
        %v3361 = vmax.f32 %v3163, 0.0
        %v3362 = vmax.f32 %v3165, 0.0
        %v3363 = vmax.f32 %v3206, 0.0
        %v3364 = vmax.f32 %v3208, 0.0
        %v3365 = vmax.f32 %v3249, 0.0
        %v3366 = vmax.f32 %v3251, 0.0
        %v3367 = vmax.f32 %v3292, 0.0
        %v3368 = vmax.f32 %v3294, 0.0
        %v3369 = vmax.f32 %v3335, 0.0
        %v3370 = vmax.f32 %v3337, 0.0
        %v3371 = vpack.c.bf16 %v3355, %v3339
        %v3372 = vpack.c.bf16 %v3356, %v3340
        %v3373 = vpack.c.bf16 %v3357, %v3341
        %v3374 = vpack.c.bf16 %v3358, %v3342
        %v3375 = vpack.c.bf16 %v3359, %v3343
        %v3376 = vpack.c.bf16 %v3360, %v3344
        %v3377 = vpack.c.bf16 %v3361, %v3345
        %v3378 = vpack.c.bf16 %v3362, %v3346
        %v3379 = vpack.c.bf16 %v3363, %v3347
        %v3380 = vpack.c.bf16 %v3364, %v3348
        %v3381 = vpack.c.bf16 %v3365, %v3349
        %v3382 = vpack.c.bf16 %v3366, %v3350
        %v3383 = vpack.c.bf16 %v3367, %v3351
        %v3384 = vpack.c.bf16 %v3368, %v3352
        %v3385 = vpack.c.bf16 %v3369, %v3353
        %v3386 = vpack.c.bf16 %v3370, %v3354
        %s3387 = smul.addr %s2139, 4
        %s3388 = scalar_lea.vmem [#allocation15], %s3387
        %v3389 = vld [vmem:[%s3388] sm:$0xf]
        %v3390 = vld [vmem:[%s3388 + $0x4] sm:$0xf]
        %v3391 = vld [vmem:[%s3388 + $0x8] sm:$0xf]
        %v3392 = vld [vmem:[%s3388 + $0xc] sm:$0xf]
        %v3393 = vld [vmem:[%s3388 + $0x10] sm:$0xf]
        %v3394 = vld [vmem:[%s3388 + $0x14] sm:$0xf]
        %v3395 = vld [vmem:[%s3388 + $0x18] sm:$0xf]
        %v3396 = vld [vmem:[%s3388 + $0x1c] sm:$0xf]
        %v3397 = vld [vmem:[%s3388 + $0x20] sm:$0xf]
        %v3398 = vld [vmem:[%s3388 + $0x24] sm:$0xf]
        %v3399 = vld [vmem:[%s3388 + $0x28] sm:$0xf]
        %v3400 = vld [vmem:[%s3388 + $0x2c] sm:$0xf]
        %v3401 = vld [vmem:[%s3388 + $0x30] sm:$0xf]
        %v3402 = vld [vmem:[%s3388 + $0x34] sm:$0xf]
        %v3403 = vld [vmem:[%s3388 + $0x38] sm:$0xf]
        %v3404 = vld [vmem:[%s3388 + $0x3c] sm:$0xf]
        %v3405 = vld [vmem:[%s3388 + $0x40] sm:$0xf]
        %v3406 = vld [vmem:[%s3388 + $0x44] sm:$0xf]
        %v3407 = vld [vmem:[%s3388 + $0x48] sm:$0xf]
        %v3408 = vld [vmem:[%s3388 + $0x4c] sm:$0xf]
        %v3409 = vld [vmem:[%s3388 + $0x50] sm:$0xf]
        %v3410 = vld [vmem:[%s3388 + $0x54] sm:$0xf]
        %v3411 = vld [vmem:[%s3388 + $0x58] sm:$0xf]
        %v3412 = vld [vmem:[%s3388 + $0x5c] sm:$0xf]
        %v3413 = vld [vmem:[%s3388 + $0x60] sm:$0xf]
        %v3414 = vld [vmem:[%s3388 + $0x64] sm:$0xf]
        %v3415 = vld [vmem:[%s3388 + $0x68] sm:$0xf]
        %v3416 = vld [vmem:[%s3388 + $0x6c] sm:$0xf]
        %v3417 = vld [vmem:[%s3388 + $0x70] sm:$0xf]
        %v3418 = vld [vmem:[%s3388 + $0x74] sm:$0xf]
        %v3419 = vld [vmem:[%s3388 + $0x78] sm:$0xf]
        %v3420 = vld [vmem:[%s3388 + $0x7c] sm:$0xf]
        %v3421 = vld [vmem:[%s3388 + $0x80] sm:$0xf]
        %v3422 = vld [vmem:[%s3388 + $0x84] sm:$0xf]
        %v3423 = vld [vmem:[%s3388 + $0x88] sm:$0xf]
        %v3424 = vld [vmem:[%s3388 + $0x8c] sm:$0xf]
        %v3425 = vld [vmem:[%s3388 + $0x90] sm:$0xf]
        %v3426 = vld [vmem:[%s3388 + $0x94] sm:$0xf]
        %v3427 = vld [vmem:[%s3388 + $0x98] sm:$0xf]
        %v3428 = vld [vmem:[%s3388 + $0x9c] sm:$0xf]
        %v3429 = vld [vmem:[%s3388 + $0xa0] sm:$0xf]
        %v3430 = vld [vmem:[%s3388 + $0xa4] sm:$0xf]
        %v3431 = vld [vmem:[%s3388 + $0xa8] sm:$0xf]
        %v3432 = vld [vmem:[%s3388 + $0xac] sm:$0xf]
        %v3433 = vld [vmem:[%s3388 + $0xb0] sm:$0xf]
        %v3434 = vld [vmem:[%s3388 + $0xb4] sm:$0xf]
        %v3435 = vld [vmem:[%s3388 + $0xb8] sm:$0xf]
        %v3436 = vld [vmem:[%s3388 + $0xbc] sm:$0xf]
        %v3437 = vld [vmem:[%s3388 + $0xc0] sm:$0xf]
        %v3438 = vld [vmem:[%s3388 + $0xc4] sm:$0xf]
        %v3439 = vld [vmem:[%s3388 + $0xc8] sm:$0xf]
        %v3440 = vld [vmem:[%s3388 + $0xcc] sm:$0xf]
        %v3441 = vld [vmem:[%s3388 + $0xd0] sm:$0xf]
        %v3442 = vld [vmem:[%s3388 + $0xd4] sm:$0xf]
        %v3443 = vld [vmem:[%s3388 + $0xd8] sm:$0xf]
        %v3444 = vld [vmem:[%s3388 + $0xdc] sm:$0xf]
        %v3445 = vld [vmem:[%s3388 + $0xe0] sm:$0xf]
        %v3446 = vld [vmem:[%s3388 + $0xe4] sm:$0xf]
        %v3447 = vld [vmem:[%s3388 + $0xe8] sm:$0xf]
        %v3448 = vld [vmem:[%s3388 + $0xec] sm:$0xf]
        %v3449 = vld [vmem:[%s3388 + $0xf0] sm:$0xf]
        %v3450 = vld [vmem:[%s3388 + $0xf4] sm:$0xf]
        %v3451 = vld [vmem:[%s3388 + $0xf8] sm:$0xf]
        %v3452 = vld [vmem:[%s3388 + $0xfc] sm:$0xf]
        %v3453 = vld [vmem:[%s3388 + $0x100] sm:$0xf]
        %v3454 = vld [vmem:[%s3388 + $0x104] sm:$0xf]
        %v3455 = vld [vmem:[%s3388 + $0x108] sm:$0xf]
        %v3456 = vld [vmem:[%s3388 + $0x10c] sm:$0xf]
        %v3457 = vld [vmem:[%s3388 + $0x110] sm:$0xf]
        %v3458 = vld [vmem:[%s3388 + $0x114] sm:$0xf]
        %v3459 = vld [vmem:[%s3388 + $0x118] sm:$0xf]
        %v3460 = vld [vmem:[%s3388 + $0x11c] sm:$0xf]
        %v3461 = vld [vmem:[%s3388 + $0x120] sm:$0xf]
        %v3462 = vld [vmem:[%s3388 + $0x124] sm:$0xf]
        %v3463 = vld [vmem:[%s3388 + $0x128] sm:$0xf]
        %v3464 = vld [vmem:[%s3388 + $0x12c] sm:$0xf]
        %v3465 = vld [vmem:[%s3388 + $0x130] sm:$0xf]
        %v3466 = vld [vmem:[%s3388 + $0x134] sm:$0xf]
        %v3467 = vld [vmem:[%s3388 + $0x138] sm:$0xf]
        %v3468 = vld [vmem:[%s3388 + $0x13c] sm:$0xf]
        %v3469 = vld [vmem:[%s3388 + $0x140] sm:$0xf]
        %v3470 = vld [vmem:[%s3388 + $0x144] sm:$0xf]
        %v3471 = vld [vmem:[%s3388 + $0x148] sm:$0xf]
        %v3472 = vld [vmem:[%s3388 + $0x14c] sm:$0xf]
        %v3473 = vld [vmem:[%s3388 + $0x150] sm:$0xf]
        %v3474 = vld [vmem:[%s3388 + $0x154] sm:$0xf]
        %v3475 = vld [vmem:[%s3388 + $0x158] sm:$0xf]
        %v3476 = vld [vmem:[%s3388 + $0x15c] sm:$0xf]
        %v3477 = vld [vmem:[%s3388 + $0x160] sm:$0xf]
        %v3478 = vld [vmem:[%s3388 + $0x164] sm:$0xf]
        %v3479 = vld [vmem:[%s3388 + $0x168] sm:$0xf]
        %v3480 = vld [vmem:[%s3388 + $0x16c] sm:$0xf]
        %v3481 = vld [vmem:[%s3388 + $0x170] sm:$0xf]
        %v3482 = vld [vmem:[%s3388 + $0x174] sm:$0xf]
        %v3483 = vld [vmem:[%s3388 + $0x178] sm:$0xf]
        %v3484 = vld [vmem:[%s3388 + $0x17c] sm:$0xf]
        %v3485 = vld [vmem:[%s3388 + $0x180] sm:$0xf]
        %v3486 = vld [vmem:[%s3388 + $0x184] sm:$0xf]
        %v3487 = vld [vmem:[%s3388 + $0x188] sm:$0xf]
        %v3488 = vld [vmem:[%s3388 + $0x18c] sm:$0xf]
        %v3489 = vld [vmem:[%s3388 + $0x190] sm:$0xf]
        %v3490 = vld [vmem:[%s3388 + $0x194] sm:$0xf]
        %v3491 = vld [vmem:[%s3388 + $0x198] sm:$0xf]
        %v3492 = vld [vmem:[%s3388 + $0x19c] sm:$0xf]
        %v3493 = vld [vmem:[%s3388 + $0x1a0] sm:$0xf]
        %v3494 = vld [vmem:[%s3388 + $0x1a4] sm:$0xf]
        %v3495 = vld [vmem:[%s3388 + $0x1a8] sm:$0xf]
        %v3496 = vld [vmem:[%s3388 + $0x1ac] sm:$0xf]
        %v3497 = vld [vmem:[%s3388 + $0x1b0] sm:$0xf]
        %v3498 = vld [vmem:[%s3388 + $0x1b4] sm:$0xf]
        %v3499 = vld [vmem:[%s3388 + $0x1b8] sm:$0xf]
        %v3500 = vld [vmem:[%s3388 + $0x1bc] sm:$0xf]
        %v3501 = vld [vmem:[%s3388 + $0x1c0] sm:$0xf]
        %v3502 = vld [vmem:[%s3388 + $0x1c4] sm:$0xf]
        %v3503 = vld [vmem:[%s3388 + $0x1c8] sm:$0xf]
        %v3504 = vld [vmem:[%s3388 + $0x1cc] sm:$0xf]
        %v3505 = vld [vmem:[%s3388 + $0x1d0] sm:$0xf]
        %v3506 = vld [vmem:[%s3388 + $0x1d4] sm:$0xf]
        %v3507 = vld [vmem:[%s3388 + $0x1d8] sm:$0xf]
        %v3508 = vld [vmem:[%s3388 + $0x1dc] sm:$0xf]
        %v3509 = vld [vmem:[%s3388 + $0x1e0] sm:$0xf]
        %v3510 = vld [vmem:[%s3388 + $0x1e4] sm:$0xf]
        %v3511 = vld [vmem:[%s3388 + $0x1e8] sm:$0xf]
        %v3512 = vld [vmem:[%s3388 + $0x1ec] sm:$0xf]
        %v3513 = vld [vmem:[%s3388 + $0x1f0] sm:$0xf]
        %v3514 = vld [vmem:[%s3388 + $0x1f4] sm:$0xf]
        %v3515 = vld [vmem:[%s3388 + $0x1f8] sm:$0xf]
        %v3516 = vld [vmem:[%s3388 + $0x1fc] sm:$0xf]
        %v3517 = vld [vmem:[%s3388 + $0x200] sm:$0xf]
        %v3518 = vld [vmem:[%s3388 + $0x204] sm:$0xf]
        %v3519 = vld [vmem:[%s3388 + $0x208] sm:$0xf]
        %v3520 = vld [vmem:[%s3388 + $0x20c] sm:$0xf]
        %v3521 = vld [vmem:[%s3388 + $0x210] sm:$0xf]
        %v3522 = vld [vmem:[%s3388 + $0x214] sm:$0xf]
        %v3523 = vld [vmem:[%s3388 + $0x218] sm:$0xf]
        %v3524 = vld [vmem:[%s3388 + $0x21c] sm:$0xf]
        %v3525 = vld [vmem:[%s3388 + $0x220] sm:$0xf]
        %v3526 = vld [vmem:[%s3388 + $0x224] sm:$0xf]
        %v3527 = vld [vmem:[%s3388 + $0x228] sm:$0xf]
        %v3528 = vld [vmem:[%s3388 + $0x22c] sm:$0xf]
        %v3529 = vld [vmem:[%s3388 + $0x230] sm:$0xf]
        %v3530 = vld [vmem:[%s3388 + $0x234] sm:$0xf]
        %v3531 = vld [vmem:[%s3388 + $0x238] sm:$0xf]
        %v3532 = vld [vmem:[%s3388 + $0x23c] sm:$0xf]
        %v3533 = vld [vmem:[%s3388 + $0x240] sm:$0xf]
        %v3534 = vld [vmem:[%s3388 + $0x244] sm:$0xf]
        %v3535 = vld [vmem:[%s3388 + $0x248] sm:$0xf]
        %v3536 = vld [vmem:[%s3388 + $0x24c] sm:$0xf]
        %v3537 = vld [vmem:[%s3388 + $0x250] sm:$0xf]
        %v3538 = vld [vmem:[%s3388 + $0x254] sm:$0xf]
        %v3539 = vld [vmem:[%s3388 + $0x258] sm:$0xf]
        %v3540 = vld [vmem:[%s3388 + $0x25c] sm:$0xf]
        %v3541 = vld [vmem:[%s3388 + $0x260] sm:$0xf]
        %v3542 = vld [vmem:[%s3388 + $0x264] sm:$0xf]
        %v3543 = vld [vmem:[%s3388 + $0x268] sm:$0xf]
        %v3544 = vld [vmem:[%s3388 + $0x26c] sm:$0xf]
        %v3545 = vld [vmem:[%s3388 + $0x270] sm:$0xf]
        %v3546 = vld [vmem:[%s3388 + $0x274] sm:$0xf]
        %v3547 = vld [vmem:[%s3388 + $0x278] sm:$0xf]
        %v3548 = vld [vmem:[%s3388 + $0x27c] sm:$0xf]
        %v3549 = vld [vmem:[%s3388 + $0x280] sm:$0xf]
        %v3550 = vld [vmem:[%s3388 + $0x284] sm:$0xf]
        %v3551 = vld [vmem:[%s3388 + $0x288] sm:$0xf]
        %v3552 = vld [vmem:[%s3388 + $0x28c] sm:$0xf]
        %v3553 = vld [vmem:[%s3388 + $0x290] sm:$0xf]
        %v3554 = vld [vmem:[%s3388 + $0x294] sm:$0xf]
        %v3555 = vld [vmem:[%s3388 + $0x298] sm:$0xf]
        %v3556 = vld [vmem:[%s3388 + $0x29c] sm:$0xf]
        %v3557 = vld [vmem:[%s3388 + $0x2a0] sm:$0xf]
        %v3558 = vld [vmem:[%s3388 + $0x2a4] sm:$0xf]
        %v3559 = vld [vmem:[%s3388 + $0x2a8] sm:$0xf]
        %v3560 = vld [vmem:[%s3388 + $0x2ac] sm:$0xf]
        %v3561 = vld [vmem:[%s3388 + $0x2b0] sm:$0xf]
        %v3562 = vld [vmem:[%s3388 + $0x2b4] sm:$0xf]
        %v3563 = vld [vmem:[%s3388 + $0x2b8] sm:$0xf]
        %v3564 = vld [vmem:[%s3388 + $0x2bc] sm:$0xf]
        %v3565 = vld [vmem:[%s3388 + $0x2c0] sm:$0xf]
        %v3566 = vld [vmem:[%s3388 + $0x2c4] sm:$0xf]
        %v3567 = vld [vmem:[%s3388 + $0x2c8] sm:$0xf]
        %v3568 = vld [vmem:[%s3388 + $0x2cc] sm:$0xf]
        %v3569 = vld [vmem:[%s3388 + $0x2d0] sm:$0xf]
        %v3570 = vld [vmem:[%s3388 + $0x2d4] sm:$0xf]
        %v3571 = vld [vmem:[%s3388 + $0x2d8] sm:$0xf]
        %v3572 = vld [vmem:[%s3388 + $0x2dc] sm:$0xf]
        %v3573 = vld [vmem:[%s3388 + $0x2e0] sm:$0xf]
        %v3574 = vld [vmem:[%s3388 + $0x2e4] sm:$0xf]
        %v3575 = vld [vmem:[%s3388 + $0x2e8] sm:$0xf]
        %v3576 = vld [vmem:[%s3388 + $0x2ec] sm:$0xf]
        %v3577 = vld [vmem:[%s3388 + $0x2f0] sm:$0xf]
        %v3578 = vld [vmem:[%s3388 + $0x2f4] sm:$0xf]
        %v3579 = vld [vmem:[%s3388 + $0x2f8] sm:$0xf]
        %v3580 = vld [vmem:[%s3388 + $0x2fc] sm:$0xf]
        %v3581 = vld [vmem:[%s3388 + $0x300] sm:$0xf]
        %v3582 = vld [vmem:[%s3388 + $0x304] sm:$0xf]
        %v3583 = vld [vmem:[%s3388 + $0x308] sm:$0xf]
        %v3584 = vld [vmem:[%s3388 + $0x30c] sm:$0xf]
        %v3585 = vld [vmem:[%s3388 + $0x310] sm:$0xf]
        %v3586 = vld [vmem:[%s3388 + $0x314] sm:$0xf]
        %v3587 = vld [vmem:[%s3388 + $0x318] sm:$0xf]
        %v3588 = vld [vmem:[%s3388 + $0x31c] sm:$0xf]
        %v3589 = vld [vmem:[%s3388 + $0x320] sm:$0xf]
        %v3590 = vld [vmem:[%s3388 + $0x324] sm:$0xf]
        %v3591 = vld [vmem:[%s3388 + $0x328] sm:$0xf]
        %v3592 = vld [vmem:[%s3388 + $0x32c] sm:$0xf]
        %v3593 = vld [vmem:[%s3388 + $0x330] sm:$0xf]
        %v3594 = vld [vmem:[%s3388 + $0x334] sm:$0xf]
        %v3595 = vld [vmem:[%s3388 + $0x338] sm:$0xf]
        %v3596 = vld [vmem:[%s3388 + $0x33c] sm:$0xf]
        %v3597 = vld [vmem:[%s3388 + $0x340] sm:$0xf]
        %v3598 = vld [vmem:[%s3388 + $0x344] sm:$0xf]
        %v3599 = vld [vmem:[%s3388 + $0x348] sm:$0xf]
        %v3600 = vld [vmem:[%s3388 + $0x34c] sm:$0xf]
        %v3601 = vld [vmem:[%s3388 + $0x350] sm:$0xf]
        %v3602 = vld [vmem:[%s3388 + $0x354] sm:$0xf]
        %v3603 = vld [vmem:[%s3388 + $0x358] sm:$0xf]
        %v3604 = vld [vmem:[%s3388 + $0x35c] sm:$0xf]
        %v3605 = vld [vmem:[%s3388 + $0x360] sm:$0xf]
        %v3606 = vld [vmem:[%s3388 + $0x364] sm:$0xf]
        %v3607 = vld [vmem:[%s3388 + $0x368] sm:$0xf]
        %v3608 = vld [vmem:[%s3388 + $0x36c] sm:$0xf]
        %v3609 = vld [vmem:[%s3388 + $0x370] sm:$0xf]
        %v3610 = vld [vmem:[%s3388 + $0x374] sm:$0xf]
        %v3611 = vld [vmem:[%s3388 + $0x378] sm:$0xf]
        %v3612 = vld [vmem:[%s3388 + $0x37c] sm:$0xf]
        %v3613 = vld [vmem:[%s3388 + $0x380] sm:$0xf]
        %v3614 = vld [vmem:[%s3388 + $0x384] sm:$0xf]
        %v3615 = vld [vmem:[%s3388 + $0x388] sm:$0xf]
        %v3616 = vld [vmem:[%s3388 + $0x38c] sm:$0xf]
        %v3617 = vld [vmem:[%s3388 + $0x390] sm:$0xf]
        %v3618 = vld [vmem:[%s3388 + $0x394] sm:$0xf]
        %v3619 = vld [vmem:[%s3388 + $0x398] sm:$0xf]
        %v3620 = vld [vmem:[%s3388 + $0x39c] sm:$0xf]
        %v3621 = vld [vmem:[%s3388 + $0x3a0] sm:$0xf]
        %v3622 = vld [vmem:[%s3388 + $0x3a4] sm:$0xf]
        %v3623 = vld [vmem:[%s3388 + $0x3a8] sm:$0xf]
        %v3624 = vld [vmem:[%s3388 + $0x3ac] sm:$0xf]
        %v3625 = vld [vmem:[%s3388 + $0x3b0] sm:$0xf]
        %v3626 = vld [vmem:[%s3388 + $0x3b4] sm:$0xf]
        %v3627 = vld [vmem:[%s3388 + $0x3b8] sm:$0xf]
        %v3628 = vld [vmem:[%s3388 + $0x3bc] sm:$0xf]
        %v3629 = vld [vmem:[%s3388 + $0x3c0] sm:$0xf]
        %v3630 = vld [vmem:[%s3388 + $0x3c4] sm:$0xf]
        %v3631 = vld [vmem:[%s3388 + $0x3c8] sm:$0xf]
        %v3632 = vld [vmem:[%s3388 + $0x3cc] sm:$0xf]
        %v3633 = vld [vmem:[%s3388 + $0x3d0] sm:$0xf]
        %v3634 = vld [vmem:[%s3388 + $0x3d4] sm:$0xf]
        %v3635 = vld [vmem:[%s3388 + $0x3d8] sm:$0xf]
        %v3636 = vld [vmem:[%s3388 + $0x3dc] sm:$0xf]
        %v3637 = vld [vmem:[%s3388 + $0x3e0] sm:$0xf]
        %v3638 = vld [vmem:[%s3388 + $0x3e4] sm:$0xf]
        %v3639 = vld [vmem:[%s3388 + $0x3e8] sm:$0xf]
        %v3640 = vld [vmem:[%s3388 + $0x3ec] sm:$0xf]
        %v3641 = vld [vmem:[%s3388 + $0x3f0] sm:$0xf]
        %v3642 = vld [vmem:[%s3388 + $0x3f4] sm:$0xf]
        %v3643 = vld [vmem:[%s3388 + $0x3f8] sm:$0xf]
        %v3644 = vld [vmem:[%s3388 + $0x3fc] sm:$0xf]
        %s3645 = scalar_lea.vmem %s12, %s39
        %v3646 = vld [vmem:[%s3645] sm:$0x1]
        %v3648 = vlaneseq
        %v3649 = vshrl.u32 %v3648, 7
        %v3650 = vsub.s32 0, %v3649
        %v3651 = vrot.slane %v3646, %v3650
        %v3909 = vunpack.c.l.b16 %v3389
        %v3910 = vunpack.c.l.b16 %v3390
        %v3911 = vunpack.c.l.b16 %v3391
        %v3912 = vunpack.c.l.b16 %v3392
        %v3913 = vunpack.c.l.b16 %v3393
        %v3914 = vunpack.c.l.b16 %v3394
        %v3915 = vunpack.c.l.b16 %v3395
        %v3916 = vunpack.c.l.b16 %v3396
        %v3917 = vunpack.c.l.b16 %v3397
        %v3918 = vunpack.c.l.b16 %v3398
        %v3919 = vunpack.c.l.b16 %v3399
        %v3920 = vunpack.c.l.b16 %v3400
        %v3921 = vunpack.c.l.b16 %v3401
        %v3922 = vunpack.c.l.b16 %v3402
        %v3923 = vunpack.c.l.b16 %v3403
        %v3924 = vunpack.c.l.b16 %v3404
        %v3925 = vunpack.c.l.b16 %v3405
        %v3926 = vunpack.c.l.b16 %v3406
        %v3927 = vunpack.c.l.b16 %v3407
        %v3928 = vunpack.c.l.b16 %v3408
        %v3929 = vunpack.c.l.b16 %v3409
        %v3930 = vunpack.c.l.b16 %v3410
        %v3931 = vunpack.c.l.b16 %v3411
        %v3932 = vunpack.c.l.b16 %v3412
        %v3933 = vunpack.c.l.b16 %v3413
        %v3934 = vunpack.c.l.b16 %v3414
        %v3935 = vunpack.c.l.b16 %v3415
        %v3936 = vunpack.c.l.b16 %v3416
        %v3937 = vunpack.c.l.b16 %v3417
        %v3938 = vunpack.c.l.b16 %v3418
        %v3939 = vunpack.c.l.b16 %v3419
        %v3940 = vunpack.c.l.b16 %v3420
        %v3941 = vunpack.c.l.b16 %v3421
        %v3942 = vunpack.c.l.b16 %v3422
        %v3943 = vunpack.c.l.b16 %v3423
        %v3944 = vunpack.c.l.b16 %v3424
        %v3945 = vunpack.c.l.b16 %v3425
        %v3946 = vunpack.c.l.b16 %v3426
        %v3947 = vunpack.c.l.b16 %v3427
        %v3948 = vunpack.c.l.b16 %v3428
        %v3949 = vunpack.c.l.b16 %v3429
        %v3950 = vunpack.c.l.b16 %v3430
        %v3951 = vunpack.c.l.b16 %v3431
        %v3952 = vunpack.c.l.b16 %v3432
        %v3953 = vunpack.c.l.b16 %v3433
        %v3954 = vunpack.c.l.b16 %v3434
        %v3955 = vunpack.c.l.b16 %v3435
        %v3956 = vunpack.c.l.b16 %v3436
        %v3957 = vunpack.c.l.b16 %v3437
        %v3958 = vunpack.c.l.b16 %v3438
        %v3959 = vunpack.c.l.b16 %v3439
        %v3960 = vunpack.c.l.b16 %v3440
        %v3961 = vunpack.c.l.b16 %v3441
        %v3962 = vunpack.c.l.b16 %v3442
        %v3963 = vunpack.c.l.b16 %v3443
        %v3964 = vunpack.c.l.b16 %v3444
        %v3965 = vunpack.c.l.b16 %v3445
        %v3966 = vunpack.c.l.b16 %v3446
        %v3967 = vunpack.c.l.b16 %v3447
        %v3968 = vunpack.c.l.b16 %v3448
        %v3969 = vunpack.c.l.b16 %v3449
        %v3970 = vunpack.c.l.b16 %v3450
        %v3971 = vunpack.c.l.b16 %v3451
        %v3972 = vunpack.c.l.b16 %v3452
        %v3973 = vunpack.c.l.b16 %v3453
        %v3974 = vunpack.c.l.b16 %v3454
        %v3975 = vunpack.c.l.b16 %v3455
        %v3976 = vunpack.c.l.b16 %v3456
        %v3977 = vunpack.c.l.b16 %v3457
        %v3978 = vunpack.c.l.b16 %v3458
        %v3979 = vunpack.c.l.b16 %v3459
        %v3980 = vunpack.c.l.b16 %v3460
        %v3981 = vunpack.c.l.b16 %v3461
        %v3982 = vunpack.c.l.b16 %v3462
        %v3983 = vunpack.c.l.b16 %v3463
        %v3984 = vunpack.c.l.b16 %v3464
        %v3985 = vunpack.c.l.b16 %v3465
        %v3986 = vunpack.c.l.b16 %v3466
        %v3987 = vunpack.c.l.b16 %v3467
        %v3988 = vunpack.c.l.b16 %v3468
        %v3989 = vunpack.c.l.b16 %v3469
        %v3990 = vunpack.c.l.b16 %v3470
        %v3991 = vunpack.c.l.b16 %v3471
        %v3992 = vunpack.c.l.b16 %v3472
        %v3993 = vunpack.c.l.b16 %v3473
        %v3994 = vunpack.c.l.b16 %v3474
        %v3995 = vunpack.c.l.b16 %v3475
        %v3996 = vunpack.c.l.b16 %v3476
        %v3997 = vunpack.c.l.b16 %v3477
        %v3998 = vunpack.c.l.b16 %v3478
        %v3999 = vunpack.c.l.b16 %v3479
        %v4000 = vunpack.c.l.b16 %v3480
        %v4001 = vunpack.c.l.b16 %v3481
        %v4002 = vunpack.c.l.b16 %v3482
        %v4003 = vunpack.c.l.b16 %v3483
        %v4004 = vunpack.c.l.b16 %v3484
        %v4005 = vunpack.c.l.b16 %v3485
        %v4006 = vunpack.c.l.b16 %v3486
        %v4007 = vunpack.c.l.b16 %v3487
        %v4008 = vunpack.c.l.b16 %v3488
        %v4009 = vunpack.c.l.b16 %v3489
        %v4010 = vunpack.c.l.b16 %v3490
        %v4011 = vunpack.c.l.b16 %v3491
        %v4012 = vunpack.c.l.b16 %v3492
        %v4013 = vunpack.c.l.b16 %v3493
        %v4014 = vunpack.c.l.b16 %v3494
        %v4015 = vunpack.c.l.b16 %v3495
        %v4016 = vunpack.c.l.b16 %v3496
        %v4017 = vunpack.c.l.b16 %v3497
        %v4018 = vunpack.c.l.b16 %v3498
        %v4019 = vunpack.c.l.b16 %v3499
        %v4020 = vunpack.c.l.b16 %v3500
        %v4021 = vunpack.c.l.b16 %v3501
        %v4022 = vunpack.c.l.b16 %v3502
        %v4023 = vunpack.c.l.b16 %v3503
        %v4024 = vunpack.c.l.b16 %v3504
        %v4025 = vunpack.c.l.b16 %v3505
        %v4026 = vunpack.c.l.b16 %v3506
        %v4027 = vunpack.c.l.b16 %v3507
        %v4028 = vunpack.c.l.b16 %v3508
        %v4029 = vunpack.c.l.b16 %v3509
        %v4030 = vunpack.c.l.b16 %v3510
        %v4031 = vunpack.c.l.b16 %v3511
        %v4032 = vunpack.c.l.b16 %v3512
        %v4033 = vunpack.c.l.b16 %v3513
        %v4034 = vunpack.c.l.b16 %v3514
        %v4035 = vunpack.c.l.b16 %v3515
        %v4036 = vunpack.c.l.b16 %v3516
        %v4037 = vunpack.c.l.b16 %v3517
        %v4038 = vunpack.c.l.b16 %v3518
        %v4039 = vunpack.c.l.b16 %v3519
        %v4040 = vunpack.c.l.b16 %v3520
        %v4041 = vunpack.c.l.b16 %v3521
        %v4042 = vunpack.c.l.b16 %v3522
        %v4043 = vunpack.c.l.b16 %v3523
        %v4044 = vunpack.c.l.b16 %v3524
        %v4045 = vunpack.c.l.b16 %v3525
        %v4046 = vunpack.c.l.b16 %v3526
        %v4047 = vunpack.c.l.b16 %v3527
        %v4048 = vunpack.c.l.b16 %v3528
        %v4049 = vunpack.c.l.b16 %v3529
        %v4050 = vunpack.c.l.b16 %v3530
        %v4051 = vunpack.c.l.b16 %v3531
        %v4052 = vunpack.c.l.b16 %v3532
        %v4053 = vunpack.c.l.b16 %v3533
        %v4054 = vunpack.c.l.b16 %v3534
        %v4055 = vunpack.c.l.b16 %v3535
        %v4056 = vunpack.c.l.b16 %v3536
        %v4057 = vunpack.c.l.b16 %v3537
        %v4058 = vunpack.c.l.b16 %v3538
        %v4059 = vunpack.c.l.b16 %v3539
        %v4060 = vunpack.c.l.b16 %v3540
        %v4061 = vunpack.c.l.b16 %v3541
        %v4062 = vunpack.c.l.b16 %v3542
        %v4063 = vunpack.c.l.b16 %v3543
        %v4064 = vunpack.c.l.b16 %v3544
        %v4065 = vunpack.c.l.b16 %v3545
        %v4066 = vunpack.c.l.b16 %v3546
        %v4067 = vunpack.c.l.b16 %v3547
        %v4068 = vunpack.c.l.b16 %v3548
        %v4069 = vunpack.c.l.b16 %v3549
        %v4070 = vunpack.c.l.b16 %v3550
        %v4071 = vunpack.c.l.b16 %v3551
        %v4072 = vunpack.c.l.b16 %v3552
        %v4073 = vunpack.c.l.b16 %v3553
        %v4074 = vunpack.c.l.b16 %v3554
        %v4075 = vunpack.c.l.b16 %v3555
        %v4076 = vunpack.c.l.b16 %v3556
        %v4077 = vunpack.c.l.b16 %v3557
        %v4078 = vunpack.c.l.b16 %v3558
        %v4079 = vunpack.c.l.b16 %v3559
        %v4080 = vunpack.c.l.b16 %v3560
        %v4081 = vunpack.c.l.b16 %v3561
        %v4082 = vunpack.c.l.b16 %v3562
        %v4083 = vunpack.c.l.b16 %v3563
        %v4084 = vunpack.c.l.b16 %v3564
        %v4085 = vunpack.c.l.b16 %v3565
        %v4086 = vunpack.c.l.b16 %v3566
        %v4087 = vunpack.c.l.b16 %v3567
        %v4088 = vunpack.c.l.b16 %v3568
        %v4089 = vunpack.c.l.b16 %v3569
        %v4090 = vunpack.c.l.b16 %v3570
        %v4091 = vunpack.c.l.b16 %v3571
        %v4092 = vunpack.c.l.b16 %v3572
        %v4093 = vunpack.c.l.b16 %v3573
        %v4094 = vunpack.c.l.b16 %v3574
        %v4095 = vunpack.c.l.b16 %v3575
        %v4096 = vunpack.c.l.b16 %v3576
        %v4097 = vunpack.c.l.b16 %v3577
        %v4098 = vunpack.c.l.b16 %v3578
        %v4099 = vunpack.c.l.b16 %v3579
        %v4100 = vunpack.c.l.b16 %v3580
        %v4101 = vunpack.c.l.b16 %v3581
        %v4102 = vunpack.c.l.b16 %v3582
        %v4103 = vunpack.c.l.b16 %v3583
        %v4104 = vunpack.c.l.b16 %v3584
        %v4105 = vunpack.c.l.b16 %v3585
        %v4106 = vunpack.c.l.b16 %v3586
        %v4107 = vunpack.c.l.b16 %v3587
        %v4108 = vunpack.c.l.b16 %v3588
        %v4109 = vunpack.c.l.b16 %v3589
        %v4110 = vunpack.c.l.b16 %v3590
        %v4111 = vunpack.c.l.b16 %v3591
        %v4112 = vunpack.c.l.b16 %v3592
        %v4113 = vunpack.c.l.b16 %v3593
        %v4114 = vunpack.c.l.b16 %v3594
        %v4115 = vunpack.c.l.b16 %v3595
        %v4116 = vunpack.c.l.b16 %v3596
        %v4117 = vunpack.c.l.b16 %v3597
        %v4118 = vunpack.c.l.b16 %v3598
        %v4119 = vunpack.c.l.b16 %v3599
        %v4120 = vunpack.c.l.b16 %v3600
        %v4121 = vunpack.c.l.b16 %v3601
        %v4122 = vunpack.c.l.b16 %v3602
        %v4123 = vunpack.c.l.b16 %v3603
        %v4124 = vunpack.c.l.b16 %v3604
        %v4125 = vunpack.c.l.b16 %v3605
        %v4126 = vunpack.c.l.b16 %v3606
        %v4127 = vunpack.c.l.b16 %v3607
        %v4128 = vunpack.c.l.b16 %v3608
        %v4129 = vunpack.c.l.b16 %v3609
        %v4130 = vunpack.c.l.b16 %v3610
        %v4131 = vunpack.c.l.b16 %v3611
        %v4132 = vunpack.c.l.b16 %v3612
        %v4133 = vunpack.c.l.b16 %v3613
        %v4134 = vunpack.c.l.b16 %v3614
        %v4135 = vunpack.c.l.b16 %v3615
        %v4136 = vunpack.c.l.b16 %v3616
        %v4137 = vunpack.c.l.b16 %v3617
        %v4138 = vunpack.c.l.b16 %v3618
        %v4139 = vunpack.c.l.b16 %v3619
        %v4140 = vunpack.c.l.b16 %v3620
        %v4141 = vunpack.c.l.b16 %v3621
        %v4142 = vunpack.c.l.b16 %v3622
        %v4143 = vunpack.c.l.b16 %v3623
        %v4144 = vunpack.c.l.b16 %v3624
        %v4145 = vunpack.c.l.b16 %v3625
        %v4146 = vunpack.c.l.b16 %v3626
        %v4147 = vunpack.c.l.b16 %v3627
        %v4148 = vunpack.c.l.b16 %v3628
        %v4149 = vunpack.c.l.b16 %v3629
        %v4150 = vunpack.c.l.b16 %v3630
        %v4151 = vunpack.c.l.b16 %v3631
        %v4152 = vunpack.c.l.b16 %v3632
        %v4153 = vunpack.c.l.b16 %v3633
        %v4154 = vunpack.c.l.b16 %v3634
        %v4155 = vunpack.c.l.b16 %v3635
        %v4156 = vunpack.c.l.b16 %v3636
        %v4157 = vunpack.c.l.b16 %v3637
        %v4158 = vunpack.c.l.b16 %v3638
        %v4159 = vunpack.c.l.b16 %v3639
        %v4160 = vunpack.c.l.b16 %v3640
        %v4161 = vunpack.c.l.b16 %v3641
        %v4162 = vunpack.c.l.b16 %v3642
        %v4163 = vunpack.c.l.b16 %v3643
        %v4164 = vunpack.c.l.b16 %v3644
        %v4165 = vpack.c.b16 %v3910, %v3909
        %v4166 = vpack.c.b16 %v3912, %v3911
        %v4167 = vpack.c.b16 %v3914, %v3913
        %v4168 = vpack.c.b16 %v3916, %v3915
        %v4169 = vpack.c.b16 %v3918, %v3917
        %v4170 = vpack.c.b16 %v3920, %v3919
        %v4171 = vpack.c.b16 %v3922, %v3921
        %v4172 = vpack.c.b16 %v3924, %v3923
        %v4173 = vpack.c.b16 %v3926, %v3925
        %v4174 = vpack.c.b16 %v3928, %v3927
        %v4175 = vpack.c.b16 %v3930, %v3929
        %v4176 = vpack.c.b16 %v3932, %v3931
        %v4177 = vpack.c.b16 %v3934, %v3933
        %v4178 = vpack.c.b16 %v3936, %v3935
        %v4179 = vpack.c.b16 %v3938, %v3937
        %v4180 = vpack.c.b16 %v3940, %v3939
        %v4181 = vpack.c.b16 %v3942, %v3941
        %v4182 = vpack.c.b16 %v3944, %v3943
        %v4183 = vpack.c.b16 %v3946, %v3945
        %v4184 = vpack.c.b16 %v3948, %v3947
        %v4185 = vpack.c.b16 %v3950, %v3949
        %v4186 = vpack.c.b16 %v3952, %v3951
        %v4187 = vpack.c.b16 %v3954, %v3953
        %v4188 = vpack.c.b16 %v3956, %v3955
        %v4189 = vpack.c.b16 %v3958, %v3957
        %v4190 = vpack.c.b16 %v3960, %v3959
        %v4191 = vpack.c.b16 %v3962, %v3961
        %v4192 = vpack.c.b16 %v3964, %v3963
        %v4193 = vpack.c.b16 %v3966, %v3965
        %v4194 = vpack.c.b16 %v3968, %v3967
        %v4195 = vpack.c.b16 %v3970, %v3969
        %v4196 = vpack.c.b16 %v3972, %v3971
        %v4197 = vpack.c.b16 %v3974, %v3973
        %v4198 = vpack.c.b16 %v3976, %v3975
        %v4199 = vpack.c.b16 %v3978, %v3977
        %v4200 = vpack.c.b16 %v3980, %v3979
        %v4201 = vpack.c.b16 %v3982, %v3981
        %v4202 = vpack.c.b16 %v3984, %v3983
        %v4203 = vpack.c.b16 %v3986, %v3985
        %v4204 = vpack.c.b16 %v3988, %v3987
        %v4205 = vpack.c.b16 %v3990, %v3989
        %v4206 = vpack.c.b16 %v3992, %v3991
        %v4207 = vpack.c.b16 %v3994, %v3993
        %v4208 = vpack.c.b16 %v3996, %v3995
        %v4209 = vpack.c.b16 %v3998, %v3997
        %v4210 = vpack.c.b16 %v4000, %v3999
        %v4211 = vpack.c.b16 %v4002, %v4001
        %v4212 = vpack.c.b16 %v4004, %v4003
        %v4213 = vpack.c.b16 %v4006, %v4005
        %v4214 = vpack.c.b16 %v4008, %v4007
        %v4215 = vpack.c.b16 %v4010, %v4009
        %v4216 = vpack.c.b16 %v4012, %v4011
        %v4217 = vpack.c.b16 %v4014, %v4013
        %v4218 = vpack.c.b16 %v4016, %v4015
        %v4219 = vpack.c.b16 %v4018, %v4017
        %v4220 = vpack.c.b16 %v4020, %v4019
        %v4221 = vpack.c.b16 %v4022, %v4021
        %v4222 = vpack.c.b16 %v4024, %v4023
        %v4223 = vpack.c.b16 %v4026, %v4025
        %v4224 = vpack.c.b16 %v4028, %v4027
        %v4225 = vpack.c.b16 %v4030, %v4029
        %v4226 = vpack.c.b16 %v4032, %v4031
        %v4227 = vpack.c.b16 %v4034, %v4033
        %v4228 = vpack.c.b16 %v4036, %v4035
        %v4229 = vpack.c.b16 %v4038, %v4037
        %v4230 = vpack.c.b16 %v4040, %v4039
        %v4231 = vpack.c.b16 %v4042, %v4041
        %v4232 = vpack.c.b16 %v4044, %v4043
        %v4233 = vpack.c.b16 %v4046, %v4045
        %v4234 = vpack.c.b16 %v4048, %v4047
        %v4235 = vpack.c.b16 %v4050, %v4049
        %v4236 = vpack.c.b16 %v4052, %v4051
        %v4237 = vpack.c.b16 %v4054, %v4053
        %v4238 = vpack.c.b16 %v4056, %v4055
        %v4239 = vpack.c.b16 %v4058, %v4057
        %v4240 = vpack.c.b16 %v4060, %v4059
        %v4241 = vpack.c.b16 %v4062, %v4061
        %v4242 = vpack.c.b16 %v4064, %v4063
        %v4243 = vpack.c.b16 %v4066, %v4065
        %v4244 = vpack.c.b16 %v4068, %v4067
        %v4245 = vpack.c.b16 %v4070, %v4069
        %v4246 = vpack.c.b16 %v4072, %v4071
        %v4247 = vpack.c.b16 %v4074, %v4073
        %v4248 = vpack.c.b16 %v4076, %v4075
        %v4249 = vpack.c.b16 %v4078, %v4077
        %v4250 = vpack.c.b16 %v4080, %v4079
        %v4251 = vpack.c.b16 %v4082, %v4081
        %v4252 = vpack.c.b16 %v4084, %v4083
        %v4253 = vpack.c.b16 %v4086, %v4085
        %v4254 = vpack.c.b16 %v4088, %v4087
        %v4255 = vpack.c.b16 %v4090, %v4089
        %v4256 = vpack.c.b16 %v4092, %v4091
        %v4257 = vpack.c.b16 %v4094, %v4093
        %v4258 = vpack.c.b16 %v4096, %v4095
        %v4259 = vpack.c.b16 %v4098, %v4097
        %v4260 = vpack.c.b16 %v4100, %v4099
        %v4261 = vpack.c.b16 %v4102, %v4101
        %v4262 = vpack.c.b16 %v4104, %v4103
        %v4263 = vpack.c.b16 %v4106, %v4105
        %v4264 = vpack.c.b16 %v4108, %v4107
        %v4265 = vpack.c.b16 %v4110, %v4109
        %v4266 = vpack.c.b16 %v4112, %v4111
        %v4267 = vpack.c.b16 %v4114, %v4113
        %v4268 = vpack.c.b16 %v4116, %v4115
        %v4269 = vpack.c.b16 %v4118, %v4117
        %v4270 = vpack.c.b16 %v4120, %v4119
        %v4271 = vpack.c.b16 %v4122, %v4121
        %v4272 = vpack.c.b16 %v4124, %v4123
        %v4273 = vpack.c.b16 %v4126, %v4125
        %v4274 = vpack.c.b16 %v4128, %v4127
        %v4275 = vpack.c.b16 %v4130, %v4129
        %v4276 = vpack.c.b16 %v4132, %v4131
        %v4277 = vpack.c.b16 %v4134, %v4133
        %v4278 = vpack.c.b16 %v4136, %v4135
        %v4279 = vpack.c.b16 %v4138, %v4137
        %v4280 = vpack.c.b16 %v4140, %v4139
        %v4281 = vpack.c.b16 %v4142, %v4141
        %v4282 = vpack.c.b16 %v4144, %v4143
        %v4283 = vpack.c.b16 %v4146, %v4145
        %v4284 = vpack.c.b16 %v4148, %v4147
        %v4285 = vpack.c.b16 %v4150, %v4149
        %v4286 = vpack.c.b16 %v4152, %v4151
        %v4287 = vpack.c.b16 %v4154, %v4153
        %v4288 = vpack.c.b16 %v4156, %v4155
        %v4289 = vpack.c.b16 %v4158, %v4157
        %v4290 = vpack.c.b16 %v4160, %v4159
        %v4291 = vpack.c.b16 %v4162, %v4161
        %v4292 = vpack.c.b16 %v4164, %v4163
        %4421 = vmatprep.subr.bf16.mxu0 0
        %4422 = vmatpush1.bf16.msra.mxu0 %v4172
        %4423 = vmatprep.subr.bf16.mxu0 0
        %4424 = vmatpush1.bf16.msra.mxu0 %v4171
        %4425 = vmatprep.subr.bf16.mxu0 0
        %4426 = vmatpush1.bf16.msra.mxu0 %v4170
        %4427 = vmatprep.subr.bf16.mxu0 0
        %4428 = vmatpush1.bf16.msra.mxu0 %v4169
        %4429 = vmatprep.subr.bf16.mxu0 0
        %4430 = vmatpush1.bf16.msra.mxu0 %v4168
        %4431 = vmatprep.subr.bf16.mxu0 0
        %4432 = vmatpush1.bf16.msra.mxu0 %v4167
        %4433 = vmatprep.subr.bf16.mxu0 0
        %4434 = vmatpush1.bf16.msra.mxu0 %v4166
        %4435 = vmatprep.subr.bf16.mxu0 0
        %4436 = vmatpush1.bf16.msra.mxu0 %v4165
        %4437 = vmatprep.subr.bf16.mxu0 0
        %4438 = vmatpush2.bf16.msra.mxu0 %v4180
        %4439 = vmatprep.subr.bf16.mxu0 0
        %4440 = vmatpush2.bf16.msra.mxu0 %v4179
        %4441 = vmatprep.subr.bf16.mxu0 0
        %4442 = vmatpush2.bf16.msra.mxu0 %v4178
        %4443 = vmatprep.subr.bf16.mxu0 0
        %4444 = vmatpush2.bf16.msra.mxu0 %v4177
        %4445 = vmatprep.subr.bf16.mxu0 0
        %4446 = vmatpush2.bf16.msra.mxu0 %v4176
        %4447 = vmatprep.subr.bf16.mxu0 0
        %4448 = vmatpush2.bf16.msra.mxu0 %v4175
        %4449 = vmatprep.subr.bf16.mxu0 0
        %4450 = vmatpush2.bf16.msra.mxu0 %v4174
        %4451 = vmatprep.subr.bf16.mxu0 0
        %4452 = vmatpush2.bf16.msra.mxu0 %v4173
        %4453 = vmatprep.mubr.bf16.mxu0 %v3372
        %4454 = vmatmul.mubr.bf16.gmra.mxu0 %v3371
        %v4455 = vpop.f32.mrf.mxu0
        %v4456 = vadd.f32 %v3651, %v4455
        %v4457 = vpop.f32.mrf.mxu0
        %v4458 = vpop.f32.mrf.mxu0
        %v4459 = vadd.f32 %v3651, %v4458
        %v4460 = vpop.f32.mrf.mxu0
        %4461 = vdwg.mxu0
        %4462 = vmatprep.subr.bf16.mxu0 0
        %4463 = vmatpush1.bf16.msra.mxu0 %v4188
        %4464 = vmatprep.subr.bf16.mxu0 0
        %4465 = vmatpush1.bf16.msra.mxu0 %v4187
        %4466 = vmatprep.subr.bf16.mxu0 0
        %4467 = vmatpush1.bf16.msra.mxu0 %v4186
        %4468 = vmatprep.subr.bf16.mxu0 0
        %4469 = vmatpush1.bf16.msra.mxu0 %v4185
        %4470 = vmatprep.subr.bf16.mxu0 0
        %4471 = vmatpush1.bf16.msra.mxu0 %v4184
        %4472 = vmatprep.subr.bf16.mxu0 0
        %4473 = vmatpush1.bf16.msra.mxu0 %v4183
        %4474 = vmatprep.subr.bf16.mxu0 0
        %4475 = vmatpush1.bf16.msra.mxu0 %v4182
        %4476 = vmatprep.subr.bf16.mxu0 0
        %4477 = vmatpush1.bf16.msra.mxu0 %v4181
        %4478 = vmatprep.subr.bf16.mxu0 0
        %4479 = vmatpush2.bf16.msra.mxu0 %v4196
        %4480 = vmatprep.subr.bf16.mxu0 0
        %4481 = vmatpush2.bf16.msra.mxu0 %v4195
        %4482 = vmatprep.subr.bf16.mxu0 0
        %4483 = vmatpush2.bf16.msra.mxu0 %v4194
        %4484 = vmatprep.subr.bf16.mxu0 0
        %4485 = vmatpush2.bf16.msra.mxu0 %v4193
        %4486 = vmatprep.subr.bf16.mxu0 0
        %4487 = vmatpush2.bf16.msra.mxu0 %v4192
        %4488 = vmatprep.subr.bf16.mxu0 0
        %4489 = vmatpush2.bf16.msra.mxu0 %v4191
        %4490 = vmatprep.subr.bf16.mxu0 0
        %4491 = vmatpush2.bf16.msra.mxu0 %v4190
        %4492 = vmatprep.subr.bf16.mxu0 0
        %4493 = vmatpush2.bf16.msra.mxu0 %v4189
        %4494 = vmatprep.mubr.bf16.mxu0 %v3374
        %4495 = vmatmul.mubr.bf16.gmra.mxu0 %v3373
        %v4496 = vpop.f32.mrf.mxu0
        %v4497 = vadd.f32 %v4456, %v4496
        %v4498 = vpop.f32.mrf.mxu0
        %v4499 = vpop.f32.mrf.mxu0
        %v4500 = vadd.f32 %v4459, %v4499
        %v4501 = vpop.f32.mrf.mxu0
        %4502 = vdwg.mxu0
        %4503 = vmatprep.subr.bf16.mxu0 0
        %4504 = vmatpush1.bf16.msra.mxu0 %v4204
        %4505 = vmatprep.subr.bf16.mxu0 0
        %4506 = vmatpush1.bf16.msra.mxu0 %v4203
        %4507 = vmatprep.subr.bf16.mxu0 0
        %4508 = vmatpush1.bf16.msra.mxu0 %v4202
        %4509 = vmatprep.subr.bf16.mxu0 0
        %4510 = vmatpush1.bf16.msra.mxu0 %v4201
        %4511 = vmatprep.subr.bf16.mxu0 0
        %4512 = vmatpush1.bf16.msra.mxu0 %v4200
        %4513 = vmatprep.subr.bf16.mxu0 0
        %4514 = vmatpush1.bf16.msra.mxu0 %v4199
        %4515 = vmatprep.subr.bf16.mxu0 0
        %4516 = vmatpush1.bf16.msra.mxu0 %v4198
        %4517 = vmatprep.subr.bf16.mxu0 0
        %4518 = vmatpush1.bf16.msra.mxu0 %v4197
        %4519 = vmatprep.subr.bf16.mxu0 0
        %4520 = vmatpush2.bf16.msra.mxu0 %v4212
        %4521 = vmatprep.subr.bf16.mxu0 0
        %4522 = vmatpush2.bf16.msra.mxu0 %v4211
        %4523 = vmatprep.subr.bf16.mxu0 0
        %4524 = vmatpush2.bf16.msra.mxu0 %v4210
        %4525 = vmatprep.subr.bf16.mxu0 0
        %4526 = vmatpush2.bf16.msra.mxu0 %v4209
        %4527 = vmatprep.subr.bf16.mxu0 0
        %4528 = vmatpush2.bf16.msra.mxu0 %v4208
        %4529 = vmatprep.subr.bf16.mxu0 0
        %4530 = vmatpush2.bf16.msra.mxu0 %v4207
        %4531 = vmatprep.subr.bf16.mxu0 0
        %4532 = vmatpush2.bf16.msra.mxu0 %v4206
        %4533 = vmatprep.subr.bf16.mxu0 0
        %4534 = vmatpush2.bf16.msra.mxu0 %v4205
        %4535 = vmatprep.mubr.bf16.mxu0 %v3376
        %4536 = vmatmul.mubr.bf16.gmra.mxu0 %v3375
        %v4537 = vpop.f32.mrf.mxu0
        %v4538 = vadd.f32 %v4497, %v4537
        %v4539 = vpop.f32.mrf.mxu0
        %v4540 = vpop.f32.mrf.mxu0
        %v4541 = vadd.f32 %v4500, %v4540
        %v4542 = vpop.f32.mrf.mxu0
        %4543 = vdwg.mxu0
        %4544 = vmatprep.subr.bf16.mxu0 0
        %4545 = vmatpush1.bf16.msra.mxu0 %v4220
        %4546 = vmatprep.subr.bf16.mxu0 0
        %4547 = vmatpush1.bf16.msra.mxu0 %v4219
        %4548 = vmatprep.subr.bf16.mxu0 0
        %4549 = vmatpush1.bf16.msra.mxu0 %v4218
        %4550 = vmatprep.subr.bf16.mxu0 0
        %4551 = vmatpush1.bf16.msra.mxu0 %v4217
        %4552 = vmatprep.subr.bf16.mxu0 0
        %4553 = vmatpush1.bf16.msra.mxu0 %v4216
        %4554 = vmatprep.subr.bf16.mxu0 0
        %4555 = vmatpush1.bf16.msra.mxu0 %v4215
        %4556 = vmatprep.subr.bf16.mxu0 0
        %4557 = vmatpush1.bf16.msra.mxu0 %v4214
        %4558 = vmatprep.subr.bf16.mxu0 0
        %4559 = vmatpush1.bf16.msra.mxu0 %v4213
        %4560 = vmatprep.subr.bf16.mxu0 0
        %4561 = vmatpush2.bf16.msra.mxu0 %v4228
        %4562 = vmatprep.subr.bf16.mxu0 0
        %4563 = vmatpush2.bf16.msra.mxu0 %v4227
        %4564 = vmatprep.subr.bf16.mxu0 0
        %4565 = vmatpush2.bf16.msra.mxu0 %v4226
        %4566 = vmatprep.subr.bf16.mxu0 0
        %4567 = vmatpush2.bf16.msra.mxu0 %v4225
        %4568 = vmatprep.subr.bf16.mxu0 0
        %4569 = vmatpush2.bf16.msra.mxu0 %v4224
        %4570 = vmatprep.subr.bf16.mxu0 0
        %4571 = vmatpush2.bf16.msra.mxu0 %v4223
        %4572 = vmatprep.subr.bf16.mxu0 0
        %4573 = vmatpush2.bf16.msra.mxu0 %v4222
        %4574 = vmatprep.subr.bf16.mxu0 0
        %4575 = vmatpush2.bf16.msra.mxu0 %v4221
        %4576 = vmatprep.mubr.bf16.mxu0 %v3378
        %4577 = vmatmul.mubr.bf16.gmra.mxu0 %v3377
        %v4578 = vpop.f32.mrf.mxu0
        %v4579 = vadd.f32 %v4538, %v4578
        %v4580 = vpop.f32.mrf.mxu0
        %v4581 = vpop.f32.mrf.mxu0
        %v4582 = vadd.f32 %v4541, %v4581
        %v4583 = vpop.f32.mrf.mxu0
        %4584 = vdwg.mxu0
        %4585 = vmatprep.subr.bf16.mxu0 0
        %4586 = vmatpush1.bf16.msra.mxu0 %v4236
        %4587 = vmatprep.subr.bf16.mxu0 0
        %4588 = vmatpush1.bf16.msra.mxu0 %v4235
        %4589 = vmatprep.subr.bf16.mxu0 0
        %4590 = vmatpush1.bf16.msra.mxu0 %v4234
        %4591 = vmatprep.subr.bf16.mxu0 0
        %4592 = vmatpush1.bf16.msra.mxu0 %v4233
        %4593 = vmatprep.subr.bf16.mxu0 0
        %4594 = vmatpush1.bf16.msra.mxu0 %v4232
        %4595 = vmatprep.subr.bf16.mxu0 0
        %4596 = vmatpush1.bf16.msra.mxu0 %v4231
        %4597 = vmatprep.subr.bf16.mxu0 0
        %4598 = vmatpush1.bf16.msra.mxu0 %v4230
        %4599 = vmatprep.subr.bf16.mxu0 0
        %4600 = vmatpush1.bf16.msra.mxu0 %v4229
        %4601 = vmatprep.subr.bf16.mxu0 0
        %4602 = vmatpush2.bf16.msra.mxu0 %v4244
        %4603 = vmatprep.subr.bf16.mxu0 0
        %4604 = vmatpush2.bf16.msra.mxu0 %v4243
        %4605 = vmatprep.subr.bf16.mxu0 0
        %4606 = vmatpush2.bf16.msra.mxu0 %v4242
        %4607 = vmatprep.subr.bf16.mxu0 0
        %4608 = vmatpush2.bf16.msra.mxu0 %v4241
        %4609 = vmatprep.subr.bf16.mxu0 0
        %4610 = vmatpush2.bf16.msra.mxu0 %v4240
        %4611 = vmatprep.subr.bf16.mxu0 0
        %4612 = vmatpush2.bf16.msra.mxu0 %v4239
        %4613 = vmatprep.subr.bf16.mxu0 0
        %4614 = vmatpush2.bf16.msra.mxu0 %v4238
        %4615 = vmatprep.subr.bf16.mxu0 0
        %4616 = vmatpush2.bf16.msra.mxu0 %v4237
        %4617 = vmatprep.mubr.bf16.mxu0 %v3380
        %4618 = vmatmul.mubr.bf16.gmra.mxu0 %v3379
        %v4619 = vpop.f32.mrf.mxu0
        %v4620 = vadd.f32 %v4579, %v4619
        %v4621 = vpop.f32.mrf.mxu0
        %v4622 = vpop.f32.mrf.mxu0
        %v4623 = vadd.f32 %v4582, %v4622
        %v4624 = vpop.f32.mrf.mxu0
        %4625 = vdwg.mxu0
        %4626 = vmatprep.subr.bf16.mxu0 0
        %4627 = vmatpush1.bf16.msra.mxu0 %v4252
        %4628 = vmatprep.subr.bf16.mxu0 0
        %4629 = vmatpush1.bf16.msra.mxu0 %v4251
        %4630 = vmatprep.subr.bf16.mxu0 0
        %4631 = vmatpush1.bf16.msra.mxu0 %v4250
        %4632 = vmatprep.subr.bf16.mxu0 0
        %4633 = vmatpush1.bf16.msra.mxu0 %v4249
        %4634 = vmatprep.subr.bf16.mxu0 0
        %4635 = vmatpush1.bf16.msra.mxu0 %v4248
        %4636 = vmatprep.subr.bf16.mxu0 0
        %4637 = vmatpush1.bf16.msra.mxu0 %v4247
        %4638 = vmatprep.subr.bf16.mxu0 0
        %4639 = vmatpush1.bf16.msra.mxu0 %v4246
        %4640 = vmatprep.subr.bf16.mxu0 0
        %4641 = vmatpush1.bf16.msra.mxu0 %v4245
        %4642 = vmatprep.subr.bf16.mxu0 0
        %4643 = vmatpush2.bf16.msra.mxu0 %v4260
        %4644 = vmatprep.subr.bf16.mxu0 0
        %4645 = vmatpush2.bf16.msra.mxu0 %v4259
        %4646 = vmatprep.subr.bf16.mxu0 0
        %4647 = vmatpush2.bf16.msra.mxu0 %v4258
        %4648 = vmatprep.subr.bf16.mxu0 0
        %4649 = vmatpush2.bf16.msra.mxu0 %v4257
        %4650 = vmatprep.subr.bf16.mxu0 0
        %4651 = vmatpush2.bf16.msra.mxu0 %v4256
        %4652 = vmatprep.subr.bf16.mxu0 0
        %4653 = vmatpush2.bf16.msra.mxu0 %v4255
        %4654 = vmatprep.subr.bf16.mxu0 0
        %4655 = vmatpush2.bf16.msra.mxu0 %v4254
        %4656 = vmatprep.subr.bf16.mxu0 0
        %4657 = vmatpush2.bf16.msra.mxu0 %v4253
        %4658 = vmatprep.mubr.bf16.mxu0 %v3382
        %4659 = vmatmul.mubr.bf16.gmra.mxu0 %v3381
        %v4660 = vpop.f32.mrf.mxu0
        %v4661 = vadd.f32 %v4620, %v4660
        %v4662 = vpop.f32.mrf.mxu0
        %v4663 = vpop.f32.mrf.mxu0
        %v4664 = vadd.f32 %v4623, %v4663
        %v4665 = vpop.f32.mrf.mxu0
        %4666 = vdwg.mxu0
        %4667 = vmatprep.subr.bf16.mxu0 0
        %4668 = vmatpush1.bf16.msra.mxu0 %v4268
        %4669 = vmatprep.subr.bf16.mxu0 0
        %4670 = vmatpush1.bf16.msra.mxu0 %v4267
        %4671 = vmatprep.subr.bf16.mxu0 0
        %4672 = vmatpush1.bf16.msra.mxu0 %v4266
        %4673 = vmatprep.subr.bf16.mxu0 0
        %4674 = vmatpush1.bf16.msra.mxu0 %v4265
        %4675 = vmatprep.subr.bf16.mxu0 0
        %4676 = vmatpush1.bf16.msra.mxu0 %v4264
        %4677 = vmatprep.subr.bf16.mxu0 0
        %4678 = vmatpush1.bf16.msra.mxu0 %v4263
        %4679 = vmatprep.subr.bf16.mxu0 0
        %4680 = vmatpush1.bf16.msra.mxu0 %v4262
        %4681 = vmatprep.subr.bf16.mxu0 0
        %4682 = vmatpush1.bf16.msra.mxu0 %v4261
        %4683 = vmatprep.subr.bf16.mxu0 0
        %4684 = vmatpush2.bf16.msra.mxu0 %v4276
        %4685 = vmatprep.subr.bf16.mxu0 0
        %4686 = vmatpush2.bf16.msra.mxu0 %v4275
        %4687 = vmatprep.subr.bf16.mxu0 0
        %4688 = vmatpush2.bf16.msra.mxu0 %v4274
        %4689 = vmatprep.subr.bf16.mxu0 0
        %4690 = vmatpush2.bf16.msra.mxu0 %v4273
        %4691 = vmatprep.subr.bf16.mxu0 0
        %4692 = vmatpush2.bf16.msra.mxu0 %v4272
        %4693 = vmatprep.subr.bf16.mxu0 0
        %4694 = vmatpush2.bf16.msra.mxu0 %v4271
        %4695 = vmatprep.subr.bf16.mxu0 0
        %4696 = vmatpush2.bf16.msra.mxu0 %v4270
        %4697 = vmatprep.subr.bf16.mxu0 0
        %4698 = vmatpush2.bf16.msra.mxu0 %v4269
        %4699 = vmatprep.mubr.bf16.mxu0 %v3384
        %4700 = vmatmul.mubr.bf16.gmra.mxu0 %v3383
        %v4701 = vpop.f32.mrf.mxu0
        %v4702 = vadd.f32 %v4661, %v4701
        %v4703 = vpop.f32.mrf.mxu0
        %v4704 = vpop.f32.mrf.mxu0
        %v4705 = vadd.f32 %v4664, %v4704
        %v4706 = vpop.f32.mrf.mxu0
        %4707 = vdwg.mxu0
        %4708 = vmatprep.subr.bf16.mxu0 0
        %4709 = vmatpush1.bf16.msra.mxu0 %v4284
        %4710 = vmatprep.subr.bf16.mxu0 0
        %4711 = vmatpush1.bf16.msra.mxu0 %v4283
        %4712 = vmatprep.subr.bf16.mxu0 0
        %4713 = vmatpush1.bf16.msra.mxu0 %v4282
        %4714 = vmatprep.subr.bf16.mxu0 0
        %4715 = vmatpush1.bf16.msra.mxu0 %v4281
        %4716 = vmatprep.subr.bf16.mxu0 0
        %4717 = vmatpush1.bf16.msra.mxu0 %v4280
        %4718 = vmatprep.subr.bf16.mxu0 0
        %4719 = vmatpush1.bf16.msra.mxu0 %v4279
        %4720 = vmatprep.subr.bf16.mxu0 0
        %4721 = vmatpush1.bf16.msra.mxu0 %v4278
        %4722 = vmatprep.subr.bf16.mxu0 0
        %4723 = vmatpush1.bf16.msra.mxu0 %v4277
        %4724 = vmatprep.subr.bf16.mxu0 0
        %4725 = vmatpush2.bf16.msra.mxu0 %v4292
        %4726 = vmatprep.subr.bf16.mxu0 0
        %4727 = vmatpush2.bf16.msra.mxu0 %v4291
        %4728 = vmatprep.subr.bf16.mxu0 0
        %4729 = vmatpush2.bf16.msra.mxu0 %v4290
        %4730 = vmatprep.subr.bf16.mxu0 0
        %4731 = vmatpush2.bf16.msra.mxu0 %v4289
        %4732 = vmatprep.subr.bf16.mxu0 0
        %4733 = vmatpush2.bf16.msra.mxu0 %v4288
        %4734 = vmatprep.subr.bf16.mxu0 0
        %4735 = vmatpush2.bf16.msra.mxu0 %v4287
        %4736 = vmatprep.subr.bf16.mxu0 0
        %4737 = vmatpush2.bf16.msra.mxu0 %v4286
        %4738 = vmatprep.subr.bf16.mxu0 0
        %4739 = vmatpush2.bf16.msra.mxu0 %v4285
        %4740 = vmatprep.mubr.bf16.mxu0 %v3386
        %4741 = vmatmul.mubr.bf16.gmra.mxu0 %v3385
        %v4742 = vpop.f32.mrf.mxu0
        %v4743 = vadd.f32 %v4702, %v4742
        %v4744 = vpop.f32.mrf.mxu0
        %v4745 = vpop.f32.mrf.mxu0
        %v4746 = vadd.f32 %v4705, %v4745
        %v4747 = vpop.f32.mrf.mxu0
        %4748 = vdwg.mxu0
        %v4749 = vadd.f32 %v2136, %v4743
        %v4750 = vadd.f32 %v2137, %v4746
        %s4751 = scalar_lea.vmem %s13, %s39
        %v4752 = vld [vmem:[%s4751] sm:$0x1]
        %s4753 = scalar_lea.vmem %s14, %s39
        %v4754 = vld [vmem:[%s4753] sm:$0x1]
        %4755 = vadd.xlane.f32.xlu0 %v4749
        %v4756 = vpop.xlane.xlu0 %4755
        %4757 = vadd.xlane.f32.xlu0 %v4750
        %v4758 = vpop.xlane.xlu0 %4757
        %v4759 = vmul.f32 %v4756, %v2103
        %v4760 = vmul.f32 %v4758, %v2103
        %v4761 = vsub.f32 %v4749, %v4759
        %v4762 = vsub.f32 %v4750, %v4760
        %v4763 = vmul.f32 %v4761, %v4761
        %v4764 = vmul.f32 %v4762, %v4762
        %4765 = vadd.xlane.f32.xlu0 %v4763
        %v4766 = vpop.xlane.xlu0 %4765
        %4767 = vadd.xlane.f32.xlu0 %v4764
        %v4768 = vpop.xlane.xlu0 %4767
        %v4769 = vmul.f32 %v4766, %v2103
        %v4770 = vmul.f32 %v4768, %v2103
        %v4771 = vadd.f32 %v4769, 1e-05
        %v4772 = vadd.f32 %v4770, 1e-05
        %v4773 = vrsqrt.pop %v4771
        %v4774 = vrsqrt.pop %v4772
        %v4775 = vmul.f32 %v4761, %v4773
        %v4776 = vmul.f32 %v4762, %v4774
        %v4778 = vlaneseq
        %v4779 = vshrl.u32 %v4778, 7
        %v4780 = vsub.s32 0, %v4779
        %v4781 = vrot.slane %v4752, %v4780
        %v4783 = vmul.f32 %v4775, %v4781
        %v4784 = vmul.f32 %v4776, %v4781
        %v4786 = vlaneseq
        %v4787 = vshrl.u32 %v4786, 7
        %v4788 = vsub.s32 0, %v4787
        %v4789 = vrot.slane %v4754, %v4788
        %v4791 = vadd.f32 %v4783, %v4789
        %v4792 = vadd.f32 %v4784, %v4789
        %4793 = vst [vmem:[#allocation2] sm:$0xff] %v4791
        %4794 = vst [vmem:[#allocation2 + $0x8] sm:$0xff] %v4792
        %p4795 = scmp.eq.s32.totalorder %s39, 1
        // Predicated region
        $region129: #{tpu_custom_call.1} parent=87 // pred_check
          %p4796 = pneg %p4795
        $region130: #{tpu_custom_call.1} parent=87 // pred_check_branch
          %4798 = sbr.rel (%p4796) target = $region132
        $region131: #{tpu_custom_call.1} parent=87 // pred_region
          %s4799 = scalar_lea.vmem [#allocation2], 7
          %v4800 = vld [vmem:[%s4799] ss:$8 sm:$0x3]
          %v4801 = vpack.c.bf16 %v4800, %v4800
          %v4802 = vld [vmem:[#allocation17] sm:$0xf]
          %v4803 = vld [vmem:[#allocation17 + $0x4] sm:$0xf]
          %v4804 = vld [vmem:[#allocation17 + $0x8] sm:$0xf]
          %v4805 = vld [vmem:[#allocation17 + $0xc] sm:$0xf]
          %v4806 = vld [vmem:[#allocation17 + $0x10] sm:$0xf]
          %v4807 = vld [vmem:[#allocation17 + $0x14] sm:$0xf]
          %v4808 = vld [vmem:[#allocation17 + $0x18] sm:$0xf]
          %v4809 = vld [vmem:[#allocation17 + $0x1c] sm:$0xf]
          %v4810 = vld [vmem:[#allocation17 + $0x20] sm:$0xf]
          %v4811 = vld [vmem:[#allocation17 + $0x24] sm:$0xf]
          %v4812 = vld [vmem:[#allocation17 + $0x28] sm:$0xf]
          %v4813 = vld [vmem:[#allocation17 + $0x2c] sm:$0xf]
          %v4814 = vld [vmem:[#allocation17 + $0x30] sm:$0xf]
          %v4815 = vld [vmem:[#allocation17 + $0x34] sm:$0xf]
          %v4816 = vld [vmem:[#allocation17 + $0x38] sm:$0xf]
          %v4817 = vld [vmem:[#allocation17 + $0x3c] sm:$0xf]
          %v4818 = vld [vmem:[%s16] sm:$0x1]
          %v4820 = vlaneseq
          %v4821 = vshrl.u32 %v4820, 7
          %v4822 = vsub.s32 0, %v4821
          %v4823 = vrot.slane %v4818, %v4822
          %v4841 = vunpack.c.l.b16 %v4802
          %v4842 = vunpack.c.l.b16 %v4803
          %v4843 = vunpack.c.l.b16 %v4804
          %v4844 = vunpack.c.l.b16 %v4805
          %v4845 = vunpack.c.l.b16 %v4806
          %v4846 = vunpack.c.l.b16 %v4807
          %v4847 = vunpack.c.l.b16 %v4808
          %v4848 = vunpack.c.l.b16 %v4809
          %v4849 = vunpack.c.l.b16 %v4810
          %v4850 = vunpack.c.l.b16 %v4811
          %v4851 = vunpack.c.l.b16 %v4812
          %v4852 = vunpack.c.l.b16 %v4813
          %v4853 = vunpack.c.l.b16 %v4814
          %v4854 = vunpack.c.l.b16 %v4815
          %v4855 = vunpack.c.l.b16 %v4816
          %v4856 = vunpack.c.l.b16 %v4817
          %v4857 = vpack.c.b16 %v4842, %v4841
          %v4858 = vpack.c.b16 %v4844, %v4843
          %v4859 = vpack.c.b16 %v4846, %v4845
          %v4860 = vpack.c.b16 %v4848, %v4847
          %v4861 = vpack.c.b16 %v4850, %v4849
          %v4862 = vpack.c.b16 %v4852, %v4851
          %v4863 = vpack.c.b16 %v4854, %v4853
          %v4864 = vpack.c.b16 %v4856, %v4855
          %4873 = vmatprep.subr.bf16.mxu0 0
          %4874 = vmatpush1.bf16.msra.mxu0 %v4864
          %4875 = vmatprep.subr.bf16.mxu0 0
          %4876 = vmatpush1.bf16.msra.mxu0 %v4863
          %4877 = vmatprep.subr.bf16.mxu0 0
          %4878 = vmatpush1.bf16.msra.mxu0 %v4862
          %4879 = vmatprep.subr.bf16.mxu0 0
          %4880 = vmatpush1.bf16.msra.mxu0 %v4861
          %4881 = vmatprep.subr.bf16.mxu0 0
          %4882 = vmatpush1.bf16.msra.mxu0 %v4860
          %4883 = vmatprep.subr.bf16.mxu0 0
          %4884 = vmatpush1.bf16.msra.mxu0 %v4859
          %4885 = vmatprep.subr.bf16.mxu0 0
          %4886 = vmatpush1.bf16.msra.mxu0 %v4858
          %4887 = vmatprep.subr.bf16.mxu0 0
          %4888 = vmatpush1.bf16.msra.mxu0 %v4857
          %4889 = vmatprep.subr.bf16.mxu0 0
          %4890 = vmatpush2.bf16.msra.mxu0 0
          %4891 = vmatprep.subr.bf16.mxu0 0
          %4892 = vmatpush2.bf16.msra.mxu0 0
          %4893 = vmatprep.subr.bf16.mxu0 0
          %4894 = vmatpush2.bf16.msra.mxu0 0
          %4895 = vmatprep.subr.bf16.mxu0 0
          %4896 = vmatpush2.bf16.msra.mxu0 0
          %4897 = vmatprep.subr.bf16.mxu0 0
          %4898 = vmatpush2.bf16.msra.mxu0 0
          %4899 = vmatprep.subr.bf16.mxu0 0
          %4900 = vmatpush2.bf16.msra.mxu0 0
          %4901 = vmatprep.subr.bf16.mxu0 0
          %4902 = vmatpush2.bf16.msra.mxu0 0
          %4903 = vmatprep.subr.bf16.mxu0 0
          %4904 = vmatpush2.bf16.msra.mxu0 0
          %4905 = vmatprep.mubr.bf16.mxu0 0
          %4906 = vmatmul.mubr.bf16.gmra.mxu0 %v4801
          %v4907 = vpop.f32.mrf.mxu0
          %v4908 = vadd.f32 %v4823, %v4907
          %v4909 = vpop.f32.mrf.mxu0
          %v4910 = vpop.f32.mrf.mxu0
          %v4911 = vpop.f32.mrf.mxu0
          %4912 = vdwg.mxu0
          %4913 = vst [vmem:[#allocation18] sm:$0x3] %v4908
        $region132: #{tpu_custom_call.1} parent=87 // pred_fallthru
          _
        // Predicated region
        $region133: #{tpu_custom_call.1} parent=87 // pred_check
          %p4914 = pneg %p426
        $region134: #{tpu_custom_call.1} parent=87 // pred_check_branch
          %4916 = sbr.rel (%p4914) target = $region136
        $region135: #{tpu_custom_call.1} parent=87 // pred_region
          %s4918 = ssub.s32 32, 32
          %4919 = vsyncadd [#allocation5], %s4918
          %s4920 = smul.addr %s38, 32
          %s4921 = scalar_lea.hbm %s17, %s4920
          %s4923 = sshll.u32 [#allocation18], 4
          %s4924 = int_to_ptr.vmem [resolvable:$true] %s4923
          %4926 = dma.vmem_to_hbm [thread:$0]  %s4924, 32, %s4921, [#allocation5]
        $region136: #{tpu_custom_call.1} parent=87 // pred_fallthru
          _
        // Predicated region
        $region137: #{tpu_custom_call.1} parent=87 // pred_check
          %p4927 = pneg %p426
        $region138: #{tpu_custom_call.1} parent=87 // pred_check_branch
          %4929 = sbr.rel (%p4927) target = $region140
        $region139: #{tpu_custom_call.1} parent=87 // pred_region
          %4930 = dma.done [#allocation5], 32
        $region140: #{tpu_custom_call.1} parent=87 // pred_fallthru
          _
      $region88: #{tpu_custom_call.1} parent=5 // pred_fallthru
        _
      %p4931 = scmp.le.s32.totalorder 2, %s29
      // Predicated region
      $region141: #{tpu_custom_call.1} parent=5 // pred_check
        %p4932 = pneg %p4931
      $region142: #{tpu_custom_call.1} parent=5 // pred_check_branch
        %4934 = sbr.rel (%p4932) target = $region144
      $region143: #{tpu_custom_call.1} parent=5 // pred_region
        %s4935 = ssub.s32 %s29, 2
      $region144: #{tpu_custom_call.1} parent=5 // pred_fallthru
        _
    $region6: #{tpu_custom_call.1} parent=1 // loop_footer
      %s33 = sadd.s32 1, %s29
    $region7: #{tpu_custom_call.1} parent=1 // loop_footer_branch
      %28 = sbr.rel target = $region3
    $region8: #{tpu_custom_call.1} parent=1 // loop_exit
      _
    %4936 = vsyncpa [#allocation4], 1
    %s4937 = scalar_lea.sflag [#allocation4], 1
    %4938 = vsyncpa %s4937, 1
    %4939 = vsyncpa [#allocation7], 1
    %4940 = vsyncpa [#allocation10], 1
    %4941 = vsyncpa [#allocation13], 1
    %4942 = vsyncpa [#allocation16], 1
    %4943 = vsyncpa [#allocation5], 1
    %s4944 = scalar_lea.sflag [#allocation5], 1
    %4945 = vsyncpa %s4944, 1

</llo_original>
